<compile_context>
chip_gen: v7x
topology: tpu7x:2x2x1
jax: 0.10.0
libtpu: 0.0.40
codegen_flags: <defaults>
</compile_context>

<pallas_src>
import jax
import jax.numpy as jnp
from jax import lax
from jax.experimental import pallas as pl
from jax.experimental.pallas import tpu as pltpu

KERNEL_SIZE = 3
BN_EPS = 1e-5
LANES = 128


# --------------------------- in-kernel helpers --------------------------------

def _causal_conv_bn_relu(x, w, scale, shift, K, dilation):
    """Causal dilated Conv1d -> chomp -> BatchNorm(eval) -> ReLU, batched over B.

    x: [B, T, Cin], w: [K*Cin, Cout] (tap-major rows), scale/shift: [1, Cout].
    The K dilated taps are lane-concatenated so the conv is ONE MXU matmul.
    """
    B, T, Cin = x.shape
    Cout = w.shape[1]
    pad = (K - 1) * dilation
    xp = jnp.concatenate([jnp.zeros((B, pad, Cin), jnp.float32), x], axis=1)
    taps = [lax.slice_in_dim(xp, j * dilation, j * dilation + T, axis=1)
            for j in range(K)]
    xcat = jnp.concatenate(taps, axis=-1)                       # [B, T, K*Cin]
    y = jnp.dot(xcat.reshape(B * T, K * Cin), w,
                preferred_element_type=jnp.float32).reshape(B, T, Cout)
    return jnp.maximum(y * scale + shift, 0.0)


def _make_fused_kernel(block_meta, net_meta, B, T):
    H = net_meta["H"]
    Hin = net_meta["Hin"]

    def kernel(x_ref, slab_ref, o_ref):
        def piece(off, rows, cols):
            return slab_ref[off:off + rows, 0:cols]

        h = x_ref[...]                                          # [B, T, F] f32

        # ---------------- TCN blocks (all VMEM-resident) ----------------
        for m in block_meta:
            K, d = m["K"], m["dilation"]
            cin, cout = m["cin"], m["cout"]
            w1 = piece(m["w1"], K * cin, cout)
            s1 = piece(m["s1"], 1, cout)
            sh1 = piece(m["sh1"], 1, cout)
            w2 = piece(m["w2"], K * cout, cout)
            s2 = piece(m["s2"], 1, cout)
            sh2 = piece(m["sh2"], 1, cout)

            inp = h
            out = _causal_conv_bn_relu(inp, w1, s1, sh1, K, d)
            out = _causal_conv_bn_relu(out, w2, s2, sh2, K, d)
            if m["has_down"]:
                wd = piece(m["wd"], cin, cout)
                bd = piece(m["bd"], 1, cout)
                res = jnp.dot(inp.reshape(B * T, cin), wd,
                              preferred_element_type=jnp.float32
                              ).reshape(B, T, cout) + bd
            else:
                res = inp                                       # identity skip
            h = jnp.maximum(out + res, 0.0)

        # ---------------- LSTM (gate-concatenated, batched) -------------
        wih = piece(net_meta["wih"], Hin, 4 * H)                # [Hin, 4H]
        whh = piece(net_meta["whh"], H, 4 * H)                  # [H,   4H]
        b = piece(net_meta["b"], 1, 4 * H)                      # [1,   4H]
        fcw = piece(net_meta["fcw"], H, LANES)                  # [H, 128] (zero-padded)
        fcb = piece(net_meta["fcb"], 1, LANES)                  # [1, 128]

        # Hoisted input projection: one lane-dense matmul for all (b, t).
        xproj = (jnp.dot(h.reshape(B * T, Hin), wih,
                         preferred_element_type=jnp.float32
                         ).reshape(B, T, 4 * H) + b)            # [B, T, 4H]

        hh = jnp.zeros((B, H), jnp.float32)
        cc = jnp.zeros((B, H), jnp.float32)
        # T is static and small -> fully unrolled recurrence; h/c live in vregs.
        for t in range(T):
            gates = xproj[:, t, :] + jnp.dot(hh, whh,
                                             preferred_element_type=jnp.float32)
            sig = jax.nn.sigmoid(gates)                         # full-vreg EUP
            tah = jnp.tanh(gates)
            i_g = sig[:, 0:H]
            f_g = sig[:, H:2 * H]
            g_g = tah[:, 2 * H:3 * H]
            o_g = sig[:, 3 * H:4 * H]
            cc = f_g * cc + i_g * g_g
            hh = o_g * jnp.tanh(cc)

        # ---------------- FC head (lane-dense 128-wide store) -----------
        o_ref[...] = jnp.dot(hh, fcw, preferred_element_type=jnp.float32) + fcb

    return kernel


# --------------------------- wrapper ------------------------------------------

def bn_fold(conv_bias, bn):
    gamma, beta, mean, var = bn
    scale = gamma / jnp.sqrt(var + BN_EPS)
    shift = (conv_bias - mean) * scale + beta
    return scale[None, :], shift[None, :]


def pack_model(params):
    """Pack every weight into one lane-dense [N, 128] f32 slab + offset table."""
    K = params["kernel_size"]
    pieces = []
    off = 0

    def add(arr):
        nonlocal off
        arr = jnp.asarray(arr, jnp.float32)
        if arr.ndim == 1:
            arr = arr[None, :]
        r, c = arr.shape
        pieces.append(jnp.pad(arr, ((0, 0), (0, LANES - c))))
        start = off
        off += r
        return start

    block_meta = []
    for blk in params["blocks"]:
        w1, b1 = blk["conv1"]                       # [K, Cin, Cout], [Cout]
        w2, b2 = blk["conv2"]
        s1, sh1 = bn_fold(b1, blk["bn1"])
        s2, sh2 = bn_fold(b2, blk["bn2"])
        cin, cout = w1.shape[1], w1.shape[2]
        meta = {
            "K": K, "dilation": blk["dilation"], "cin": cin, "cout": cout,
            "w1": add(w1.reshape(K * cin, cout)),
            "s1": add(s1), "sh1": add(sh1),
            "w2": add(w2.reshape(K * cout, cout)),
            "s2": add(s2), "sh2": add(sh2),
            "has_down": blk["down"] is not None,
        }
        if meta["has_down"]:
            wd, bd = blk["down"]                    # [Cin, Cout], [Cout]
            meta["wd"] = add(wd)
            meta["bd"] = add(bd)
        block_meta.append(meta)

    lstm, fc = params["lstm"], params["fc"]
    net_meta = {
        "H": lstm["whh"].shape[0], "Hin": lstm["wih"].shape[0],
        "wih": add(lstm["wih"]), "whh": add(lstm["whh"]), "b": add(lstm["b"]),
        "fcw": add(fc["w"]), "fcb": add(fc["b"]),
        "num_classes": fc["w"].shape[1],
    }

    if off % 8:                                     # keep sublane-aligned slab
        pieces.append(jnp.zeros((8 - off % 8, LANES), jnp.float32))
    slab = jnp.concatenate(pieces, axis=0)
    return slab, block_meta, net_meta


def hybrid_tcn_lstm_forward(params, x):
    """x: [B, T, F] (same input convention as the PyTorch module) -> [B, classes]."""
    x = x.astype(jnp.float32)
    B, T, _ = x.shape
    slab, block_meta, net_meta = pack_model(params)
    num_classes = net_meta["num_classes"]

    out = pl.pallas_call(
        _make_fused_kernel(block_meta, net_meta, B, T),
        out_shape=jax.ShapeDtypeStruct((B, LANES), jnp.float32),
        in_specs=[pl.BlockSpec(memory_space=pltpu.MemorySpace.VMEM),
                  pl.BlockSpec(memory_space=pltpu.MemorySpace.VMEM)],
        out_specs=pl.BlockSpec(memory_space=pltpu.MemorySpace.VMEM),
    )(x, slab)
    return out[:, :num_classes]


# --------------------------- parameters ---------------------------------------

def init_params(key, num_inputs, num_channels, kernel_size, lstm_hidden,
                num_classes, dilation_base=1.5):
    keys = iter(jax.random.split(key, 64))

    def conv_init(cin, cout, k):
        fan_in = cin * k
        # stored directly in kernel layout [K, Cin, Cout]
        w = jax.random.normal(next(keys), (k, cin, cout), jnp.float32) * jnp.sqrt(2.0 / fan_in)
        b = jax.random.uniform(next(keys), (cout,), jnp.float32, -1.0, 1.0) / jnp.sqrt(fan_in)
        return w, b

    blocks = []
    in_ch = num_inputs
    for i, out_ch in enumerate(num_channels):
        dilation = int(dilation_base ** i)
        if in_ch != out_ch:
            wd, bd = conv_init(in_ch, out_ch, 1)
            down = (wd[0], bd)                      # [Cin, Cout], [Cout]
        else:
            down = None
        blocks.append({
            "dilation": dilation,
            "conv1": conv_init(in_ch, out_ch, kernel_size),
            "conv2": conv_init(out_ch, out_ch, kernel_size),
            # BatchNorm1d eval-mode: (gamma, beta, running_mean, running_var)
            "bn1": (jnp.ones(out_ch), jnp.zeros(out_ch), jnp.zeros(out_ch), jnp.ones(out_ch)),
            "bn2": (jnp.ones(out_ch), jnp.zeros(out_ch), jnp.zeros(out_ch), jnp.ones(out_ch)),
            "down": down,
        })
        in_ch = out_ch

    H, Hin = lstm_hidden, num_channels[-1]
    s = 1.0 / jnp.sqrt(jnp.float32(H))
    lstm = {
        # gate order i,f,g,o concatenated along the 4H axis (PyTorch layout)
        "wih": jax.random.uniform(next(keys), (Hin, 4 * H), jnp.float32, -s, s),
        "whh": jax.random.uniform(next(keys), (H, 4 * H), jnp.float32, -s, s),
        "b": (jax.random.uniform(next(keys), (1, 4 * H), jnp.float32, -s, s)
              + jax.random.uniform(next(keys), (1, 4 * H), jnp.float32, -s, s)),  # b_ih + b_hh
    }
    fc = {
        "w": jax.random.uniform(next(keys), (H, num_classes), jnp.float32, -s, s),
        "b": jax.random.uniform(next(keys), (1, num_classes), jnp.float32, -s, s),
    }
    return {"blocks": blocks, "lstm": lstm, "fc": fc, "kernel_size": kernel_size}


# --------------------------- pure-JAX reference --------------------------------

def _ref_forward(params, x):
    K = params["kernel_size"]
    h = jnp.transpose(x, (0, 2, 1)).astype(jnp.float32)   # NCL, like PyTorch internally
    for blk in params["blocks"]:
        d = blk["dilation"]
        pad = (K - 1) * d
        inp = h

        def conv_block(z, w_kic, b, bn):
            w = jnp.transpose(w_kic, (2, 1, 0))            # [O, I, K]
            y = lax.conv_general_dilated(z, w, (1,), [(pad, pad)], rhs_dilation=(d,),
                                         dimension_numbers=("NCH", "OIH", "NCH"))
            y = y[:, :, :-pad] + b[None, :, None]          # chomp + bias
            gamma, beta, mean, var = bn
            y = ((y - mean[None, :, None]) / jnp.sqrt(var[None, :, None] + BN_EPS)
                 * gamma[None, :, None] + beta[None, :, None])
            return jnp.maximum(y, 0.0)

        out = conv_block(inp, *blk["conv1"], blk["bn1"])
        out = conv_block(out, *blk["conv2"], blk["bn2"])
        if blk["down"] is None:
            res = inp
        else:
            wd, bd = blk["down"]
            res = jnp.einsum("bct,co->bot", inp, wd) + bd[None, :, None]
        h = jnp.maximum(out + res, 0.0)

    lstm_in = jnp.transpose(h, (0, 2, 1))                  # [B, T, C]
    wih, whh, b = params["lstm"]["wih"], params["lstm"]["whh"], params["lstm"]["b"]
    H = whh.shape[0]
    B = lstm_in.shape[0]

    def step(carry, x_t):
        hh, cc = carry
        z = x_t @ wih + hh @ whh + b                       # [B, 4H]
        i = jax.nn.sigmoid(z[:, 0:H])
        f = jax.nn.sigmoid(z[:, H:2 * H])
        g = jnp.tanh(z[:, 2 * H:3 * H])
        o = jax.nn.sigmoid(z[:, 3 * H:4 * H])
        cc = f * cc + i * g
        hh = o * jnp.tanh(cc)
        return (hh, cc), None

    (hh, _), _ = lax.scan(step, (jnp.zeros((B, H)), jnp.zeros((B, H))),
                          jnp.transpose(lstm_in, (1, 0, 2)))
    return hh @ params["fc"]["w"] + params["fc"]["b"]


# --------------------------- main ----------------------------------------------

if __name__ == "__main__":
    key = jax.random.PRNGKey(0)
    pkey, xkey = jax.random.split(key)

    B, T, F = 2, 16, 4
    num_channels = [8, 8, 16]      # dilations 1, 1, 2 (int(1.5**i))
    num_classes = 10
    lstm_hidden = 32               # 4H = 128 -> lane-dense gate matmul

    params = init_params(pkey, num_inputs=F, num_channels=num_channels,
                         kernel_size=KERNEL_SIZE, lstm_hidden=lstm_hidden,
                         num_classes=num_classes)
    x = jax.random.normal(xkey, (B, T, F), jnp.float32)

    out = jax.block_until_ready(hybrid_tcn_lstm_forward(params, x))
    ref = jax.block_until_ready(_ref_forward(params, x))

    assert out.shape == (B, num_classes), out.shape
    assert jnp.allclose(out, ref, atol=1e-4, rtol=1e-4), float(jnp.max(jnp.abs(out - ref)))
    print("KERNEL_OK")
</pallas_src>

<mosaic_0001>
module attributes {stable_mosaic.version = 11 : i64} {
  func.func @kernel(%arg0: memref<2x16x4xf32, #tpu.memory_space<vmem>>, %arg1: memref<264x128xf32, #tpu.memory_space<vmem>>, %arg2: memref<2x128xf32, #tpu.memory_space<vmem>>) attributes {dimension_semantics = [], scalar_prefetch = 0 : i64, scratch_operands = 0 : i64, tpu.core_type = #tpu.core_type<tc>} {
    %c0 = arith.constant 0 : index
    %c0_0 = arith.constant 0 : index
    %c0_1 = arith.constant 0 : index
    %0 = vector.load %arg0[%c0, %c0_0, %c0_1] : memref<2x16x4xf32, #tpu.memory_space<vmem>>, vector<2x16x4xf32>
    %c0_2 = arith.constant 0 : index
    %c0_3 = arith.constant 0 : index
    %1 = vector.load %arg1[%c0_2, %c0_3] : memref<264x128xf32, #tpu.memory_space<vmem>>, vector<12x8xf32>
    %c12 = arith.constant 12 : index
    %c0_4 = arith.constant 0 : index
    %2 = vector.load %arg1[%c12, %c0_4] : memref<264x128xf32, #tpu.memory_space<vmem>>, vector<1x8xf32>
    %c13 = arith.constant 13 : index
    %c0_5 = arith.constant 0 : index
    %3 = vector.load %arg1[%c13, %c0_5] : memref<264x128xf32, #tpu.memory_space<vmem>>, vector<1x8xf32>
    %c14 = arith.constant 14 : index
    %c0_6 = arith.constant 0 : index
    %4 = vector.load %arg1[%c14, %c0_6] : memref<264x128xf32, #tpu.memory_space<vmem>>, vector<24x8xf32>
    %c38 = arith.constant 38 : index
    %c0_7 = arith.constant 0 : index
    %5 = vector.load %arg1[%c38, %c0_7] : memref<264x128xf32, #tpu.memory_space<vmem>>, vector<1x8xf32>
    %c39 = arith.constant 39 : index
    %c0_8 = arith.constant 0 : index
    %6 = vector.load %arg1[%c39, %c0_8] : memref<264x128xf32, #tpu.memory_space<vmem>>, vector<1x8xf32>
    %cst = arith.constant 0.000000e+00 : f32
    %7 = vector.broadcast %cst : f32 to vector<2x2x4xf32>
    %8 = tpu.concatenate %7, %0 in 1 : vector<2x2x4xf32>, vector<2x16x4xf32> -> vector<2x18x4xf32>
    %9 = vector.extract_strided_slice %8 {offsets = [0, 0, 0], sizes = [2, 16, 4], strides = [1, 1, 1]} : vector<2x18x4xf32> to vector<2x16x4xf32>
    %10 = vector.extract_strided_slice %8 {offsets = [0, 1, 0], sizes = [2, 16, 4], strides = [1, 1, 1]} : vector<2x18x4xf32> to vector<2x16x4xf32>
    %11 = vector.extract_strided_slice %8 {offsets = [0, 2, 0], sizes = [2, 16, 4], strides = [1, 1, 1]} : vector<2x18x4xf32> to vector<2x16x4xf32>
    %12 = tpu.concatenate %9, %10, %11 in 2 : vector<2x16x4xf32>, vector<2x16x4xf32>, vector<2x16x4xf32> -> vector<2x16x12xf32>
    %13 = vector.shape_cast %12 : vector<2x16x12xf32> to vector<32x12xf32>
    %cst_9 = arith.constant dense<0.000000e+00> : vector<32x8xf32>
    %14 = tpu.matmul %13, %1, %cst_9 {dimension_numbers = #tpu.dot_dimension_numbers<[1], [0], [0], [1], [0, 0, 1, 1], [], []>} : vector<32x12xf32>, vector<12x8xf32>, vector<32x8xf32> -> vector<32x8xf32>
    %15 = vector.shape_cast %14 : vector<32x8xf32> to vector<2x16x8xf32>
    %16 = vector.shape_cast %2 : vector<1x8xf32> to vector<1x1x8xf32>
    %17 = vector.broadcast %16 : vector<1x1x8xf32> to vector<2x16x8xf32>
    %18 = arith.mulf %15, %17 : vector<2x16x8xf32>
    %19 = vector.shape_cast %3 : vector<1x8xf32> to vector<1x1x8xf32>
    %20 = vector.broadcast %19 : vector<1x1x8xf32> to vector<2x16x8xf32>
    %21 = arith.addf %18, %20 : vector<2x16x8xf32>
    %cst_10 = arith.constant 0.000000e+00 : f32
    %22 = vector.broadcast %cst_10 : f32 to vector<2x16x8xf32>
    %23 = arith.maximumf %21, %22 : vector<2x16x8xf32>
    %cst_11 = arith.constant 0.000000e+00 : f32
    %24 = vector.broadcast %cst_11 : f32 to vector<2x2x8xf32>
    %25 = tpu.concatenate %24, %23 in 1 : vector<2x2x8xf32>, vector<2x16x8xf32> -> vector<2x18x8xf32>
    %26 = vector.extract_strided_slice %25 {offsets = [0, 0, 0], sizes = [2, 16, 8], strides = [1, 1, 1]} : vector<2x18x8xf32> to vector<2x16x8xf32>
    %27 = vector.extract_strided_slice %25 {offsets = [0, 1, 0], sizes = [2, 16, 8], strides = [1, 1, 1]} : vector<2x18x8xf32> to vector<2x16x8xf32>
    %28 = vector.extract_strided_slice %25 {offsets = [0, 2, 0], sizes = [2, 16, 8], strides = [1, 1, 1]} : vector<2x18x8xf32> to vector<2x16x8xf32>
    %29 = tpu.concatenate %26, %27, %28 in 2 : vector<2x16x8xf32>, vector<2x16x8xf32>, vector<2x16x8xf32> -> vector<2x16x24xf32>
    %30 = vector.shape_cast %29 : vector<2x16x24xf32> to vector<32x24xf32>
    %cst_12 = arith.constant dense<0.000000e+00> : vector<32x8xf32>
    %31 = tpu.matmul %30, %4, %cst_12 {dimension_numbers = #tpu.dot_dimension_numbers<[1], [0], [0], [1], [0, 0, 1, 1], [], []>} : vector<32x24xf32>, vector<24x8xf32>, vector<32x8xf32> -> vector<32x8xf32>
    %32 = vector.shape_cast %31 : vector<32x8xf32> to vector<2x16x8xf32>
    %33 = vector.shape_cast %5 : vector<1x8xf32> to vector<1x1x8xf32>
    %34 = vector.broadcast %33 : vector<1x1x8xf32> to vector<2x16x8xf32>
    %35 = arith.mulf %32, %34 : vector<2x16x8xf32>
    %36 = vector.shape_cast %6 : vector<1x8xf32> to vector<1x1x8xf32>
    %37 = vector.broadcast %36 : vector<1x1x8xf32> to vector<2x16x8xf32>
    %38 = arith.addf %35, %37 : vector<2x16x8xf32>
    %cst_13 = arith.constant 0.000000e+00 : f32
    %39 = vector.broadcast %cst_13 : f32 to vector<2x16x8xf32>
    %40 = arith.maximumf %38, %39 : vector<2x16x8xf32>
    %c40 = arith.constant 40 : index
    %c0_14 = arith.constant 0 : index
    %41 = vector.load %arg1[%c40, %c0_14] : memref<264x128xf32, #tpu.memory_space<vmem>>, vector<4x8xf32>
    %c44 = arith.constant 44 : index
    %c0_15 = arith.constant 0 : index
    %42 = vector.load %arg1[%c44, %c0_15] : memref<264x128xf32, #tpu.memory_space<vmem>>, vector<1x8xf32>
    %43 = vector.shape_cast %0 : vector<2x16x4xf32> to vector<32x4xf32>
    %cst_16 = arith.constant dense<0.000000e+00> : vector<32x8xf32>
    %44 = tpu.matmul %43, %41, %cst_16 {dimension_numbers = #tpu.dot_dimension_numbers<[1], [0], [0], [1], [0, 0, 1, 1], [], []>} : vector<32x4xf32>, vector<4x8xf32>, vector<32x8xf32> -> vector<32x8xf32>
    %45 = vector.shape_cast %44 : vector<32x8xf32> to vector<2x16x8xf32>
    %46 = vector.shape_cast %42 : vector<1x8xf32> to vector<1x1x8xf32>
    %47 = vector.broadcast %46 : vector<1x1x8xf32> to vector<2x16x8xf32>
    %48 = arith.addf %45, %47 : vector<2x16x8xf32>
    %49 = arith.addf %40, %48 : vector<2x16x8xf32>
    %cst_17 = arith.constant 0.000000e+00 : f32
    %50 = vector.broadcast %cst_17 : f32 to vector<2x16x8xf32>
    %51 = arith.maximumf %49, %50 : vector<2x16x8xf32>
    %c45 = arith.constant 45 : index
    %c0_18 = arith.constant 0 : index
    %52 = vector.load %arg1[%c45, %c0_18] : memref<264x128xf32, #tpu.memory_space<vmem>>, vector<24x8xf32>
    %c69 = arith.constant 69 : index
    %c0_19 = arith.constant 0 : index
    %53 = vector.load %arg1[%c69, %c0_19] : memref<264x128xf32, #tpu.memory_space<vmem>>, vector<1x8xf32>
    %c70 = arith.constant 70 : index
    %c0_20 = arith.constant 0 : index
    %54 = vector.load %arg1[%c70, %c0_20] : memref<264x128xf32, #tpu.memory_space<vmem>>, vector<1x8xf32>
    %c71 = arith.constant 71 : index
    %c0_21 = arith.constant 0 : index
    %55 = vector.load %arg1[%c71, %c0_21] : memref<264x128xf32, #tpu.memory_space<vmem>>, vector<24x8xf32>
    %c95 = arith.constant 95 : index
    %c0_22 = arith.constant 0 : index
    %56 = vector.load %arg1[%c95, %c0_22] : memref<264x128xf32, #tpu.memory_space<vmem>>, vector<1x8xf32>
    %c96 = arith.constant 96 : index
    %c0_23 = arith.constant 0 : index
    %57 = vector.load %arg1[%c96, %c0_23] : memref<264x128xf32, #tpu.memory_space<vmem>>, vector<1x8xf32>
    %cst_24 = arith.constant 0.000000e+00 : f32
    %58 = vector.broadcast %cst_24 : f32 to vector<2x2x8xf32>
    %59 = tpu.concatenate %58, %51 in 1 : vector<2x2x8xf32>, vector<2x16x8xf32> -> vector<2x18x8xf32>
    %60 = vector.extract_strided_slice %59 {offsets = [0, 0, 0], sizes = [2, 16, 8], strides = [1, 1, 1]} : vector<2x18x8xf32> to vector<2x16x8xf32>
    %61 = vector.extract_strided_slice %59 {offsets = [0, 1, 0], sizes = [2, 16, 8], strides = [1, 1, 1]} : vector<2x18x8xf32> to vector<2x16x8xf32>
    %62 = vector.extract_strided_slice %59 {offsets = [0, 2, 0], sizes = [2, 16, 8], strides = [1, 1, 1]} : vector<2x18x8xf32> to vector<2x16x8xf32>
    %63 = tpu.concatenate %60, %61, %62 in 2 : vector<2x16x8xf32>, vector<2x16x8xf32>, vector<2x16x8xf32> -> vector<2x16x24xf32>
    %64 = vector.shape_cast %63 : vector<2x16x24xf32> to vector<32x24xf32>
    %cst_25 = arith.constant dense<0.000000e+00> : vector<32x8xf32>
    %65 = tpu.matmul %64, %52, %cst_25 {dimension_numbers = #tpu.dot_dimension_numbers<[1], [0], [0], [1], [0, 0, 1, 1], [], []>} : vector<32x24xf32>, vector<24x8xf32>, vector<32x8xf32> -> vector<32x8xf32>
    %66 = vector.shape_cast %65 : vector<32x8xf32> to vector<2x16x8xf32>
    %67 = vector.shape_cast %53 : vector<1x8xf32> to vector<1x1x8xf32>
    %68 = vector.broadcast %67 : vector<1x1x8xf32> to vector<2x16x8xf32>
    %69 = arith.mulf %66, %68 : vector<2x16x8xf32>
    %70 = vector.shape_cast %54 : vector<1x8xf32> to vector<1x1x8xf32>
    %71 = vector.broadcast %70 : vector<1x1x8xf32> to vector<2x16x8xf32>
    %72 = arith.addf %69, %71 : vector<2x16x8xf32>
    %cst_26 = arith.constant 0.000000e+00 : f32
    %73 = vector.broadcast %cst_26 : f32 to vector<2x16x8xf32>
    %74 = arith.maximumf %72, %73 : vector<2x16x8xf32>
    %cst_27 = arith.constant 0.000000e+00 : f32
    %75 = vector.broadcast %cst_27 : f32 to vector<2x2x8xf32>
    %76 = tpu.concatenate %75, %74 in 1 : vector<2x2x8xf32>, vector<2x16x8xf32> -> vector<2x18x8xf32>
    %77 = vector.extract_strided_slice %76 {offsets = [0, 0, 0], sizes = [2, 16, 8], strides = [1, 1, 1]} : vector<2x18x8xf32> to vector<2x16x8xf32>
    %78 = vector.extract_strided_slice %76 {offsets = [0, 1, 0], sizes = [2, 16, 8], strides = [1, 1, 1]} : vector<2x18x8xf32> to vector<2x16x8xf32>
    %79 = vector.extract_strided_slice %76 {offsets = [0, 2, 0], sizes = [2, 16, 8], strides = [1, 1, 1]} : vector<2x18x8xf32> to vector<2x16x8xf32>
    %80 = tpu.concatenate %77, %78, %79 in 2 : vector<2x16x8xf32>, vector<2x16x8xf32>, vector<2x16x8xf32> -> vector<2x16x24xf32>
    %81 = vector.shape_cast %80 : vector<2x16x24xf32> to vector<32x24xf32>
    %cst_28 = arith.constant dense<0.000000e+00> : vector<32x8xf32>
    %82 = tpu.matmul %81, %55, %cst_28 {dimension_numbers = #tpu.dot_dimension_numbers<[1], [0], [0], [1], [0, 0, 1, 1], [], []>} : vector<32x24xf32>, vector<24x8xf32>, vector<32x8xf32> -> vector<32x8xf32>
    %83 = vector.shape_cast %82 : vector<32x8xf32> to vector<2x16x8xf32>
    %84 = vector.shape_cast %56 : vector<1x8xf32> to vector<1x1x8xf32>
    %85 = vector.broadcast %84 : vector<1x1x8xf32> to vector<2x16x8xf32>
    %86 = arith.mulf %83, %85 : vector<2x16x8xf32>
    %87 = vector.shape_cast %57 : vector<1x8xf32> to vector<1x1x8xf32>
    %88 = vector.broadcast %87 : vector<1x1x8xf32> to vector<2x16x8xf32>
    %89 = arith.addf %86, %88 : vector<2x16x8xf32>
    %cst_29 = arith.constant 0.000000e+00 : f32
    %90 = vector.broadcast %cst_29 : f32 to vector<2x16x8xf32>
    %91 = arith.maximumf %89, %90 : vector<2x16x8xf32>
    %92 = arith.addf %91, %51 : vector<2x16x8xf32>
    %cst_30 = arith.constant 0.000000e+00 : f32
    %93 = vector.broadcast %cst_30 : f32 to vector<2x16x8xf32>
    %94 = arith.maximumf %92, %93 : vector<2x16x8xf32>
    %c97 = arith.constant 97 : index
    %c0_31 = arith.constant 0 : index
    %95 = vector.load %arg1[%c97, %c0_31] : memref<264x128xf32, #tpu.memory_space<vmem>>, vector<24x16xf32>
    %c121 = arith.constant 121 : index
    %c0_32 = arith.constant 0 : index
    %96 = vector.load %arg1[%c121, %c0_32] : memref<264x128xf32, #tpu.memory_space<vmem>>, vector<1x16xf32>
    %c122 = arith.constant 122 : index
    %c0_33 = arith.constant 0 : index
    %97 = vector.load %arg1[%c122, %c0_33] : memref<264x128xf32, #tpu.memory_space<vmem>>, vector<1x16xf32>
    %c123 = arith.constant 123 : index
    %c0_34 = arith.constant 0 : index
    %98 = vector.load %arg1[%c123, %c0_34] : memref<264x128xf32, #tpu.memory_space<vmem>>, vector<48x16xf32>
    %c171 = arith.constant 171 : index
    %c0_35 = arith.constant 0 : index
    %99 = vector.load %arg1[%c171, %c0_35] : memref<264x128xf32, #tpu.memory_space<vmem>>, vector<1x16xf32>
    %c172 = arith.constant 172 : index
    %c0_36 = arith.constant 0 : index
    %100 = vector.load %arg1[%c172, %c0_36] : memref<264x128xf32, #tpu.memory_space<vmem>>, vector<1x16xf32>
    %cst_37 = arith.constant 0.000000e+00 : f32
    %101 = vector.broadcast %cst_37 : f32 to vector<2x4x8xf32>
    %102 = tpu.concatenate %101, %94 in 1 : vector<2x4x8xf32>, vector<2x16x8xf32> -> vector<2x20x8xf32>
    %103 = vector.extract_strided_slice %102 {offsets = [0, 0, 0], sizes = [2, 16, 8], strides = [1, 1, 1]} : vector<2x20x8xf32> to vector<2x16x8xf32>
    %104 = vector.extract_strided_slice %102 {offsets = [0, 2, 0], sizes = [2, 16, 8], strides = [1, 1, 1]} : vector<2x20x8xf32> to vector<2x16x8xf32>
    %105 = vector.extract_strided_slice %102 {offsets = [0, 4, 0], sizes = [2, 16, 8], strides = [1, 1, 1]} : vector<2x20x8xf32> to vector<2x16x8xf32>
    %106 = tpu.concatenate %103, %104, %105 in 2 : vector<2x16x8xf32>, vector<2x16x8xf32>, vector<2x16x8xf32> -> vector<2x16x24xf32>
    %107 = vector.shape_cast %106 : vector<2x16x24xf32> to vector<32x24xf32>
    %cst_38 = arith.constant dense<0.000000e+00> : vector<32x16xf32>
    %108 = tpu.matmul %107, %95, %cst_38 {dimension_numbers = #tpu.dot_dimension_numbers<[1], [0], [0], [1], [0, 0, 1, 1], [], []>} : vector<32x24xf32>, vector<24x16xf32>, vector<32x16xf32> -> vector<32x16xf32>
    %109 = vector.shape_cast %108 : vector<32x16xf32> to vector<2x16x16xf32>
    %110 = vector.shape_cast %96 : vector<1x16xf32> to vector<1x1x16xf32>
    %111 = vector.broadcast %110 : vector<1x1x16xf32> to vector<2x16x16xf32>
    %112 = arith.mulf %109, %111 : vector<2x16x16xf32>
    %113 = vector.shape_cast %97 : vector<1x16xf32> to vector<1x1x16xf32>
    %114 = vector.broadcast %113 : vector<1x1x16xf32> to vector<2x16x16xf32>
    %115 = arith.addf %112, %114 : vector<2x16x16xf32>
    %cst_39 = arith.constant 0.000000e+00 : f32
    %116 = vector.broadcast %cst_39 : f32 to vector<2x16x16xf32>
    %117 = arith.maximumf %115, %116 : vector<2x16x16xf32>
    %cst_40 = arith.constant 0.000000e+00 : f32
    %118 = vector.broadcast %cst_40 : f32 to vector<2x4x16xf32>
    %119 = tpu.concatenate %118, %117 in 1 : vector<2x4x16xf32>, vector<2x16x16xf32> -> vector<2x20x16xf32>
    %120 = vector.extract_strided_slice %119 {offsets = [0, 0, 0], sizes = [2, 16, 16], strides = [1, 1, 1]} : vector<2x20x16xf32> to vector<2x16x16xf32>
    %121 = vector.extract_strided_slice %119 {offsets = [0, 2, 0], sizes = [2, 16, 16], strides = [1, 1, 1]} : vector<2x20x16xf32> to vector<2x16x16xf32>
    %122 = vector.extract_strided_slice %119 {offsets = [0, 4, 0], sizes = [2, 16, 16], strides = [1, 1, 1]} : vector<2x20x16xf32> to vector<2x16x16xf32>
    %123 = tpu.concatenate %120, %121, %122 in 2 : vector<2x16x16xf32>, vector<2x16x16xf32>, vector<2x16x16xf32> -> vector<2x16x48xf32>
    %124 = vector.shape_cast %123 : vector<2x16x48xf32> to vector<32x48xf32>
    %cst_41 = arith.constant dense<0.000000e+00> : vector<32x16xf32>
    %125 = tpu.matmul %124, %98, %cst_41 {dimension_numbers = #tpu.dot_dimension_numbers<[1], [0], [0], [1], [0, 0, 1, 1], [], []>} : vector<32x48xf32>, vector<48x16xf32>, vector<32x16xf32> -> vector<32x16xf32>
    %126 = vector.shape_cast %125 : vector<32x16xf32> to vector<2x16x16xf32>
    %127 = vector.shape_cast %99 : vector<1x16xf32> to vector<1x1x16xf32>
    %128 = vector.broadcast %127 : vector<1x1x16xf32> to vector<2x16x16xf32>
    %129 = arith.mulf %126, %128 : vector<2x16x16xf32>
    %130 = vector.shape_cast %100 : vector<1x16xf32> to vector<1x1x16xf32>
    %131 = vector.broadcast %130 : vector<1x1x16xf32> to vector<2x16x16xf32>
    %132 = arith.addf %129, %131 : vector<2x16x16xf32>
    %cst_42 = arith.constant 0.000000e+00 : f32
    %133 = vector.broadcast %cst_42 : f32 to vector<2x16x16xf32>
    %134 = arith.maximumf %132, %133 : vector<2x16x16xf32>
    %c173 = arith.constant 173 : index
    %c0_43 = arith.constant 0 : index
    %135 = vector.load %arg1[%c173, %c0_43] : memref<264x128xf32, #tpu.memory_space<vmem>>, vector<8x16xf32>
    %c181 = arith.constant 181 : index
    %c0_44 = arith.constant 0 : index
    %136 = vector.load %arg1[%c181, %c0_44] : memref<264x128xf32, #tpu.memory_space<vmem>>, vector<1x16xf32>
    %137 = vector.shape_cast %94 : vector<2x16x8xf32> to vector<32x8xf32>
    %cst_45 = arith.constant dense<0.000000e+00> : vector<32x16xf32>
    %138 = tpu.matmul %137, %135, %cst_45 {dimension_numbers = #tpu.dot_dimension_numbers<[1], [0], [0], [1], [0, 0, 1, 1], [], []>} : vector<32x8xf32>, vector<8x16xf32>, vector<32x16xf32> -> vector<32x16xf32>
    %139 = vector.shape_cast %138 : vector<32x16xf32> to vector<2x16x16xf32>
    %140 = vector.shape_cast %136 : vector<1x16xf32> to vector<1x1x16xf32>
    %141 = vector.broadcast %140 : vector<1x1x16xf32> to vector<2x16x16xf32>
    %142 = arith.addf %139, %141 : vector<2x16x16xf32>
    %143 = arith.addf %134, %142 : vector<2x16x16xf32>
    %cst_46 = arith.constant 0.000000e+00 : f32
    %144 = vector.broadcast %cst_46 : f32 to vector<2x16x16xf32>
    %145 = arith.maximumf %143, %144 : vector<2x16x16xf32>
    %c182 = arith.constant 182 : index
    %c0_47 = arith.constant 0 : index
    %146 = vector.load %arg1[%c182, %c0_47] : memref<264x128xf32, #tpu.memory_space<vmem>>, vector<16x128xf32>
    %c198 = arith.constant 198 : index
    %c0_48 = arith.constant 0 : index
    %147 = vector.load %arg1[%c198, %c0_48] : memref<264x128xf32, #tpu.memory_space<vmem>>, vector<32x128xf32>
    %c230 = arith.constant 230 : index
    %c0_49 = arith.constant 0 : index
    %148 = vector.load %arg1[%c230, %c0_49] : memref<264x128xf32, #tpu.memory_space<vmem>>, vector<1x128xf32>
    %c231 = arith.constant 231 : index
    %c0_50 = arith.constant 0 : index
    %149 = vector.load %arg1[%c231, %c0_50] : memref<264x128xf32, #tpu.memory_space<vmem>>, vector<32x128xf32>
    %c263 = arith.constant 263 : index
    %c0_51 = arith.constant 0 : index
    %150 = vector.load %arg1[%c263, %c0_51] : memref<264x128xf32, #tpu.memory_space<vmem>>, vector<1x128xf32>
    %151 = vector.shape_cast %145 : vector<2x16x16xf32> to vector<32x16xf32>
    %cst_52 = arith.constant dense<0.000000e+00> : vector<32x128xf32>
    %152 = tpu.matmul %151, %146, %cst_52 {dimension_numbers = #tpu.dot_dimension_numbers<[1], [0], [0], [1], [0, 0, 1, 1], [], []>} : vector<32x16xf32>, vector<16x128xf32>, vector<32x128xf32> -> vector<32x128xf32>
    %153 = vector.shape_cast %152 : vector<32x128xf32> to vector<2x16x128xf32>
    %154 = vector.shape_cast %148 : vector<1x128xf32> to vector<1x1x128xf32>
    %155 = vector.broadcast %154 : vector<1x1x128xf32> to vector<2x16x128xf32>
    %156 = arith.addf %153, %155 : vector<2x16x128xf32>
    %cst_53 = arith.constant 0.000000e+00 : f32
    %157 = vector.broadcast %cst_53 : f32 to vector<2x32xf32>
    %cst_54 = arith.constant 0.000000e+00 : f32
    %158 = vector.broadcast %cst_54 : f32 to vector<2x32xf32>
    %159 = vector.extract_strided_slice %156 {offsets = [0, 0, 0], sizes = [2, 1, 128], strides = [1, 1, 1]} : vector<2x16x128xf32> to vector<2x1x128xf32>
    %160 = vector.shape_cast %159 : vector<2x1x128xf32> to vector<2x128xf32>
    %cst_55 = arith.constant dense<0.000000e+00> : vector<2x128xf32>
    %161 = tpu.matmul %157, %147, %cst_55 {dimension_numbers = #tpu.dot_dimension_numbers<[1], [0], [0], [1], [0, 0, 1, 1], [], []>} : vector<2x32xf32>, vector<32x128xf32>, vector<2x128xf32> -> vector<2x128xf32>
    %162 = arith.addf %160, %161 : vector<2x128xf32>
    %163 = arith.negf %162 : vector<2x128xf32>
    %164 = math.exp %163 : vector<2x128xf32>
    %cst_56 = arith.constant 1.000000e+00 : f32
    %165 = vector.broadcast %cst_56 : f32 to vector<2x128xf32>
    %166 = arith.addf %165, %164 : vector<2x128xf32>
    %167 = arith.divf %165, %166 : vector<2x128xf32>
    %168 = math.tanh %162 : vector<2x128xf32>
    %169 = vector.extract_strided_slice %167 {offsets = [0, 0], sizes = [2, 32], strides = [1, 1]} : vector<2x128xf32> to vector<2x32xf32>
    %170 = vector.extract_strided_slice %167 {offsets = [0, 32], sizes = [2, 32], strides = [1, 1]} : vector<2x128xf32> to vector<2x32xf32>
    %171 = vector.extract_strided_slice %168 {offsets = [0, 64], sizes = [2, 32], strides = [1, 1]} : vector<2x128xf32> to vector<2x32xf32>
    %172 = vector.extract_strided_slice %167 {offsets = [0, 96], sizes = [2, 32], strides = [1, 1]} : vector<2x128xf32> to vector<2x32xf32>
    %173 = arith.mulf %170, %158 : vector<2x32xf32>
    %174 = arith.mulf %169, %171 : vector<2x32xf32>
    %175 = arith.addf %173, %174 : vector<2x32xf32>
    %176 = math.tanh %175 : vector<2x32xf32>
    %177 = arith.mulf %172, %176 : vector<2x32xf32>
    %178 = vector.extract_strided_slice %156 {offsets = [0, 1, 0], sizes = [2, 1, 128], strides = [1, 1, 1]} : vector<2x16x128xf32> to vector<2x1x128xf32>
    %179 = vector.shape_cast %178 : vector<2x1x128xf32> to vector<2x128xf32>
    %cst_57 = arith.constant dense<0.000000e+00> : vector<2x128xf32>
    %180 = tpu.matmul %177, %147, %cst_57 {dimension_numbers = #tpu.dot_dimension_numbers<[1], [0], [0], [1], [0, 0, 1, 1], [], []>} : vector<2x32xf32>, vector<32x128xf32>, vector<2x128xf32> -> vector<2x128xf32>
    %181 = arith.addf %179, %180 : vector<2x128xf32>
    %182 = arith.negf %181 : vector<2x128xf32>
    %183 = math.exp %182 : vector<2x128xf32>
    %cst_58 = arith.constant 1.000000e+00 : f32
    %184 = vector.broadcast %cst_58 : f32 to vector<2x128xf32>
    %185 = arith.addf %184, %183 : vector<2x128xf32>
    %186 = arith.divf %184, %185 : vector<2x128xf32>
    %187 = math.tanh %181 : vector<2x128xf32>
    %188 = vector.extract_strided_slice %186 {offsets = [0, 0], sizes = [2, 32], strides = [1, 1]} : vector<2x128xf32> to vector<2x32xf32>
    %189 = vector.extract_strided_slice %186 {offsets = [0, 32], sizes = [2, 32], strides = [1, 1]} : vector<2x128xf32> to vector<2x32xf32>
    %190 = vector.extract_strided_slice %187 {offsets = [0, 64], sizes = [2, 32], strides = [1, 1]} : vector<2x128xf32> to vector<2x32xf32>
    %191 = vector.extract_strided_slice %186 {offsets = [0, 96], sizes = [2, 32], strides = [1, 1]} : vector<2x128xf32> to vector<2x32xf32>
    %192 = arith.mulf %189, %175 : vector<2x32xf32>
    %193 = arith.mulf %188, %190 : vector<2x32xf32>
    %194 = arith.addf %192, %193 : vector<2x32xf32>
    %195 = math.tanh %194 : vector<2x32xf32>
    %196 = arith.mulf %191, %195 : vector<2x32xf32>
    %197 = vector.extract_strided_slice %156 {offsets = [0, 2, 0], sizes = [2, 1, 128], strides = [1, 1, 1]} : vector<2x16x128xf32> to vector<2x1x128xf32>
    %198 = vector.shape_cast %197 : vector<2x1x128xf32> to vector<2x128xf32>
    %cst_59 = arith.constant dense<0.000000e+00> : vector<2x128xf32>
    %199 = tpu.matmul %196, %147, %cst_59 {dimension_numbers = #tpu.dot_dimension_numbers<[1], [0], [0], [1], [0, 0, 1, 1], [], []>} : vector<2x32xf32>, vector<32x128xf32>, vector<2x128xf32> -> vector<2x128xf32>
    %200 = arith.addf %198, %199 : vector<2x128xf32>
    %201 = arith.negf %200 : vector<2x128xf32>
    %202 = math.exp %201 : vector<2x128xf32>
    %cst_60 = arith.constant 1.000000e+00 : f32
    %203 = vector.broadcast %cst_60 : f32 to vector<2x128xf32>
    %204 = arith.addf %203, %202 : vector<2x128xf32>
    %205 = arith.divf %203, %204 : vector<2x128xf32>
    %206 = math.tanh %200 : vector<2x128xf32>
    %207 = vector.extract_strided_slice %205 {offsets = [0, 0], sizes = [2, 32], strides = [1, 1]} : vector<2x128xf32> to vector<2x32xf32>
    %208 = vector.extract_strided_slice %205 {offsets = [0, 32], sizes = [2, 32], strides = [1, 1]} : vector<2x128xf32> to vector<2x32xf32>
    %209 = vector.extract_strided_slice %206 {offsets = [0, 64], sizes = [2, 32], strides = [1, 1]} : vector<2x128xf32> to vector<2x32xf32>
    %210 = vector.extract_strided_slice %205 {offsets = [0, 96], sizes = [2, 32], strides = [1, 1]} : vector<2x128xf32> to vector<2x32xf32>
    %211 = arith.mulf %208, %194 : vector<2x32xf32>
    %212 = arith.mulf %207, %209 : vector<2x32xf32>
    %213 = arith.addf %211, %212 : vector<2x32xf32>
    %214 = math.tanh %213 : vector<2x32xf32>
    %215 = arith.mulf %210, %214 : vector<2x32xf32>
    %216 = vector.extract_strided_slice %156 {offsets = [0, 3, 0], sizes = [2, 1, 128], strides = [1, 1, 1]} : vector<2x16x128xf32> to vector<2x1x128xf32>
    %217 = vector.shape_cast %216 : vector<2x1x128xf32> to vector<2x128xf32>
    %cst_61 = arith.constant dense<0.000000e+00> : vector<2x128xf32>
    %218 = tpu.matmul %215, %147, %cst_61 {dimension_numbers = #tpu.dot_dimension_numbers<[1], [0], [0], [1], [0, 0, 1, 1], [], []>} : vector<2x32xf32>, vector<32x128xf32>, vector<2x128xf32> -> vector<2x128xf32>
    %219 = arith.addf %217, %218 : vector<2x128xf32>
    %220 = arith.negf %219 : vector<2x128xf32>
    %221 = math.exp %220 : vector<2x128xf32>
    %cst_62 = arith.constant 1.000000e+00 : f32
    %222 = vector.broadcast %cst_62 : f32 to vector<2x128xf32>
    %223 = arith.addf %222, %221 : vector<2x128xf32>
    %224 = arith.divf %222, %223 : vector<2x128xf32>
    %225 = math.tanh %219 : vector<2x128xf32>
    %226 = vector.extract_strided_slice %224 {offsets = [0, 0], sizes = [2, 32], strides = [1, 1]} : vector<2x128xf32> to vector<2x32xf32>
    %227 = vector.extract_strided_slice %224 {offsets = [0, 32], sizes = [2, 32], strides = [1, 1]} : vector<2x128xf32> to vector<2x32xf32>
    %228 = vector.extract_strided_slice %225 {offsets = [0, 64], sizes = [2, 32], strides = [1, 1]} : vector<2x128xf32> to vector<2x32xf32>
    %229 = vector.extract_strided_slice %224 {offsets = [0, 96], sizes = [2, 32], strides = [1, 1]} : vector<2x128xf32> to vector<2x32xf32>
    %230 = arith.mulf %227, %213 : vector<2x32xf32>
    %231 = arith.mulf %226, %228 : vector<2x32xf32>
    %232 = arith.addf %230, %231 : vector<2x32xf32>
    %233 = math.tanh %232 : vector<2x32xf32>
    %234 = arith.mulf %229, %233 : vector<2x32xf32>
    %235 = vector.extract_strided_slice %156 {offsets = [0, 4, 0], sizes = [2, 1, 128], strides = [1, 1, 1]} : vector<2x16x128xf32> to vector<2x1x128xf32>
    %236 = vector.shape_cast %235 : vector<2x1x128xf32> to vector<2x128xf32>
    %cst_63 = arith.constant dense<0.000000e+00> : vector<2x128xf32>
    %237 = tpu.matmul %234, %147, %cst_63 {dimension_numbers = #tpu.dot_dimension_numbers<[1], [0], [0], [1], [0, 0, 1, 1], [], []>} : vector<2x32xf32>, vector<32x128xf32>, vector<2x128xf32> -> vector<2x128xf32>
    %238 = arith.addf %236, %237 : vector<2x128xf32>
    %239 = arith.negf %238 : vector<2x128xf32>
    %240 = math.exp %239 : vector<2x128xf32>
    %cst_64 = arith.constant 1.000000e+00 : f32
    %241 = vector.broadcast %cst_64 : f32 to vector<2x128xf32>
    %242 = arith.addf %241, %240 : vector<2x128xf32>
    %243 = arith.divf %241, %242 : vector<2x128xf32>
    %244 = math.tanh %238 : vector<2x128xf32>
    %245 = vector.extract_strided_slice %243 {offsets = [0, 0], sizes = [2, 32], strides = [1, 1]} : vector<2x128xf32> to vector<2x32xf32>
    %246 = vector.extract_strided_slice %243 {offsets = [0, 32], sizes = [2, 32], strides = [1, 1]} : vector<2x128xf32> to vector<2x32xf32>
    %247 = vector.extract_strided_slice %244 {offsets = [0, 64], sizes = [2, 32], strides = [1, 1]} : vector<2x128xf32> to vector<2x32xf32>
    %248 = vector.extract_strided_slice %243 {offsets = [0, 96], sizes = [2, 32], strides = [1, 1]} : vector<2x128xf32> to vector<2x32xf32>
    %249 = arith.mulf %246, %232 : vector<2x32xf32>
    %250 = arith.mulf %245, %247 : vector<2x32xf32>
    %251 = arith.addf %249, %250 : vector<2x32xf32>
    %252 = math.tanh %251 : vector<2x32xf32>
    %253 = arith.mulf %248, %252 : vector<2x32xf32>
    %254 = vector.extract_strided_slice %156 {offsets = [0, 5, 0], sizes = [2, 1, 128], strides = [1, 1, 1]} : vector<2x16x128xf32> to vector<2x1x128xf32>
    %255 = vector.shape_cast %254 : vector<2x1x128xf32> to vector<2x128xf32>
    %cst_65 = arith.constant dense<0.000000e+00> : vector<2x128xf32>
    %256 = tpu.matmul %253, %147, %cst_65 {dimension_numbers = #tpu.dot_dimension_numbers<[1], [0], [0], [1], [0, 0, 1, 1], [], []>} : vector<2x32xf32>, vector<32x128xf32>, vector<2x128xf32> -> vector<2x128xf32>
    %257 = arith.addf %255, %256 : vector<2x128xf32>
    %258 = arith.negf %257 : vector<2x128xf32>
    %259 = math.exp %258 : vector<2x128xf32>
    %cst_66 = arith.constant 1.000000e+00 : f32
    %260 = vector.broadcast %cst_66 : f32 to vector<2x128xf32>
    %261 = arith.addf %260, %259 : vector<2x128xf32>
    %262 = arith.divf %260, %261 : vector<2x128xf32>
    %263 = math.tanh %257 : vector<2x128xf32>
    %264 = vector.extract_strided_slice %262 {offsets = [0, 0], sizes = [2, 32], strides = [1, 1]} : vector<2x128xf32> to vector<2x32xf32>
    %265 = vector.extract_strided_slice %262 {offsets = [0, 32], sizes = [2, 32], strides = [1, 1]} : vector<2x128xf32> to vector<2x32xf32>
    %266 = vector.extract_strided_slice %263 {offsets = [0, 64], sizes = [2, 32], strides = [1, 1]} : vector<2x128xf32> to vector<2x32xf32>
    %267 = vector.extract_strided_slice %262 {offsets = [0, 96], sizes = [2, 32], strides = [1, 1]} : vector<2x128xf32> to vector<2x32xf32>
    %268 = arith.mulf %265, %251 : vector<2x32xf32>
    %269 = arith.mulf %264, %266 : vector<2x32xf32>
    %270 = arith.addf %268, %269 : vector<2x32xf32>
    %271 = math.tanh %270 : vector<2x32xf32>
    %272 = arith.mulf %267, %271 : vector<2x32xf32>
    %273 = vector.extract_strided_slice %156 {offsets = [0, 6, 0], sizes = [2, 1, 128], strides = [1, 1, 1]} : vector<2x16x128xf32> to vector<2x1x128xf32>
    %274 = vector.shape_cast %273 : vector<2x1x128xf32> to vector<2x128xf32>
    %cst_67 = arith.constant dense<0.000000e+00> : vector<2x128xf32>
    %275 = tpu.matmul %272, %147, %cst_67 {dimension_numbers = #tpu.dot_dimension_numbers<[1], [0], [0], [1], [0, 0, 1, 1], [], []>} : vector<2x32xf32>, vector<32x128xf32>, vector<2x128xf32> -> vector<2x128xf32>
    %276 = arith.addf %274, %275 : vector<2x128xf32>
    %277 = arith.negf %276 : vector<2x128xf32>
    %278 = math.exp %277 : vector<2x128xf32>
    %cst_68 = arith.constant 1.000000e+00 : f32
    %279 = vector.broadcast %cst_68 : f32 to vector<2x128xf32>
    %280 = arith.addf %279, %278 : vector<2x128xf32>
    %281 = arith.divf %279, %280 : vector<2x128xf32>
    %282 = math.tanh %276 : vector<2x128xf32>
    %283 = vector.extract_strided_slice %281 {offsets = [0, 0], sizes = [2, 32], strides = [1, 1]} : vector<2x128xf32> to vector<2x32xf32>
    %284 = vector.extract_strided_slice %281 {offsets = [0, 32], sizes = [2, 32], strides = [1, 1]} : vector<2x128xf32> to vector<2x32xf32>
    %285 = vector.extract_strided_slice %282 {offsets = [0, 64], sizes = [2, 32], strides = [1, 1]} : vector<2x128xf32> to vector<2x32xf32>
    %286 = vector.extract_strided_slice %281 {offsets = [0, 96], sizes = [2, 32], strides = [1, 1]} : vector<2x128xf32> to vector<2x32xf32>
    %287 = arith.mulf %284, %270 : vector<2x32xf32>
    %288 = arith.mulf %283, %285 : vector<2x32xf32>
    %289 = arith.addf %287, %288 : vector<2x32xf32>
    %290 = math.tanh %289 : vector<2x32xf32>
    %291 = arith.mulf %286, %290 : vector<2x32xf32>
    %292 = vector.extract_strided_slice %156 {offsets = [0, 7, 0], sizes = [2, 1, 128], strides = [1, 1, 1]} : vector<2x16x128xf32> to vector<2x1x128xf32>
    %293 = vector.shape_cast %292 : vector<2x1x128xf32> to vector<2x128xf32>
    %cst_69 = arith.constant dense<0.000000e+00> : vector<2x128xf32>
    %294 = tpu.matmul %291, %147, %cst_69 {dimension_numbers = #tpu.dot_dimension_numbers<[1], [0], [0], [1], [0, 0, 1, 1], [], []>} : vector<2x32xf32>, vector<32x128xf32>, vector<2x128xf32> -> vector<2x128xf32>
    %295 = arith.addf %293, %294 : vector<2x128xf32>
    %296 = arith.negf %295 : vector<2x128xf32>
    %297 = math.exp %296 : vector<2x128xf32>
    %cst_70 = arith.constant 1.000000e+00 : f32
    %298 = vector.broadcast %cst_70 : f32 to vector<2x128xf32>
    %299 = arith.addf %298, %297 : vector<2x128xf32>
    %300 = arith.divf %298, %299 : vector<2x128xf32>
    %301 = math.tanh %295 : vector<2x128xf32>
    %302 = vector.extract_strided_slice %300 {offsets = [0, 0], sizes = [2, 32], strides = [1, 1]} : vector<2x128xf32> to vector<2x32xf32>
    %303 = vector.extract_strided_slice %300 {offsets = [0, 32], sizes = [2, 32], strides = [1, 1]} : vector<2x128xf32> to vector<2x32xf32>
    %304 = vector.extract_strided_slice %301 {offsets = [0, 64], sizes = [2, 32], strides = [1, 1]} : vector<2x128xf32> to vector<2x32xf32>
    %305 = vector.extract_strided_slice %300 {offsets = [0, 96], sizes = [2, 32], strides = [1, 1]} : vector<2x128xf32> to vector<2x32xf32>
    %306 = arith.mulf %303, %289 : vector<2x32xf32>
    %307 = arith.mulf %302, %304 : vector<2x32xf32>
    %308 = arith.addf %306, %307 : vector<2x32xf32>
    %309 = math.tanh %308 : vector<2x32xf32>
    %310 = arith.mulf %305, %309 : vector<2x32xf32>
    %311 = vector.extract_strided_slice %156 {offsets = [0, 8, 0], sizes = [2, 1, 128], strides = [1, 1, 1]} : vector<2x16x128xf32> to vector<2x1x128xf32>
    %312 = vector.shape_cast %311 : vector<2x1x128xf32> to vector<2x128xf32>
    %cst_71 = arith.constant dense<0.000000e+00> : vector<2x128xf32>
    %313 = tpu.matmul %310, %147, %cst_71 {dimension_numbers = #tpu.dot_dimension_numbers<[1], [0], [0], [1], [0, 0, 1, 1], [], []>} : vector<2x32xf32>, vector<32x128xf32>, vector<2x128xf32> -> vector<2x128xf32>
    %314 = arith.addf %312, %313 : vector<2x128xf32>
    %315 = arith.negf %314 : vector<2x128xf32>
    %316 = math.exp %315 : vector<2x128xf32>
    %cst_72 = arith.constant 1.000000e+00 : f32
    %317 = vector.broadcast %cst_72 : f32 to vector<2x128xf32>
    %318 = arith.addf %317, %316 : vector<2x128xf32>
    %319 = arith.divf %317, %318 : vector<2x128xf32>
    %320 = math.tanh %314 : vector<2x128xf32>
    %321 = vector.extract_strided_slice %319 {offsets = [0, 0], sizes = [2, 32], strides = [1, 1]} : vector<2x128xf32> to vector<2x32xf32>
    %322 = vector.extract_strided_slice %319 {offsets = [0, 32], sizes = [2, 32], strides = [1, 1]} : vector<2x128xf32> to vector<2x32xf32>
    %323 = vector.extract_strided_slice %320 {offsets = [0, 64], sizes = [2, 32], strides = [1, 1]} : vector<2x128xf32> to vector<2x32xf32>
    %324 = vector.extract_strided_slice %319 {offsets = [0, 96], sizes = [2, 32], strides = [1, 1]} : vector<2x128xf32> to vector<2x32xf32>
    %325 = arith.mulf %322, %308 : vector<2x32xf32>
    %326 = arith.mulf %321, %323 : vector<2x32xf32>
    %327 = arith.addf %325, %326 : vector<2x32xf32>
    %328 = math.tanh %327 : vector<2x32xf32>
    %329 = arith.mulf %324, %328 : vector<2x32xf32>
    %330 = vector.extract_strided_slice %156 {offsets = [0, 9, 0], sizes = [2, 1, 128], strides = [1, 1, 1]} : vector<2x16x128xf32> to vector<2x1x128xf32>
    %331 = vector.shape_cast %330 : vector<2x1x128xf32> to vector<2x128xf32>
    %cst_73 = arith.constant dense<0.000000e+00> : vector<2x128xf32>
    %332 = tpu.matmul %329, %147, %cst_73 {dimension_numbers = #tpu.dot_dimension_numbers<[1], [0], [0], [1], [0, 0, 1, 1], [], []>} : vector<2x32xf32>, vector<32x128xf32>, vector<2x128xf32> -> vector<2x128xf32>
    %333 = arith.addf %331, %332 : vector<2x128xf32>
    %334 = arith.negf %333 : vector<2x128xf32>
    %335 = math.exp %334 : vector<2x128xf32>
    %cst_74 = arith.constant 1.000000e+00 : f32
    %336 = vector.broadcast %cst_74 : f32 to vector<2x128xf32>
    %337 = arith.addf %336, %335 : vector<2x128xf32>
    %338 = arith.divf %336, %337 : vector<2x128xf32>
    %339 = math.tanh %333 : vector<2x128xf32>
    %340 = vector.extract_strided_slice %338 {offsets = [0, 0], sizes = [2, 32], strides = [1, 1]} : vector<2x128xf32> to vector<2x32xf32>
    %341 = vector.extract_strided_slice %338 {offsets = [0, 32], sizes = [2, 32], strides = [1, 1]} : vector<2x128xf32> to vector<2x32xf32>
    %342 = vector.extract_strided_slice %339 {offsets = [0, 64], sizes = [2, 32], strides = [1, 1]} : vector<2x128xf32> to vector<2x32xf32>
    %343 = vector.extract_strided_slice %338 {offsets = [0, 96], sizes = [2, 32], strides = [1, 1]} : vector<2x128xf32> to vector<2x32xf32>
    %344 = arith.mulf %341, %327 : vector<2x32xf32>
    %345 = arith.mulf %340, %342 : vector<2x32xf32>
    %346 = arith.addf %344, %345 : vector<2x32xf32>
    %347 = math.tanh %346 : vector<2x32xf32>
    %348 = arith.mulf %343, %347 : vector<2x32xf32>
    %349 = vector.extract_strided_slice %156 {offsets = [0, 10, 0], sizes = [2, 1, 128], strides = [1, 1, 1]} : vector<2x16x128xf32> to vector<2x1x128xf32>
    %350 = vector.shape_cast %349 : vector<2x1x128xf32> to vector<2x128xf32>
    %cst_75 = arith.constant dense<0.000000e+00> : vector<2x128xf32>
    %351 = tpu.matmul %348, %147, %cst_75 {dimension_numbers = #tpu.dot_dimension_numbers<[1], [0], [0], [1], [0, 0, 1, 1], [], []>} : vector<2x32xf32>, vector<32x128xf32>, vector<2x128xf32> -> vector<2x128xf32>
    %352 = arith.addf %350, %351 : vector<2x128xf32>
    %353 = arith.negf %352 : vector<2x128xf32>
    %354 = math.exp %353 : vector<2x128xf32>
    %cst_76 = arith.constant 1.000000e+00 : f32
    %355 = vector.broadcast %cst_76 : f32 to vector<2x128xf32>
    %356 = arith.addf %355, %354 : vector<2x128xf32>
    %357 = arith.divf %355, %356 : vector<2x128xf32>
    %358 = math.tanh %352 : vector<2x128xf32>
    %359 = vector.extract_strided_slice %357 {offsets = [0, 0], sizes = [2, 32], strides = [1, 1]} : vector<2x128xf32> to vector<2x32xf32>
    %360 = vector.extract_strided_slice %357 {offsets = [0, 32], sizes = [2, 32], strides = [1, 1]} : vector<2x128xf32> to vector<2x32xf32>
    %361 = vector.extract_strided_slice %358 {offsets = [0, 64], sizes = [2, 32], strides = [1, 1]} : vector<2x128xf32> to vector<2x32xf32>
    %362 = vector.extract_strided_slice %357 {offsets = [0, 96], sizes = [2, 32], strides = [1, 1]} : vector<2x128xf32> to vector<2x32xf32>
    %363 = arith.mulf %360, %346 : vector<2x32xf32>
    %364 = arith.mulf %359, %361 : vector<2x32xf32>
    %365 = arith.addf %363, %364 : vector<2x32xf32>
    %366 = math.tanh %365 : vector<2x32xf32>
    %367 = arith.mulf %362, %366 : vector<2x32xf32>
    %368 = vector.extract_strided_slice %156 {offsets = [0, 11, 0], sizes = [2, 1, 128], strides = [1, 1, 1]} : vector<2x16x128xf32> to vector<2x1x128xf32>
    %369 = vector.shape_cast %368 : vector<2x1x128xf32> to vector<2x128xf32>
    %cst_77 = arith.constant dense<0.000000e+00> : vector<2x128xf32>
    %370 = tpu.matmul %367, %147, %cst_77 {dimension_numbers = #tpu.dot_dimension_numbers<[1], [0], [0], [1], [0, 0, 1, 1], [], []>} : vector<2x32xf32>, vector<32x128xf32>, vector<2x128xf32> -> vector<2x128xf32>
    %371 = arith.addf %369, %370 : vector<2x128xf32>
    %372 = arith.negf %371 : vector<2x128xf32>
    %373 = math.exp %372 : vector<2x128xf32>
    %cst_78 = arith.constant 1.000000e+00 : f32
    %374 = vector.broadcast %cst_78 : f32 to vector<2x128xf32>
    %375 = arith.addf %374, %373 : vector<2x128xf32>
    %376 = arith.divf %374, %375 : vector<2x128xf32>
    %377 = math.tanh %371 : vector<2x128xf32>
    %378 = vector.extract_strided_slice %376 {offsets = [0, 0], sizes = [2, 32], strides = [1, 1]} : vector<2x128xf32> to vector<2x32xf32>
    %379 = vector.extract_strided_slice %376 {offsets = [0, 32], sizes = [2, 32], strides = [1, 1]} : vector<2x128xf32> to vector<2x32xf32>
    %380 = vector.extract_strided_slice %377 {offsets = [0, 64], sizes = [2, 32], strides = [1, 1]} : vector<2x128xf32> to vector<2x32xf32>
    %381 = vector.extract_strided_slice %376 {offsets = [0, 96], sizes = [2, 32], strides = [1, 1]} : vector<2x128xf32> to vector<2x32xf32>
    %382 = arith.mulf %379, %365 : vector<2x32xf32>
    %383 = arith.mulf %378, %380 : vector<2x32xf32>
    %384 = arith.addf %382, %383 : vector<2x32xf32>
    %385 = math.tanh %384 : vector<2x32xf32>
    %386 = arith.mulf %381, %385 : vector<2x32xf32>
    %387 = vector.extract_strided_slice %156 {offsets = [0, 12, 0], sizes = [2, 1, 128], strides = [1, 1, 1]} : vector<2x16x128xf32> to vector<2x1x128xf32>
    %388 = vector.shape_cast %387 : vector<2x1x128xf32> to vector<2x128xf32>
    %cst_79 = arith.constant dense<0.000000e+00> : vector<2x128xf32>
    %389 = tpu.matmul %386, %147, %cst_79 {dimension_numbers = #tpu.dot_dimension_numbers<[1], [0], [0], [1], [0, 0, 1, 1], [], []>} : vector<2x32xf32>, vector<32x128xf32>, vector<2x128xf32> -> vector<2x128xf32>
    %390 = arith.addf %388, %389 : vector<2x128xf32>
    %391 = arith.negf %390 : vector<2x128xf32>
    %392 = math.exp %391 : vector<2x128xf32>
    %cst_80 = arith.constant 1.000000e+00 : f32
    %393 = vector.broadcast %cst_80 : f32 to vector<2x128xf32>
    %394 = arith.addf %393, %392 : vector<2x128xf32>
    %395 = arith.divf %393, %394 : vector<2x128xf32>
    %396 = math.tanh %390 : vector<2x128xf32>
    %397 = vector.extract_strided_slice %395 {offsets = [0, 0], sizes = [2, 32], strides = [1, 1]} : vector<2x128xf32> to vector<2x32xf32>
    %398 = vector.extract_strided_slice %395 {offsets = [0, 32], sizes = [2, 32], strides = [1, 1]} : vector<2x128xf32> to vector<2x32xf32>
    %399 = vector.extract_strided_slice %396 {offsets = [0, 64], sizes = [2, 32], strides = [1, 1]} : vector<2x128xf32> to vector<2x32xf32>
    %400 = vector.extract_strided_slice %395 {offsets = [0, 96], sizes = [2, 32], strides = [1, 1]} : vector<2x128xf32> to vector<2x32xf32>
    %401 = arith.mulf %398, %384 : vector<2x32xf32>
    %402 = arith.mulf %397, %399 : vector<2x32xf32>
    %403 = arith.addf %401, %402 : vector<2x32xf32>
    %404 = math.tanh %403 : vector<2x32xf32>
    %405 = arith.mulf %400, %404 : vector<2x32xf32>
    %406 = vector.extract_strided_slice %156 {offsets = [0, 13, 0], sizes = [2, 1, 128], strides = [1, 1, 1]} : vector<2x16x128xf32> to vector<2x1x128xf32>
    %407 = vector.shape_cast %406 : vector<2x1x128xf32> to vector<2x128xf32>
    %cst_81 = arith.constant dense<0.000000e+00> : vector<2x128xf32>
    %408 = tpu.matmul %405, %147, %cst_81 {dimension_numbers = #tpu.dot_dimension_numbers<[1], [0], [0], [1], [0, 0, 1, 1], [], []>} : vector<2x32xf32>, vector<32x128xf32>, vector<2x128xf32> -> vector<2x128xf32>
    %409 = arith.addf %407, %408 : vector<2x128xf32>
    %410 = arith.negf %409 : vector<2x128xf32>
    %411 = math.exp %410 : vector<2x128xf32>
    %cst_82 = arith.constant 1.000000e+00 : f32
    %412 = vector.broadcast %cst_82 : f32 to vector<2x128xf32>
    %413 = arith.addf %412, %411 : vector<2x128xf32>
    %414 = arith.divf %412, %413 : vector<2x128xf32>
    %415 = math.tanh %409 : vector<2x128xf32>
    %416 = vector.extract_strided_slice %414 {offsets = [0, 0], sizes = [2, 32], strides = [1, 1]} : vector<2x128xf32> to vector<2x32xf32>
    %417 = vector.extract_strided_slice %414 {offsets = [0, 32], sizes = [2, 32], strides = [1, 1]} : vector<2x128xf32> to vector<2x32xf32>
    %418 = vector.extract_strided_slice %415 {offsets = [0, 64], sizes = [2, 32], strides = [1, 1]} : vector<2x128xf32> to vector<2x32xf32>
    %419 = vector.extract_strided_slice %414 {offsets = [0, 96], sizes = [2, 32], strides = [1, 1]} : vector<2x128xf32> to vector<2x32xf32>
    %420 = arith.mulf %417, %403 : vector<2x32xf32>
    %421 = arith.mulf %416, %418 : vector<2x32xf32>
    %422 = arith.addf %420, %421 : vector<2x32xf32>
    %423 = math.tanh %422 : vector<2x32xf32>
    %424 = arith.mulf %419, %423 : vector<2x32xf32>
    %425 = vector.extract_strided_slice %156 {offsets = [0, 14, 0], sizes = [2, 1, 128], strides = [1, 1, 1]} : vector<2x16x128xf32> to vector<2x1x128xf32>
    %426 = vector.shape_cast %425 : vector<2x1x128xf32> to vector<2x128xf32>
    %cst_83 = arith.constant dense<0.000000e+00> : vector<2x128xf32>
    %427 = tpu.matmul %424, %147, %cst_83 {dimension_numbers = #tpu.dot_dimension_numbers<[1], [0], [0], [1], [0, 0, 1, 1], [], []>} : vector<2x32xf32>, vector<32x128xf32>, vector<2x128xf32> -> vector<2x128xf32>
    %428 = arith.addf %426, %427 : vector<2x128xf32>
    %429 = arith.negf %428 : vector<2x128xf32>
    %430 = math.exp %429 : vector<2x128xf32>
    %cst_84 = arith.constant 1.000000e+00 : f32
    %431 = vector.broadcast %cst_84 : f32 to vector<2x128xf32>
    %432 = arith.addf %431, %430 : vector<2x128xf32>
    %433 = arith.divf %431, %432 : vector<2x128xf32>
    %434 = math.tanh %428 : vector<2x128xf32>
    %435 = vector.extract_strided_slice %433 {offsets = [0, 0], sizes = [2, 32], strides = [1, 1]} : vector<2x128xf32> to vector<2x32xf32>
    %436 = vector.extract_strided_slice %433 {offsets = [0, 32], sizes = [2, 32], strides = [1, 1]} : vector<2x128xf32> to vector<2x32xf32>
    %437 = vector.extract_strided_slice %434 {offsets = [0, 64], sizes = [2, 32], strides = [1, 1]} : vector<2x128xf32> to vector<2x32xf32>
    %438 = vector.extract_strided_slice %433 {offsets = [0, 96], sizes = [2, 32], strides = [1, 1]} : vector<2x128xf32> to vector<2x32xf32>
    %439 = arith.mulf %436, %422 : vector<2x32xf32>
    %440 = arith.mulf %435, %437 : vector<2x32xf32>
    %441 = arith.addf %439, %440 : vector<2x32xf32>
    %442 = math.tanh %441 : vector<2x32xf32>
    %443 = arith.mulf %438, %442 : vector<2x32xf32>
    %444 = vector.extract_strided_slice %156 {offsets = [0, 15, 0], sizes = [2, 1, 128], strides = [1, 1, 1]} : vector<2x16x128xf32> to vector<2x1x128xf32>
    %445 = vector.shape_cast %444 : vector<2x1x128xf32> to vector<2x128xf32>
    %cst_85 = arith.constant dense<0.000000e+00> : vector<2x128xf32>
    %446 = tpu.matmul %443, %147, %cst_85 {dimension_numbers = #tpu.dot_dimension_numbers<[1], [0], [0], [1], [0, 0, 1, 1], [], []>} : vector<2x32xf32>, vector<32x128xf32>, vector<2x128xf32> -> vector<2x128xf32>
    %447 = arith.addf %445, %446 : vector<2x128xf32>
    %448 = arith.negf %447 : vector<2x128xf32>
    %449 = math.exp %448 : vector<2x128xf32>
    %cst_86 = arith.constant 1.000000e+00 : f32
    %450 = vector.broadcast %cst_86 : f32 to vector<2x128xf32>
    %451 = arith.addf %450, %449 : vector<2x128xf32>
    %452 = arith.divf %450, %451 : vector<2x128xf32>
    %453 = math.tanh %447 : vector<2x128xf32>
    %454 = vector.extract_strided_slice %452 {offsets = [0, 0], sizes = [2, 32], strides = [1, 1]} : vector<2x128xf32> to vector<2x32xf32>
    %455 = vector.extract_strided_slice %452 {offsets = [0, 32], sizes = [2, 32], strides = [1, 1]} : vector<2x128xf32> to vector<2x32xf32>
    %456 = vector.extract_strided_slice %453 {offsets = [0, 64], sizes = [2, 32], strides = [1, 1]} : vector<2x128xf32> to vector<2x32xf32>
    %457 = vector.extract_strided_slice %452 {offsets = [0, 96], sizes = [2, 32], strides = [1, 1]} : vector<2x128xf32> to vector<2x32xf32>
    %458 = arith.mulf %455, %441 : vector<2x32xf32>
    %459 = arith.mulf %454, %456 : vector<2x32xf32>
    %460 = arith.addf %458, %459 : vector<2x32xf32>
    %461 = math.tanh %460 : vector<2x32xf32>
    %462 = arith.mulf %457, %461 : vector<2x32xf32>
    %cst_87 = arith.constant dense<0.000000e+00> : vector<2x128xf32>
    %463 = tpu.matmul %462, %149, %cst_87 {dimension_numbers = #tpu.dot_dimension_numbers<[1], [0], [0], [1], [0, 0, 1, 1], [], []>} : vector<2x32xf32>, vector<32x128xf32>, vector<2x128xf32> -> vector<2x128xf32>
    %464 = vector.broadcast %150 : vector<1x128xf32> to vector<2x128xf32>
    %465 = arith.addf %463, %464 : vector<2x128xf32>
    %c0_88 = arith.constant 0 : index
    %c0_89 = arith.constant 0 : index
    %466 = vector.load %arg2[%c0_88, %c0_89] : memref<2x128xf32, #tpu.memory_space<vmem>>, vector<2x128xf32>
    tpu.vector_store %arg2[%c0_88, %c0_89], %465 {strides = array<i32>} : memref<2x128xf32, #tpu.memory_space<vmem>>, vector<2x128xf32>,
    return
  }
}

</mosaic_0001>

<llo_original>
// kernel: tpu_custom_call.1
$region0: #{tpu_custom_call.1}
  #allocation0 [shape = 'u32[]', space=smem, size = 0x4, offset = 0x4, fixed_abs, tag = 'smem constant byte address 0x4 - core index']
  #allocation1 [shape = 'u32[144,128]{1,0:T(1,128)}', space=vmem, size = 0x12000, scoped, tag = 'internal scratch']
  %s0 = inlined_call_operand.vmem [shape: f32[2,16,4], index: 0, kind: input, shape index: {}]
  %s1 = inlined_call_operand.hbm [shape: f32[264,128], index: 1, kind: input, shape index: {}]
  %s2 = inlined_call_operand.hbm [shape: f32[2,128], index: 2, kind: output, shape index: {}]
  %s3 = sld [smem:[#allocation0]]
  $region22: #{tpu_custom_call.1} parent=0
    _
  %s5 = ssub.s32 1, %s3
  %s6 = scalar_select 0, %s5, %s3
  $region1: #{tpu_custom_call.1} parent=0
    #allocation2 [shape = 'u8[135168]{0}', space=vmem, size = 0x21000, scoped, tag = 'input window, operand 1, single buffered']
    #allocation3 [shape = 's32[1]{0}', space=sflag, size = 0x4, scoped, tag = 'scoped memory for tpu_custom_call.1']
    #allocation4 [shape = 's32[1]{0}', space=sflag, size = 0x4, scoped, tag = 'scoped memory for tpu_custom_call.1']
    #allocation5 [shape = 'u8[1024]{0}', space=vmem, size = 0x400, scoped, tag = 'output window, operand 0, single buffered']
    %7 = vsyncpa [#allocation3], 0
    %8 = vsyncpa [#allocation4], 0
    // Predicated region
    $region2: #{tpu_custom_call.1} parent=1 // pred_check
      _
    $region3: #{tpu_custom_call.1} parent=1 // pred_check_branch
      %10 = sbr.rel (0) target = $region5
    $region4: #{tpu_custom_call.1} parent=1 // pred_region
      _
    $region5: #{tpu_custom_call.1} parent=1 // pred_fallthru
      _
    // Predicated region
    $region6: #{tpu_custom_call.1} parent=1 // pred_check
      _
    $region7: #{tpu_custom_call.1} parent=1 // pred_check_branch
      %12 = sbr.rel (0) target = $region9
    $region8: #{tpu_custom_call.1} parent=1 // pred_region
      %s14 = ssub.s32 4224, 4224
      %15 = vsyncadd [#allocation3], %s14
      %s16 = sshll.u32 [#allocation2], 4
      %s17 = int_to_ptr.vmem [resolvable:$true] %s16
      %22 = dma.hbm_to_vmem [thread:$0]  %s1, 4224, %s17, [#allocation3], 128, 128, 8
    $region9: #{tpu_custom_call.1} parent=1 // pred_fallthru
      _
    // Predicated region
    $region10: #{tpu_custom_call.1} parent=1 // pred_check
      _
    $region11: #{tpu_custom_call.1} parent=1 // pred_check_branch
      %24 = sbr.rel (0) target = $region13
    $region12: #{tpu_custom_call.1} parent=1 // pred_region
      %25 = dma.done [#allocation3], 4224
    $region13: #{tpu_custom_call.1} parent=1 // pred_fallthru
      _
    %v26 = vld [vmem:[%s0] sm:$0xff]
    %v27 = vld [vmem:[%s0 + $0x8] sm:$0xff]
    %v28 = vld [vmem:[%s0 + $0x10] sm:$0xff]
    %v29 = vld [vmem:[%s0 + $0x18] sm:$0xff]
    %v30 = vld [vmem:[#allocation2] sm:$0xff]
    %v31 = vld [vmem:[#allocation2 + $0x8] sm:$0xf]
    %v32 = vld [vmem:[#allocation2 + $0xc] sm:$0x1]
    %v33 = vld [vmem:[#allocation2 + $0xd] sm:$0x1]
    %v34 = vld [vmem:[#allocation2 + $0xe] sm:$0xff]
    %v35 = vld [vmem:[#allocation2 + $0x16] sm:$0xff]
    %v36 = vld [vmem:[#allocation2 + $0x1e] sm:$0xff]
    %v37 = vld [vmem:[#allocation2 + $0x26] sm:$0x1]
    %v38 = vld [vmem:[#allocation2 + $0x27] sm:$0x1]
    %vm43 = vcmask 1041408
    %v44 = vrot.slane %v26, 6
    %v45 = vrot.slane %v27, 6
    %v46 = vsel %vm43, %v44, %v45
    %v47 = vrot.slane %v28, 6
    %v48 = vrot.slane %v29, 6
    %v49 = vsel %vm43, %v47, %v48
    %v54 = vsel %vm43, 0.0, %v44
    %v55 = vsel %vm43, 0.0, %v47
    %vm58 = vcmask 1046528
    %v59 = vrot.slane %v54, 1
    %v60 = vrot.slane %v46, 1
    %v61 = vsel %vm58, %v59, %v60
    %v62 = vrot.slane %v45, 1
    %v63 = vsel %vm58, %v60, %v62
    %v64 = vrot.slane %v55, 1
    %v65 = vrot.slane %v49, 1
    %v66 = vsel %vm58, %v64, %v65
    %v67 = vrot.slane %v48, 1
    %v68 = vsel %vm58, %v65, %v67
    %69 = vrot.lane.b32.xlu0 %v61, 4
    %v70 = vpop.permute.xlu0 %69
    %71 = vrot.lane.b32.xlu0 %v63, 4
    %v72 = vpop.permute.xlu0 %71
    %73 = vrot.lane.b32.xlu0 %v66, 4
    %v74 = vpop.permute.xlu0 %73
    %75 = vrot.lane.b32.xlu0 %v68, 4
    %v76 = vpop.permute.xlu0 %75
    %vm81 = vcmask 1045504
    %v82 = vrot.slane %v54, 2
    %v83 = vrot.slane %v46, 2
    %v84 = vsel %vm81, %v82, %v83
    %v85 = vrot.slane %v45, 2
    %v86 = vsel %vm81, %v83, %v85
    %v87 = vrot.slane %v55, 2
    %v88 = vrot.slane %v49, 2
    %v89 = vsel %vm81, %v87, %v88
    %v90 = vrot.slane %v48, 2
    %v91 = vsel %vm81, %v88, %v90
    %92 = vrot.lane.b32.xlu0 %v84, 8
    %v93 = vpop.permute.xlu0 %92
    %94 = vrot.lane.b32.xlu0 %v86, 8
    %v95 = vpop.permute.xlu0 %94
    %96 = vrot.lane.b32.xlu0 %v89, 8
    %v97 = vpop.permute.xlu0 %96
    %98 = vrot.lane.b32.xlu0 %v91, 8
    %v99 = vpop.permute.xlu0 %98
    %vm104 = vcmask 31744
    %v105 = vsel %vm104, %v54, %v70
    %v106 = vsel %vm104, %v46, %v72
    %v107 = vsel %vm104, %v55, %v74
    %v108 = vsel %vm104, %v49, %v76
    %vm109 = vcmask 64512
    %v110 = vsel %vm109, %v105, %v93
    %v111 = vsel %vm109, %v106, %v95
    %v112 = vsel %vm109, %v107, %v97
    %v113 = vsel %vm109, %v108, %v99
    %vm114 = vcmask 97280
    %v116 = vsel %vm114, %v110, 0
    %v119 = vsel %vm114, %v111, 0
    %v122 = vsel %vm114, %v112, 0
    %v125 = vsel %vm114, %v113, 0
    %vm127 = vcmask 1043456
    %v129 = vsel %vm127, %v31, 0
    %131 = vmatprep.subr.mxu0 0.0
    %132 = vmatpush1.msra.mxu0 %v30
    %133 = vmatprep.subr.mxu0 0.0
    %134 = vmatpush1.msra.mxu0 %v129
    %135 = vmatprep.subr.mxu0 0.0
    %136 = vmatpush1.msra.mxu0 0.0
    %137 = vmatprep.subr.mxu0 0.0
    %138 = vmatpush1.msra.mxu0 0.0
    %139 = vmatprep.subr.mxu0 0.0
    %140 = vmatpush1.msra.mxu0 0.0
    %141 = vmatprep.subr.mxu0 0.0
    %142 = vmatpush1.msra.mxu0 0.0
    %143 = vmatprep.subr.mxu0 0.0
    %144 = vmatpush1.msra.mxu0 0.0
    %145 = vmatprep.subr.mxu0 0.0
    %146 = vmatpush1.msra.mxu0 0.0
    %147 = vmatprep.subr.mxu0 0.0
    %148 = vmatpush1.msra.mxu0 0.0
    %149 = vmatprep.subr.mxu0 0.0
    %150 = vmatpush1.msra.mxu0 0.0
    %151 = vmatprep.subr.mxu0 0.0
    %152 = vmatpush1.msra.mxu0 0.0
    %153 = vmatprep.subr.mxu0 0.0
    %154 = vmatpush1.msra.mxu0 0.0
    %155 = vmatprep.subr.mxu0 0.0
    %156 = vmatpush1.msra.mxu0 0.0
    %157 = vmatprep.subr.mxu0 0.0
    %158 = vmatpush1.msra.mxu0 0.0
    %159 = vmatprep.subr.mxu0 0.0
    %160 = vmatpush1.msra.mxu0 0.0
    %161 = vmatprep.subr.mxu0 0.0
    %162 = vmatpush1.msra.mxu0 0.0
    %163 = vmatprep.subr.mxu0 0.0
    %164 = vmatpush1.msra.mxu0 0.0
    %165 = vmatprep.subr.mxu0 0.0
    %166 = vmatpush1.msra.mxu0 0.0
    %167 = vmatprep.subr.mxu0 0.0
    %168 = vmatpush1.msra.mxu0 0.0
    %169 = vmatprep.subr.mxu0 0.0
    %170 = vmatpush1.msra.mxu0 0.0
    %171 = vmatprep.subr.mxu0 0.0
    %172 = vmatpush1.msra.mxu0 0.0
    %173 = vmatprep.subr.mxu0 0.0
    %174 = vmatpush1.msra.mxu0 0.0
    %175 = vmatprep.subr.mxu0 0.0
    %176 = vmatpush1.msra.mxu0 0.0
    %177 = vmatprep.subr.mxu0 0.0
    %178 = vmatpush1.msra.mxu0 0.0
    %179 = vmatprep.subr.mxu0 0.0
    %180 = vmatpush1.msra.mxu0 0.0
    %181 = vmatprep.subr.mxu0 0.0
    %182 = vmatpush1.msra.mxu0 0.0
    %183 = vmatprep.subr.mxu0 0.0
    %184 = vmatpush1.msra.mxu0 0.0
    %185 = vmatprep.subr.mxu0 0.0
    %186 = vmatpush1.msra.mxu0 0.0
    %187 = vmatprep.subr.mxu0 0.0
    %188 = vmatpush1.msra.mxu0 0.0
    %189 = vmatprep.subr.mxu0 0.0
    %190 = vmatpush1.msra.mxu0 0.0
    %191 = vmatprep.subr.mxu0 0.0
    %192 = vmatpush1.msra.mxu0 0.0
    %193 = vmatprep.subr.mxu0 0.0
    %194 = vmatpush1.msra.mxu0 0.0
    %195 = vmatprep.mubr.f32.mxu0 0.0
    %196 = vmatmul.mubr.f32.gmra.mrb[0].mxu0 %v116
    %v197 = vpop.f32.mrb[0].mxu0
    %v198 = vadd.f32 0.0, %v197
    %v199 = vpop.f32.mrb[0].mxu0
    %200 = vmatprep.mubr.f32.mxu0 0.0
    %201 = vmatmul.mubr.f32.gmra.mrb[0].mxu0 %v119
    %v202 = vpop.f32.mrb[0].mxu0
    %v203 = vadd.f32 0.0, %v202
    %v204 = vpop.f32.mrb[0].mxu0
    %205 = vmatprep.mubr.f32.mxu0 0.0
    %206 = vmatmul.mubr.f32.gmra.mrb[0].mxu0 %v122
    %v207 = vpop.f32.mrb[0].mxu0
    %v208 = vadd.f32 0.0, %v207
    %v209 = vpop.f32.mrb[0].mxu0
    %210 = vmatprep.mubr.f32.mxu0 0.0
    %211 = vmatmul.mubr.f32.gmra.mrb[0].mxu0 %v125
    %v212 = vpop.f32.mrb[0].mxu0
    %v213 = vadd.f32 0.0, %v212
    %v214 = vpop.f32.mrb[0].mxu0
    %215 = vdwg.mxu0
    %v216 = vlaneseq
    %v217 = vshrl.u32 %v216, 7
    %v218 = vsub.s32 0, %v217
    %v219 = vrot.slane %v32, %v218
    %v220 = vmul.f32 %v198, %v219
    %v221 = vmul.f32 %v203, %v219
    %v222 = vmul.f32 %v208, %v219
    %v223 = vmul.f32 %v213, %v219
    %v224 = vlaneseq
    %v225 = vshrl.u32 %v224, 7
    %v226 = vsub.s32 0, %v225
    %v227 = vrot.slane %v33, %v226
    %v228 = vadd.f32 %v220, %v227
    %v229 = vadd.f32 %v221, %v227
    %v230 = vadd.f32 %v222, %v227
    %v231 = vadd.f32 %v223, %v227
    %v232 = vmax.f32 %v228, 0.0
    %v233 = vmax.f32 %v229, 0.0
    %v234 = vmax.f32 %v230, 0.0
    %v235 = vmax.f32 %v231, 0.0
    %v240 = vrot.slane %v232, 6
    %v241 = vrot.slane %v233, 6
    %v242 = vsel %vm43, %v240, %v241
    %v243 = vrot.slane %v234, 6
    %v244 = vrot.slane %v235, 6
    %v245 = vsel %vm43, %v243, %v244
    %v250 = vsel %vm43, 0.0, %v240
    %v251 = vsel %vm43, 0.0, %v243
    %v254 = vrot.slane %v250, 1
    %v255 = vrot.slane %v242, 1
    %v256 = vsel %vm58, %v254, %v255
    %v257 = vrot.slane %v241, 1
    %v258 = vsel %vm58, %v255, %v257
    %v259 = vrot.slane %v251, 1
    %v260 = vrot.slane %v245, 1
    %v261 = vsel %vm58, %v259, %v260
    %v262 = vrot.slane %v244, 1
    %v263 = vsel %vm58, %v260, %v262
    %264 = vrot.lane.b32.xlu0 %v256, 8
    %v265 = vpop.permute.xlu0 %264
    %266 = vrot.lane.b32.xlu0 %v258, 8
    %v267 = vpop.permute.xlu0 %266
    %268 = vrot.lane.b32.xlu0 %v261, 8
    %v269 = vpop.permute.xlu0 %268
    %270 = vrot.lane.b32.xlu0 %v263, 8
    %v271 = vpop.permute.xlu0 %270
    %v276 = vrot.slane %v250, 2
    %v277 = vrot.slane %v242, 2
    %v278 = vsel %vm81, %v276, %v277
    %v279 = vrot.slane %v241, 2
    %v280 = vsel %vm81, %v277, %v279
    %v281 = vrot.slane %v251, 2
    %v282 = vrot.slane %v245, 2
    %v283 = vsel %vm81, %v281, %v282
    %v284 = vrot.slane %v244, 2
    %v285 = vsel %vm81, %v282, %v284
    %286 = vrot.lane.b32.xlu0 %v278, 16
    %v287 = vpop.permute.xlu0 %286
    %288 = vrot.lane.b32.xlu0 %v280, 16
    %v289 = vpop.permute.xlu0 %288
    %290 = vrot.lane.b32.xlu0 %v283, 16
    %v291 = vpop.permute.xlu0 %290
    %292 = vrot.lane.b32.xlu0 %v285, 16
    %v293 = vpop.permute.xlu0 %292
    %v298 = vsel %vm109, %v250, %v265
    %v299 = vsel %vm109, %v242, %v267
    %v300 = vsel %vm109, %v251, %v269
    %v301 = vsel %vm109, %v245, %v271
    %vm302 = vcmask 130048
    %v303 = vsel %vm302, %v298, %v287
    %v304 = vsel %vm302, %v299, %v289
    %v305 = vsel %vm302, %v300, %v291
    %v306 = vsel %vm302, %v301, %v293
    %vm307 = vcmask 195584
    %v309 = vsel %vm307, %v303, 0
    %v312 = vsel %vm307, %v304, 0
    %v315 = vsel %vm307, %v305, 0
    %v318 = vsel %vm307, %v306, 0
    %320 = vmatprep.subr.mxu0 0.0
    %321 = vmatpush1.msra.mxu0 %v34
    %322 = vmatprep.subr.mxu0 0.0
    %323 = vmatpush1.msra.mxu0 %v35
    %324 = vmatprep.subr.mxu0 0.0
    %325 = vmatpush1.msra.mxu0 %v36
    %326 = vmatprep.subr.mxu0 0.0
    %327 = vmatpush1.msra.mxu0 0.0
    %328 = vmatprep.subr.mxu0 0.0
    %329 = vmatpush1.msra.mxu0 0.0
    %330 = vmatprep.subr.mxu0 0.0
    %331 = vmatpush1.msra.mxu0 0.0
    %332 = vmatprep.subr.mxu0 0.0
    %333 = vmatpush1.msra.mxu0 0.0
    %334 = vmatprep.subr.mxu0 0.0
    %335 = vmatpush1.msra.mxu0 0.0
    %336 = vmatprep.subr.mxu0 0.0
    %337 = vmatpush1.msra.mxu0 0.0
    %338 = vmatprep.subr.mxu0 0.0
    %339 = vmatpush1.msra.mxu0 0.0
    %340 = vmatprep.subr.mxu0 0.0
    %341 = vmatpush1.msra.mxu0 0.0
    %342 = vmatprep.subr.mxu0 0.0
    %343 = vmatpush1.msra.mxu0 0.0
    %344 = vmatprep.subr.mxu0 0.0
    %345 = vmatpush1.msra.mxu0 0.0
    %346 = vmatprep.subr.mxu0 0.0
    %347 = vmatpush1.msra.mxu0 0.0
    %348 = vmatprep.subr.mxu0 0.0
    %349 = vmatpush1.msra.mxu0 0.0
    %350 = vmatprep.subr.mxu0 0.0
    %351 = vmatpush1.msra.mxu0 0.0
    %352 = vmatprep.subr.mxu0 0.0
    %353 = vmatpush1.msra.mxu0 0.0
    %354 = vmatprep.subr.mxu0 0.0
    %355 = vmatpush1.msra.mxu0 0.0
    %356 = vmatprep.subr.mxu0 0.0
    %357 = vmatpush1.msra.mxu0 0.0
    %358 = vmatprep.subr.mxu0 0.0
    %359 = vmatpush1.msra.mxu0 0.0
    %360 = vmatprep.subr.mxu0 0.0
    %361 = vmatpush1.msra.mxu0 0.0
    %362 = vmatprep.subr.mxu0 0.0
    %363 = vmatpush1.msra.mxu0 0.0
    %364 = vmatprep.subr.mxu0 0.0
    %365 = vmatpush1.msra.mxu0 0.0
    %366 = vmatprep.subr.mxu0 0.0
    %367 = vmatpush1.msra.mxu0 0.0
    %368 = vmatprep.subr.mxu0 0.0
    %369 = vmatpush1.msra.mxu0 0.0
    %370 = vmatprep.subr.mxu0 0.0
    %371 = vmatpush1.msra.mxu0 0.0
    %372 = vmatprep.subr.mxu0 0.0
    %373 = vmatpush1.msra.mxu0 0.0
    %374 = vmatprep.subr.mxu0 0.0
    %375 = vmatpush1.msra.mxu0 0.0
    %376 = vmatprep.subr.mxu0 0.0
    %377 = vmatpush1.msra.mxu0 0.0
    %378 = vmatprep.subr.mxu0 0.0
    %379 = vmatpush1.msra.mxu0 0.0
    %380 = vmatprep.subr.mxu0 0.0
    %381 = vmatpush1.msra.mxu0 0.0
    %382 = vmatprep.subr.mxu0 0.0
    %383 = vmatpush1.msra.mxu0 0.0
    %384 = vmatprep.mubr.f32.mxu0 0.0
    %385 = vmatmul.mubr.f32.gmra.mrb[0].mxu0 %v309
    %v386 = vpop.f32.mrb[0].mxu0
    %v387 = vadd.f32 0.0, %v386
    %v388 = vpop.f32.mrb[0].mxu0
    %389 = vmatprep.mubr.f32.mxu0 0.0
    %390 = vmatmul.mubr.f32.gmra.mrb[0].mxu0 %v312
    %v391 = vpop.f32.mrb[0].mxu0
    %v392 = vadd.f32 0.0, %v391
    %v393 = vpop.f32.mrb[0].mxu0
    %394 = vmatprep.mubr.f32.mxu0 0.0
    %395 = vmatmul.mubr.f32.gmra.mrb[0].mxu0 %v315
    %v396 = vpop.f32.mrb[0].mxu0
    %v397 = vadd.f32 0.0, %v396
    %v398 = vpop.f32.mrb[0].mxu0
    %399 = vmatprep.mubr.f32.mxu0 0.0
    %400 = vmatmul.mubr.f32.gmra.mrb[0].mxu0 %v318
    %v401 = vpop.f32.mrb[0].mxu0
    %v402 = vadd.f32 0.0, %v401
    %v403 = vpop.f32.mrb[0].mxu0
    %404 = vdwg.mxu0
    %v405 = vlaneseq
    %v406 = vshrl.u32 %v405, 7
    %v407 = vsub.s32 0, %v406
    %v408 = vrot.slane %v37, %v407
    %v409 = vmul.f32 %v387, %v408
    %v410 = vmul.f32 %v392, %v408
    %v411 = vmul.f32 %v397, %v408
    %v412 = vmul.f32 %v402, %v408
    %v413 = vlaneseq
    %v414 = vshrl.u32 %v413, 7
    %v415 = vsub.s32 0, %v414
    %v416 = vrot.slane %v38, %v415
    %v417 = vadd.f32 %v409, %v416
    %v418 = vadd.f32 %v410, %v416
    %v419 = vadd.f32 %v411, %v416
    %v420 = vadd.f32 %v412, %v416
    %v421 = vmax.f32 %v417, 0.0
    %v422 = vmax.f32 %v418, 0.0
    %v423 = vmax.f32 %v419, 0.0
    %v424 = vmax.f32 %v420, 0.0
    %v425 = vld [vmem:[#allocation2 + $0x28] sm:$0xf]
    %v426 = vld [vmem:[#allocation2 + $0x2c] sm:$0x1]
    %v427 = vsel %vm104, %v26, 0
    %v429 = vsel %vm104, %v27, 0
    %v431 = vsel %vm104, %v28, 0
    %v433 = vsel %vm104, %v29, 0
    %v436 = vsel %vm127, %v425, 0
    %438 = vmatprep.subr.mxu0 0.0
    %439 = vmatpush1.msra.mxu0 %v436
    %440 = vmatprep.subr.mxu0 0.0
    %441 = vmatpush1.msra.mxu0 0.0
    %442 = vmatprep.subr.mxu0 0.0
    %443 = vmatpush1.msra.mxu0 0.0
    %444 = vmatprep.subr.mxu0 0.0
    %445 = vmatpush1.msra.mxu0 0.0
    %446 = vmatprep.subr.mxu0 0.0
    %447 = vmatpush1.msra.mxu0 0.0
    %448 = vmatprep.subr.mxu0 0.0
    %449 = vmatpush1.msra.mxu0 0.0
    %450 = vmatprep.subr.mxu0 0.0
    %451 = vmatpush1.msra.mxu0 0.0
    %452 = vmatprep.subr.mxu0 0.0
    %453 = vmatpush1.msra.mxu0 0.0
    %454 = vmatprep.subr.mxu0 0.0
    %455 = vmatpush1.msra.mxu0 0.0
    %456 = vmatprep.subr.mxu0 0.0
    %457 = vmatpush1.msra.mxu0 0.0
    %458 = vmatprep.subr.mxu0 0.0
    %459 = vmatpush1.msra.mxu0 0.0
    %460 = vmatprep.subr.mxu0 0.0
    %461 = vmatpush1.msra.mxu0 0.0
    %462 = vmatprep.subr.mxu0 0.0
    %463 = vmatpush1.msra.mxu0 0.0
    %464 = vmatprep.subr.mxu0 0.0
    %465 = vmatpush1.msra.mxu0 0.0
    %466 = vmatprep.subr.mxu0 0.0
    %467 = vmatpush1.msra.mxu0 0.0
    %468 = vmatprep.subr.mxu0 0.0
    %469 = vmatpush1.msra.mxu0 0.0
    %470 = vmatprep.subr.mxu0 0.0
    %471 = vmatpush1.msra.mxu0 0.0
    %472 = vmatprep.subr.mxu0 0.0
    %473 = vmatpush1.msra.mxu0 0.0
    %474 = vmatprep.subr.mxu0 0.0
    %475 = vmatpush1.msra.mxu0 0.0
    %476 = vmatprep.subr.mxu0 0.0
    %477 = vmatpush1.msra.mxu0 0.0
    %478 = vmatprep.subr.mxu0 0.0
    %479 = vmatpush1.msra.mxu0 0.0
    %480 = vmatprep.subr.mxu0 0.0
    %481 = vmatpush1.msra.mxu0 0.0
    %482 = vmatprep.subr.mxu0 0.0
    %483 = vmatpush1.msra.mxu0 0.0
    %484 = vmatprep.subr.mxu0 0.0
    %485 = vmatpush1.msra.mxu0 0.0
    %486 = vmatprep.subr.mxu0 0.0
    %487 = vmatpush1.msra.mxu0 0.0
    %488 = vmatprep.subr.mxu0 0.0
    %489 = vmatpush1.msra.mxu0 0.0
    %490 = vmatprep.subr.mxu0 0.0
    %491 = vmatpush1.msra.mxu0 0.0
    %492 = vmatprep.subr.mxu0 0.0
    %493 = vmatpush1.msra.mxu0 0.0
    %494 = vmatprep.subr.mxu0 0.0
    %495 = vmatpush1.msra.mxu0 0.0
    %496 = vmatprep.subr.mxu0 0.0
    %497 = vmatpush1.msra.mxu0 0.0
    %498 = vmatprep.subr.mxu0 0.0
    %499 = vmatpush1.msra.mxu0 0.0
    %500 = vmatprep.subr.mxu0 0.0
    %501 = vmatpush1.msra.mxu0 0.0
    %502 = vmatprep.mubr.f32.mxu0 0.0
    %503 = vmatmul.mubr.f32.gmra.mrb[0].mxu0 %v427
    %v504 = vpop.f32.mrb[0].mxu0
    %v505 = vadd.f32 0.0, %v504
    %v506 = vpop.f32.mrb[0].mxu0
    %507 = vmatprep.mubr.f32.mxu0 0.0
    %508 = vmatmul.mubr.f32.gmra.mrb[0].mxu0 %v429
    %v509 = vpop.f32.mrb[0].mxu0
    %v510 = vadd.f32 0.0, %v509
    %v511 = vpop.f32.mrb[0].mxu0
    %512 = vmatprep.mubr.f32.mxu0 0.0
    %513 = vmatmul.mubr.f32.gmra.mrb[0].mxu0 %v431
    %v514 = vpop.f32.mrb[0].mxu0
    %v515 = vadd.f32 0.0, %v514
    %v516 = vpop.f32.mrb[0].mxu0
    %517 = vmatprep.mubr.f32.mxu0 0.0
    %518 = vmatmul.mubr.f32.gmra.mrb[0].mxu0 %v433
    %v519 = vpop.f32.mrb[0].mxu0
    %v520 = vadd.f32 0.0, %v519
    %v521 = vpop.f32.mrb[0].mxu0
    %522 = vdwg.mxu0
    %v523 = vlaneseq
    %v524 = vshrl.u32 %v523, 7
    %v525 = vsub.s32 0, %v524
    %v526 = vrot.slane %v426, %v525
    %v527 = vadd.f32 %v505, %v526
    %v528 = vadd.f32 %v510, %v526
    %v529 = vadd.f32 %v515, %v526
    %v530 = vadd.f32 %v520, %v526
    %v531 = vadd.f32 %v421, %v527
    %v532 = vadd.f32 %v422, %v528
    %v533 = vadd.f32 %v423, %v529
    %v534 = vadd.f32 %v424, %v530
    %v535 = vmax.f32 %v531, 0.0
    %v536 = vmax.f32 %v532, 0.0
    %v537 = vmax.f32 %v533, 0.0
    %v538 = vmax.f32 %v534, 0.0
    %v539 = vld [vmem:[#allocation2 + $0x2d] sm:$0xff]
    %v540 = vld [vmem:[#allocation2 + $0x35] sm:$0xff]
    %v541 = vld [vmem:[#allocation2 + $0x3d] sm:$0xff]
    %v542 = vld [vmem:[#allocation2 + $0x45] sm:$0x1]
    %v543 = vld [vmem:[#allocation2 + $0x46] sm:$0x1]
    %v544 = vld [vmem:[#allocation2 + $0x47] sm:$0xff]
    %v545 = vld [vmem:[#allocation2 + $0x4f] sm:$0xff]
    %v546 = vld [vmem:[#allocation2 + $0x57] sm:$0xff]
    %v547 = vld [vmem:[#allocation2 + $0x5f] sm:$0x1]
    %v548 = vld [vmem:[#allocation2 + $0x60] sm:$0x1]
    %v553 = vrot.slane %v535, 6
    %v554 = vrot.slane %v536, 6
    %v555 = vsel %vm43, %v553, %v554
    %v556 = vrot.slane %v537, 6
    %v557 = vrot.slane %v538, 6
    %v558 = vsel %vm43, %v556, %v557
    %v563 = vsel %vm43, 0.0, %v553
    %v564 = vsel %vm43, 0.0, %v556
    %v567 = vrot.slane %v563, 1
    %v568 = vrot.slane %v555, 1
    %v569 = vsel %vm58, %v567, %v568
    %v570 = vrot.slane %v554, 1
    %v571 = vsel %vm58, %v568, %v570
    %v572 = vrot.slane %v564, 1
    %v573 = vrot.slane %v558, 1
    %v574 = vsel %vm58, %v572, %v573
    %v575 = vrot.slane %v557, 1
    %v576 = vsel %vm58, %v573, %v575
    %577 = vrot.lane.b32.xlu0 %v569, 8
    %v578 = vpop.permute.xlu0 %577
    %579 = vrot.lane.b32.xlu0 %v571, 8
    %v580 = vpop.permute.xlu0 %579
    %581 = vrot.lane.b32.xlu0 %v574, 8
    %v582 = vpop.permute.xlu0 %581
    %583 = vrot.lane.b32.xlu0 %v576, 8
    %v584 = vpop.permute.xlu0 %583
    %v589 = vrot.slane %v563, 2
    %v590 = vrot.slane %v555, 2
    %v591 = vsel %vm81, %v589, %v590
    %v592 = vrot.slane %v554, 2
    %v593 = vsel %vm81, %v590, %v592
    %v594 = vrot.slane %v564, 2
    %v595 = vrot.slane %v558, 2
    %v596 = vsel %vm81, %v594, %v595
    %v597 = vrot.slane %v557, 2
    %v598 = vsel %vm81, %v595, %v597
    %599 = vrot.lane.b32.xlu0 %v591, 16
    %v600 = vpop.permute.xlu0 %599
    %601 = vrot.lane.b32.xlu0 %v593, 16
    %v602 = vpop.permute.xlu0 %601
    %603 = vrot.lane.b32.xlu0 %v596, 16
    %v604 = vpop.permute.xlu0 %603
    %605 = vrot.lane.b32.xlu0 %v598, 16
    %v606 = vpop.permute.xlu0 %605
    %v611 = vsel %vm109, %v563, %v578
    %v612 = vsel %vm109, %v555, %v580
    %v613 = vsel %vm109, %v564, %v582
    %v614 = vsel %vm109, %v558, %v584
    %v615 = vsel %vm302, %v611, %v600
    %v616 = vsel %vm302, %v612, %v602
    %v617 = vsel %vm302, %v613, %v604
    %v618 = vsel %vm302, %v614, %v606
    %v620 = vsel %vm307, %v615, 0
    %v623 = vsel %vm307, %v616, 0
    %v626 = vsel %vm307, %v617, 0
    %v629 = vsel %vm307, %v618, 0
    %631 = vmatprep.subr.mxu0 0.0
    %632 = vmatpush1.msra.mxu0 %v539
    %633 = vmatprep.subr.mxu0 0.0
    %634 = vmatpush1.msra.mxu0 %v540
    %635 = vmatprep.subr.mxu0 0.0
    %636 = vmatpush1.msra.mxu0 %v541
    %637 = vmatprep.subr.mxu0 0.0
    %638 = vmatpush1.msra.mxu0 0.0
    %639 = vmatprep.subr.mxu0 0.0
    %640 = vmatpush1.msra.mxu0 0.0
    %641 = vmatprep.subr.mxu0 0.0
    %642 = vmatpush1.msra.mxu0 0.0
    %643 = vmatprep.subr.mxu0 0.0
    %644 = vmatpush1.msra.mxu0 0.0
    %645 = vmatprep.subr.mxu0 0.0
    %646 = vmatpush1.msra.mxu0 0.0
    %647 = vmatprep.subr.mxu0 0.0
    %648 = vmatpush1.msra.mxu0 0.0
    %649 = vmatprep.subr.mxu0 0.0
    %650 = vmatpush1.msra.mxu0 0.0
    %651 = vmatprep.subr.mxu0 0.0
    %652 = vmatpush1.msra.mxu0 0.0
    %653 = vmatprep.subr.mxu0 0.0
    %654 = vmatpush1.msra.mxu0 0.0
    %655 = vmatprep.subr.mxu0 0.0
    %656 = vmatpush1.msra.mxu0 0.0
    %657 = vmatprep.subr.mxu0 0.0
    %658 = vmatpush1.msra.mxu0 0.0
    %659 = vmatprep.subr.mxu0 0.0
    %660 = vmatpush1.msra.mxu0 0.0
    %661 = vmatprep.subr.mxu0 0.0
    %662 = vmatpush1.msra.mxu0 0.0
    %663 = vmatprep.subr.mxu0 0.0
    %664 = vmatpush1.msra.mxu0 0.0
    %665 = vmatprep.subr.mxu0 0.0
    %666 = vmatpush1.msra.mxu0 0.0
    %667 = vmatprep.subr.mxu0 0.0
    %668 = vmatpush1.msra.mxu0 0.0
    %669 = vmatprep.subr.mxu0 0.0
    %670 = vmatpush1.msra.mxu0 0.0
    %671 = vmatprep.subr.mxu0 0.0
    %672 = vmatpush1.msra.mxu0 0.0
    %673 = vmatprep.subr.mxu0 0.0
    %674 = vmatpush1.msra.mxu0 0.0
    %675 = vmatprep.subr.mxu0 0.0
    %676 = vmatpush1.msra.mxu0 0.0
    %677 = vmatprep.subr.mxu0 0.0
    %678 = vmatpush1.msra.mxu0 0.0
    %679 = vmatprep.subr.mxu0 0.0
    %680 = vmatpush1.msra.mxu0 0.0
    %681 = vmatprep.subr.mxu0 0.0
    %682 = vmatpush1.msra.mxu0 0.0
    %683 = vmatprep.subr.mxu0 0.0
    %684 = vmatpush1.msra.mxu0 0.0
    %685 = vmatprep.subr.mxu0 0.0
    %686 = vmatpush1.msra.mxu0 0.0
    %687 = vmatprep.subr.mxu0 0.0
    %688 = vmatpush1.msra.mxu0 0.0
    %689 = vmatprep.subr.mxu0 0.0
    %690 = vmatpush1.msra.mxu0 0.0
    %691 = vmatprep.subr.mxu0 0.0
    %692 = vmatpush1.msra.mxu0 0.0
    %693 = vmatprep.subr.mxu0 0.0
    %694 = vmatpush1.msra.mxu0 0.0
    %695 = vmatprep.mubr.f32.mxu0 0.0
    %696 = vmatmul.mubr.f32.gmra.mrb[0].mxu0 %v620
    %v697 = vpop.f32.mrb[0].mxu0
    %v698 = vadd.f32 0.0, %v697
    %v699 = vpop.f32.mrb[0].mxu0
    %700 = vmatprep.mubr.f32.mxu0 0.0
    %701 = vmatmul.mubr.f32.gmra.mrb[0].mxu0 %v623
    %v702 = vpop.f32.mrb[0].mxu0
    %v703 = vadd.f32 0.0, %v702
    %v704 = vpop.f32.mrb[0].mxu0
    %705 = vmatprep.mubr.f32.mxu0 0.0
    %706 = vmatmul.mubr.f32.gmra.mrb[0].mxu0 %v626
    %v707 = vpop.f32.mrb[0].mxu0
    %v708 = vadd.f32 0.0, %v707
    %v709 = vpop.f32.mrb[0].mxu0
    %710 = vmatprep.mubr.f32.mxu0 0.0
    %711 = vmatmul.mubr.f32.gmra.mrb[0].mxu0 %v629
    %v712 = vpop.f32.mrb[0].mxu0
    %v713 = vadd.f32 0.0, %v712
    %v714 = vpop.f32.mrb[0].mxu0
    %715 = vdwg.mxu0
    %v716 = vlaneseq
    %v717 = vshrl.u32 %v716, 7
    %v718 = vsub.s32 0, %v717
    %v719 = vrot.slane %v542, %v718
    %v720 = vmul.f32 %v698, %v719
    %v721 = vmul.f32 %v703, %v719
    %v722 = vmul.f32 %v708, %v719
    %v723 = vmul.f32 %v713, %v719
    %v724 = vlaneseq
    %v725 = vshrl.u32 %v724, 7
    %v726 = vsub.s32 0, %v725
    %v727 = vrot.slane %v543, %v726
    %v728 = vadd.f32 %v720, %v727
    %v729 = vadd.f32 %v721, %v727
    %v730 = vadd.f32 %v722, %v727
    %v731 = vadd.f32 %v723, %v727
    %v732 = vmax.f32 %v728, 0.0
    %v733 = vmax.f32 %v729, 0.0
    %v734 = vmax.f32 %v730, 0.0
    %v735 = vmax.f32 %v731, 0.0
    %v740 = vrot.slane %v732, 6
    %v741 = vrot.slane %v733, 6
    %v742 = vsel %vm43, %v740, %v741
    %v743 = vrot.slane %v734, 6
    %v744 = vrot.slane %v735, 6
    %v745 = vsel %vm43, %v743, %v744
    %v750 = vsel %vm43, 0.0, %v740
    %v751 = vsel %vm43, 0.0, %v743
    %v754 = vrot.slane %v750, 1
    %v755 = vrot.slane %v742, 1
    %v756 = vsel %vm58, %v754, %v755
    %v757 = vrot.slane %v741, 1
    %v758 = vsel %vm58, %v755, %v757
    %v759 = vrot.slane %v751, 1
    %v760 = vrot.slane %v745, 1
    %v761 = vsel %vm58, %v759, %v760
    %v762 = vrot.slane %v744, 1
    %v763 = vsel %vm58, %v760, %v762
    %764 = vrot.lane.b32.xlu0 %v756, 8
    %v765 = vpop.permute.xlu0 %764
    %766 = vrot.lane.b32.xlu0 %v758, 8
    %v767 = vpop.permute.xlu0 %766
    %768 = vrot.lane.b32.xlu0 %v761, 8
    %v769 = vpop.permute.xlu0 %768
    %770 = vrot.lane.b32.xlu0 %v763, 8
    %v771 = vpop.permute.xlu0 %770
    %v776 = vrot.slane %v750, 2
    %v777 = vrot.slane %v742, 2
    %v778 = vsel %vm81, %v776, %v777
    %v779 = vrot.slane %v741, 2
    %v780 = vsel %vm81, %v777, %v779
    %v781 = vrot.slane %v751, 2
    %v782 = vrot.slane %v745, 2
    %v783 = vsel %vm81, %v781, %v782
    %v784 = vrot.slane %v744, 2
    %v785 = vsel %vm81, %v782, %v784
    %786 = vrot.lane.b32.xlu0 %v778, 16
    %v787 = vpop.permute.xlu0 %786
    %788 = vrot.lane.b32.xlu0 %v780, 16
    %v789 = vpop.permute.xlu0 %788
    %790 = vrot.lane.b32.xlu0 %v783, 16
    %v791 = vpop.permute.xlu0 %790
    %792 = vrot.lane.b32.xlu0 %v785, 16
    %v793 = vpop.permute.xlu0 %792
    %v798 = vsel %vm109, %v750, %v765
    %v799 = vsel %vm109, %v742, %v767
    %v800 = vsel %vm109, %v751, %v769
    %v801 = vsel %vm109, %v745, %v771
    %v802 = vsel %vm302, %v798, %v787
    %v803 = vsel %vm302, %v799, %v789
    %v804 = vsel %vm302, %v800, %v791
    %v805 = vsel %vm302, %v801, %v793
    %v807 = vsel %vm307, %v802, 0
    %v810 = vsel %vm307, %v803, 0
    %v813 = vsel %vm307, %v804, 0
    %v816 = vsel %vm307, %v805, 0
    %818 = vmatprep.subr.mxu0 0.0
    %819 = vmatpush1.msra.mxu0 %v544
    %820 = vmatprep.subr.mxu0 0.0
    %821 = vmatpush1.msra.mxu0 %v545
    %822 = vmatprep.subr.mxu0 0.0
    %823 = vmatpush1.msra.mxu0 %v546
    %824 = vmatprep.subr.mxu0 0.0
    %825 = vmatpush1.msra.mxu0 0.0
    %826 = vmatprep.subr.mxu0 0.0
    %827 = vmatpush1.msra.mxu0 0.0
    %828 = vmatprep.subr.mxu0 0.0
    %829 = vmatpush1.msra.mxu0 0.0
    %830 = vmatprep.subr.mxu0 0.0
    %831 = vmatpush1.msra.mxu0 0.0
    %832 = vmatprep.subr.mxu0 0.0
    %833 = vmatpush1.msra.mxu0 0.0
    %834 = vmatprep.subr.mxu0 0.0
    %835 = vmatpush1.msra.mxu0 0.0
    %836 = vmatprep.subr.mxu0 0.0
    %837 = vmatpush1.msra.mxu0 0.0
    %838 = vmatprep.subr.mxu0 0.0
    %839 = vmatpush1.msra.mxu0 0.0
    %840 = vmatprep.subr.mxu0 0.0
    %841 = vmatpush1.msra.mxu0 0.0
    %842 = vmatprep.subr.mxu0 0.0
    %843 = vmatpush1.msra.mxu0 0.0
    %844 = vmatprep.subr.mxu0 0.0
    %845 = vmatpush1.msra.mxu0 0.0
    %846 = vmatprep.subr.mxu0 0.0
    %847 = vmatpush1.msra.mxu0 0.0
    %848 = vmatprep.subr.mxu0 0.0
    %849 = vmatpush1.msra.mxu0 0.0
    %850 = vmatprep.subr.mxu0 0.0
    %851 = vmatpush1.msra.mxu0 0.0
    %852 = vmatprep.subr.mxu0 0.0
    %853 = vmatpush1.msra.mxu0 0.0
    %854 = vmatprep.subr.mxu0 0.0
    %855 = vmatpush1.msra.mxu0 0.0
    %856 = vmatprep.subr.mxu0 0.0
    %857 = vmatpush1.msra.mxu0 0.0
    %858 = vmatprep.subr.mxu0 0.0
    %859 = vmatpush1.msra.mxu0 0.0
    %860 = vmatprep.subr.mxu0 0.0
    %861 = vmatpush1.msra.mxu0 0.0
    %862 = vmatprep.subr.mxu0 0.0
    %863 = vmatpush1.msra.mxu0 0.0
    %864 = vmatprep.subr.mxu0 0.0
    %865 = vmatpush1.msra.mxu0 0.0
    %866 = vmatprep.subr.mxu0 0.0
    %867 = vmatpush1.msra.mxu0 0.0
    %868 = vmatprep.subr.mxu0 0.0
    %869 = vmatpush1.msra.mxu0 0.0
    %870 = vmatprep.subr.mxu0 0.0
    %871 = vmatpush1.msra.mxu0 0.0
    %872 = vmatprep.subr.mxu0 0.0
    %873 = vmatpush1.msra.mxu0 0.0
    %874 = vmatprep.subr.mxu0 0.0
    %875 = vmatpush1.msra.mxu0 0.0
    %876 = vmatprep.subr.mxu0 0.0
    %877 = vmatpush1.msra.mxu0 0.0
    %878 = vmatprep.subr.mxu0 0.0
    %879 = vmatpush1.msra.mxu0 0.0
    %880 = vmatprep.subr.mxu0 0.0
    %881 = vmatpush1.msra.mxu0 0.0
    %882 = vmatprep.mubr.f32.mxu0 0.0
    %883 = vmatmul.mubr.f32.gmra.mrb[0].mxu0 %v807
    %v884 = vpop.f32.mrb[0].mxu0
    %v885 = vadd.f32 0.0, %v884
    %v886 = vpop.f32.mrb[0].mxu0
    %887 = vmatprep.mubr.f32.mxu0 0.0
    %888 = vmatmul.mubr.f32.gmra.mrb[0].mxu0 %v810
    %v889 = vpop.f32.mrb[0].mxu0
    %v890 = vadd.f32 0.0, %v889
    %v891 = vpop.f32.mrb[0].mxu0
    %892 = vmatprep.mubr.f32.mxu0 0.0
    %893 = vmatmul.mubr.f32.gmra.mrb[0].mxu0 %v813
    %v894 = vpop.f32.mrb[0].mxu0
    %v895 = vadd.f32 0.0, %v894
    %v896 = vpop.f32.mrb[0].mxu0
    %897 = vmatprep.mubr.f32.mxu0 0.0
    %898 = vmatmul.mubr.f32.gmra.mrb[0].mxu0 %v816
    %v899 = vpop.f32.mrb[0].mxu0
    %v900 = vadd.f32 0.0, %v899
    %v901 = vpop.f32.mrb[0].mxu0
    %902 = vdwg.mxu0
    %v903 = vlaneseq
    %v904 = vshrl.u32 %v903, 7
    %v905 = vsub.s32 0, %v904
    %v906 = vrot.slane %v547, %v905
    %v907 = vmul.f32 %v885, %v906
    %v908 = vmul.f32 %v890, %v906
    %v909 = vmul.f32 %v895, %v906
    %v910 = vmul.f32 %v900, %v906
    %v911 = vlaneseq
    %v912 = vshrl.u32 %v911, 7
    %v913 = vsub.s32 0, %v912
    %v914 = vrot.slane %v548, %v913
    %v915 = vadd.f32 %v907, %v914
    %v916 = vadd.f32 %v908, %v914
    %v917 = vadd.f32 %v909, %v914
    %v918 = vadd.f32 %v910, %v914
    %v919 = vmax.f32 %v915, 0.0
    %v920 = vmax.f32 %v916, 0.0
    %v921 = vmax.f32 %v917, 0.0
    %v922 = vmax.f32 %v918, 0.0
    %v923 = vadd.f32 %v919, %v535
    %v924 = vadd.f32 %v920, %v536
    %v925 = vadd.f32 %v921, %v537
    %v926 = vadd.f32 %v922, %v538
    %v927 = vmax.f32 %v923, 0.0
    %v928 = vmax.f32 %v924, 0.0
    %v929 = vmax.f32 %v925, 0.0
    %v930 = vmax.f32 %v926, 0.0
    %v931 = vld [vmem:[#allocation2 + $0x61] sm:$0xff]
    %v932 = vld [vmem:[#allocation2 + $0x69] sm:$0xff]
    %v933 = vld [vmem:[#allocation2 + $0x71] sm:$0xff]
    %v934 = vld [vmem:[#allocation2 + $0x79] sm:$0x1]
    %v935 = vld [vmem:[#allocation2 + $0x7a] sm:$0x1]
    %v936 = vld [vmem:[#allocation2 + $0x7b] sm:$0xff]
    %v937 = vld [vmem:[#allocation2 + $0x83] sm:$0xff]
    %v938 = vld [vmem:[#allocation2 + $0x8b] sm:$0xff]
    %v939 = vld [vmem:[#allocation2 + $0x93] sm:$0xff]
    %v940 = vld [vmem:[#allocation2 + $0x9b] sm:$0xff]
    %v941 = vld [vmem:[#allocation2 + $0xa3] sm:$0xff]
    %v942 = vld [vmem:[#allocation2 + $0xab] sm:$0x1]
    %v943 = vld [vmem:[#allocation2 + $0xac] sm:$0x1]
    %v948 = vrot.slane %v927, 4
    %v949 = vrot.slane %v928, 4
    %v950 = vsel %vm127, %v948, %v949
    %v951 = vrot.slane %v929, 4
    %v952 = vrot.slane %v930, 4
    %v953 = vsel %vm127, %v951, %v952
    %v958 = vsel %vm127, 0.0, %v948
    %v959 = vsel %vm127, 0.0, %v951
    %v962 = vrot.slane %v958, 2
    %v963 = vrot.slane %v950, 2
    %v964 = vsel %vm81, %v962, %v963
    %v965 = vrot.slane %v949, 2
    %v966 = vsel %vm81, %v963, %v965
    %v967 = vrot.slane %v959, 2
    %v968 = vrot.slane %v953, 2
    %v969 = vsel %vm81, %v967, %v968
    %v970 = vrot.slane %v952, 2
    %v971 = vsel %vm81, %v968, %v970
    %972 = vrot.lane.b32.xlu0 %v964, 8
    %v973 = vpop.permute.xlu0 %972
    %974 = vrot.lane.b32.xlu0 %v966, 8
    %v975 = vpop.permute.xlu0 %974
    %976 = vrot.lane.b32.xlu0 %v969, 8
    %v977 = vpop.permute.xlu0 %976
    %978 = vrot.lane.b32.xlu0 %v971, 8
    %v979 = vpop.permute.xlu0 %978
    %v984 = vrot.slane %v958, 4
    %v985 = vrot.slane %v950, 4
    %v986 = vsel %vm127, %v984, %v985
    %v987 = vrot.slane %v949, 4
    %v988 = vsel %vm127, %v985, %v987
    %v989 = vrot.slane %v959, 4
    %v990 = vrot.slane %v953, 4
    %v991 = vsel %vm127, %v989, %v990
    %v992 = vrot.slane %v952, 4
    %v993 = vsel %vm127, %v990, %v992
    %994 = vrot.lane.b32.xlu0 %v986, 16
    %v995 = vpop.permute.xlu0 %994
    %996 = vrot.lane.b32.xlu0 %v988, 16
    %v997 = vpop.permute.xlu0 %996
    %998 = vrot.lane.b32.xlu0 %v991, 16
    %v999 = vpop.permute.xlu0 %998
    %1000 = vrot.lane.b32.xlu0 %v993, 16
    %v1001 = vpop.permute.xlu0 %1000
    %v1006 = vsel %vm109, %v958, %v973
    %v1007 = vsel %vm109, %v950, %v975
    %v1008 = vsel %vm109, %v959, %v977
    %v1009 = vsel %vm109, %v953, %v979
    %v1010 = vsel %vm302, %v1006, %v995
    %v1011 = vsel %vm302, %v1007, %v997
    %v1012 = vsel %vm302, %v1008, %v999
    %v1013 = vsel %vm302, %v1009, %v1001
    %v1015 = vsel %vm307, %v1010, 0
    %v1018 = vsel %vm307, %v1011, 0
    %v1021 = vsel %vm307, %v1012, 0
    %v1024 = vsel %vm307, %v1013, 0
    %1026 = vmatprep.subr.mxu0 0.0
    %1027 = vmatpush1.msra.mxu0 %v931
    %1028 = vmatprep.subr.mxu0 0.0
    %1029 = vmatpush1.msra.mxu0 %v932
    %1030 = vmatprep.subr.mxu0 0.0
    %1031 = vmatpush1.msra.mxu0 %v933
    %1032 = vmatprep.subr.mxu0 0.0
    %1033 = vmatpush1.msra.mxu0 0.0
    %1034 = vmatprep.subr.mxu0 0.0
    %1035 = vmatpush1.msra.mxu0 0.0
    %1036 = vmatprep.subr.mxu0 0.0
    %1037 = vmatpush1.msra.mxu0 0.0
    %1038 = vmatprep.subr.mxu0 0.0
    %1039 = vmatpush1.msra.mxu0 0.0
    %1040 = vmatprep.subr.mxu0 0.0
    %1041 = vmatpush1.msra.mxu0 0.0
    %1042 = vmatprep.subr.mxu0 0.0
    %1043 = vmatpush1.msra.mxu0 0.0
    %1044 = vmatprep.subr.mxu0 0.0
    %1045 = vmatpush1.msra.mxu0 0.0
    %1046 = vmatprep.subr.mxu0 0.0
    %1047 = vmatpush1.msra.mxu0 0.0
    %1048 = vmatprep.subr.mxu0 0.0
    %1049 = vmatpush1.msra.mxu0 0.0
    %1050 = vmatprep.subr.mxu0 0.0
    %1051 = vmatpush1.msra.mxu0 0.0
    %1052 = vmatprep.subr.mxu0 0.0
    %1053 = vmatpush1.msra.mxu0 0.0
    %1054 = vmatprep.subr.mxu0 0.0
    %1055 = vmatpush1.msra.mxu0 0.0
    %1056 = vmatprep.subr.mxu0 0.0
    %1057 = vmatpush1.msra.mxu0 0.0
    %1058 = vmatprep.subr.mxu0 0.0
    %1059 = vmatpush1.msra.mxu0 0.0
    %1060 = vmatprep.subr.mxu0 0.0
    %1061 = vmatpush1.msra.mxu0 0.0
    %1062 = vmatprep.subr.mxu0 0.0
    %1063 = vmatpush1.msra.mxu0 0.0
    %1064 = vmatprep.subr.mxu0 0.0
    %1065 = vmatpush1.msra.mxu0 0.0
    %1066 = vmatprep.subr.mxu0 0.0
    %1067 = vmatpush1.msra.mxu0 0.0
    %1068 = vmatprep.subr.mxu0 0.0
    %1069 = vmatpush1.msra.mxu0 0.0
    %1070 = vmatprep.subr.mxu0 0.0
    %1071 = vmatpush1.msra.mxu0 0.0
    %1072 = vmatprep.subr.mxu0 0.0
    %1073 = vmatpush1.msra.mxu0 0.0
    %1074 = vmatprep.subr.mxu0 0.0
    %1075 = vmatpush1.msra.mxu0 0.0
    %1076 = vmatprep.subr.mxu0 0.0
    %1077 = vmatpush1.msra.mxu0 0.0
    %1078 = vmatprep.subr.mxu0 0.0
    %1079 = vmatpush1.msra.mxu0 0.0
    %1080 = vmatprep.subr.mxu0 0.0
    %1081 = vmatpush1.msra.mxu0 0.0
    %1082 = vmatprep.subr.mxu0 0.0
    %1083 = vmatpush1.msra.mxu0 0.0
    %1084 = vmatprep.subr.mxu0 0.0
    %1085 = vmatpush1.msra.mxu0 0.0
    %1086 = vmatprep.subr.mxu0 0.0
    %1087 = vmatpush1.msra.mxu0 0.0
    %1088 = vmatprep.subr.mxu0 0.0
    %1089 = vmatpush1.msra.mxu0 0.0
    %1090 = vmatprep.mubr.f32.mxu0 0.0
    %1091 = vmatmul.mubr.f32.gmra.mrb[0].mxu0 %v1015
    %v1092 = vpop.f32.mrb[0].mxu0
    %v1093 = vadd.f32 0.0, %v1092
    %v1094 = vpop.f32.mrb[0].mxu0
    %1095 = vmatprep.mubr.f32.mxu0 0.0
    %1096 = vmatmul.mubr.f32.gmra.mrb[0].mxu0 %v1018
    %v1097 = vpop.f32.mrb[0].mxu0
    %v1098 = vadd.f32 0.0, %v1097
    %v1099 = vpop.f32.mrb[0].mxu0
    %1100 = vmatprep.mubr.f32.mxu0 0.0
    %1101 = vmatmul.mubr.f32.gmra.mrb[0].mxu0 %v1021
    %v1102 = vpop.f32.mrb[0].mxu0
    %v1103 = vadd.f32 0.0, %v1102
    %v1104 = vpop.f32.mrb[0].mxu0
    %1105 = vmatprep.mubr.f32.mxu0 0.0
    %1106 = vmatmul.mubr.f32.gmra.mrb[0].mxu0 %v1024
    %v1107 = vpop.f32.mrb[0].mxu0
    %v1108 = vadd.f32 0.0, %v1107
    %v1109 = vpop.f32.mrb[0].mxu0
    %1110 = vdwg.mxu0
    %v1111 = vlaneseq
    %v1112 = vshrl.u32 %v1111, 7
    %v1113 = vsub.s32 0, %v1112
    %v1114 = vrot.slane %v934, %v1113
    %v1115 = vmul.f32 %v1093, %v1114
    %v1116 = vmul.f32 %v1098, %v1114
    %v1117 = vmul.f32 %v1103, %v1114
    %v1118 = vmul.f32 %v1108, %v1114
    %v1119 = vlaneseq
    %v1120 = vshrl.u32 %v1119, 7
    %v1121 = vsub.s32 0, %v1120
    %v1122 = vrot.slane %v935, %v1121
    %v1123 = vadd.f32 %v1115, %v1122
    %v1124 = vadd.f32 %v1116, %v1122
    %v1125 = vadd.f32 %v1117, %v1122
    %v1126 = vadd.f32 %v1118, %v1122
    %v1127 = vmax.f32 %v1123, 0.0
    %v1128 = vmax.f32 %v1124, 0.0
    %v1129 = vmax.f32 %v1125, 0.0
    %v1130 = vmax.f32 %v1126, 0.0
    %v1135 = vrot.slane %v1127, 4
    %v1136 = vrot.slane %v1128, 4
    %v1137 = vsel %vm127, %v1135, %v1136
    %v1138 = vrot.slane %v1129, 4
    %v1139 = vrot.slane %v1130, 4
    %v1140 = vsel %vm127, %v1138, %v1139
    %v1145 = vsel %vm127, 0.0, %v1135
    %v1146 = vsel %vm127, 0.0, %v1138
    %v1149 = vrot.slane %v1145, 2
    %v1150 = vrot.slane %v1137, 2
    %v1151 = vsel %vm81, %v1149, %v1150
    %v1152 = vrot.slane %v1136, 2
    %v1153 = vsel %vm81, %v1150, %v1152
    %v1154 = vrot.slane %v1146, 2
    %v1155 = vrot.slane %v1140, 2
    %v1156 = vsel %vm81, %v1154, %v1155
    %v1157 = vrot.slane %v1139, 2
    %v1158 = vsel %vm81, %v1155, %v1157
    %1159 = vrot.lane.b32.xlu0 %v1151, 16
    %v1160 = vpop.permute.xlu0 %1159
    %1161 = vrot.lane.b32.xlu0 %v1153, 16
    %v1162 = vpop.permute.xlu0 %1161
    %1163 = vrot.lane.b32.xlu0 %v1156, 16
    %v1164 = vpop.permute.xlu0 %1163
    %1165 = vrot.lane.b32.xlu0 %v1158, 16
    %v1166 = vpop.permute.xlu0 %1165
    %v1171 = vrot.slane %v1145, 4
    %v1172 = vrot.slane %v1137, 4
    %v1173 = vsel %vm127, %v1171, %v1172
    %v1174 = vrot.slane %v1136, 4
    %v1175 = vsel %vm127, %v1172, %v1174
    %v1176 = vrot.slane %v1146, 4
    %v1177 = vrot.slane %v1140, 4
    %v1178 = vsel %vm127, %v1176, %v1177
    %v1179 = vrot.slane %v1139, 4
    %v1180 = vsel %vm127, %v1177, %v1179
    %1181 = vrot.lane.b32.xlu0 %v1173, 32
    %v1182 = vpop.permute.xlu0 %1181
    %1183 = vrot.lane.b32.xlu0 %v1175, 32
    %v1184 = vpop.permute.xlu0 %1183
    %1185 = vrot.lane.b32.xlu0 %v1178, 32
    %v1186 = vpop.permute.xlu0 %1185
    %1187 = vrot.lane.b32.xlu0 %v1180, 32
    %v1188 = vpop.permute.xlu0 %1187
    %v1193 = vsel %vm302, %v1145, %v1160
    %v1194 = vsel %vm302, %v1137, %v1162
    %v1195 = vsel %vm302, %v1146, %v1164
    %v1196 = vsel %vm302, %v1140, %v1166
    %vm1197 = vcmask 261120
    %v1198 = vsel %vm1197, %v1193, %v1182
    %v1199 = vsel %vm1197, %v1194, %v1184
    %v1200 = vsel %vm1197, %v1195, %v1186
    %v1201 = vsel %vm1197, %v1196, %v1188
    %vm1202 = vcmask 392192
    %v1204 = vsel %vm1202, %v1198, 0
    %v1207 = vsel %vm1202, %v1199, 0
    %v1210 = vsel %vm1202, %v1200, 0
    %v1213 = vsel %vm1202, %v1201, 0
    %1215 = vmatprep.subr.mxu0 0.0
    %1216 = vmatpush1.msra.mxu0 %v936
    %1217 = vmatprep.subr.mxu0 0.0
    %1218 = vmatpush1.msra.mxu0 %v937
    %1219 = vmatprep.subr.mxu0 0.0
    %1220 = vmatpush1.msra.mxu0 %v938
    %1221 = vmatprep.subr.mxu0 0.0
    %1222 = vmatpush1.msra.mxu0 %v939
    %1223 = vmatprep.subr.mxu0 0.0
    %1224 = vmatpush1.msra.mxu0 %v940
    %1225 = vmatprep.subr.mxu0 0.0
    %1226 = vmatpush1.msra.mxu0 %v941
    %1227 = vmatprep.subr.mxu0 0.0
    %1228 = vmatpush1.msra.mxu0 0.0
    %1229 = vmatprep.subr.mxu0 0.0
    %1230 = vmatpush1.msra.mxu0 0.0
    %1231 = vmatprep.subr.mxu0 0.0
    %1232 = vmatpush1.msra.mxu0 0.0
    %1233 = vmatprep.subr.mxu0 0.0
    %1234 = vmatpush1.msra.mxu0 0.0
    %1235 = vmatprep.subr.mxu0 0.0
    %1236 = vmatpush1.msra.mxu0 0.0
    %1237 = vmatprep.subr.mxu0 0.0
    %1238 = vmatpush1.msra.mxu0 0.0
    %1239 = vmatprep.subr.mxu0 0.0
    %1240 = vmatpush1.msra.mxu0 0.0
    %1241 = vmatprep.subr.mxu0 0.0
    %1242 = vmatpush1.msra.mxu0 0.0
    %1243 = vmatprep.subr.mxu0 0.0
    %1244 = vmatpush1.msra.mxu0 0.0
    %1245 = vmatprep.subr.mxu0 0.0
    %1246 = vmatpush1.msra.mxu0 0.0
    %1247 = vmatprep.subr.mxu0 0.0
    %1248 = vmatpush1.msra.mxu0 0.0
    %1249 = vmatprep.subr.mxu0 0.0
    %1250 = vmatpush1.msra.mxu0 0.0
    %1251 = vmatprep.subr.mxu0 0.0
    %1252 = vmatpush1.msra.mxu0 0.0
    %1253 = vmatprep.subr.mxu0 0.0
    %1254 = vmatpush1.msra.mxu0 0.0
    %1255 = vmatprep.subr.mxu0 0.0
    %1256 = vmatpush1.msra.mxu0 0.0
    %1257 = vmatprep.subr.mxu0 0.0
    %1258 = vmatpush1.msra.mxu0 0.0
    %1259 = vmatprep.subr.mxu0 0.0
    %1260 = vmatpush1.msra.mxu0 0.0
    %1261 = vmatprep.subr.mxu0 0.0
    %1262 = vmatpush1.msra.mxu0 0.0
    %1263 = vmatprep.subr.mxu0 0.0
    %1264 = vmatpush1.msra.mxu0 0.0
    %1265 = vmatprep.subr.mxu0 0.0
    %1266 = vmatpush1.msra.mxu0 0.0
    %1267 = vmatprep.subr.mxu0 0.0
    %1268 = vmatpush1.msra.mxu0 0.0
    %1269 = vmatprep.subr.mxu0 0.0
    %1270 = vmatpush1.msra.mxu0 0.0
    %1271 = vmatprep.subr.mxu0 0.0
    %1272 = vmatpush1.msra.mxu0 0.0
    %1273 = vmatprep.subr.mxu0 0.0
    %1274 = vmatpush1.msra.mxu0 0.0
    %1275 = vmatprep.subr.mxu0 0.0
    %1276 = vmatpush1.msra.mxu0 0.0
    %1277 = vmatprep.subr.mxu0 0.0
    %1278 = vmatpush1.msra.mxu0 0.0
    %1279 = vmatprep.mubr.f32.mxu0 0.0
    %1280 = vmatmul.mubr.f32.gmra.mrb[0].mxu0 %v1204
    %v1281 = vpop.f32.mrb[0].mxu0
    %v1282 = vadd.f32 0.0, %v1281
    %v1283 = vpop.f32.mrb[0].mxu0
    %1284 = vmatprep.mubr.f32.mxu0 0.0
    %1285 = vmatmul.mubr.f32.gmra.mrb[0].mxu0 %v1207
    %v1286 = vpop.f32.mrb[0].mxu0
    %v1287 = vadd.f32 0.0, %v1286
    %v1288 = vpop.f32.mrb[0].mxu0
    %1289 = vmatprep.mubr.f32.mxu0 0.0
    %1290 = vmatmul.mubr.f32.gmra.mrb[0].mxu0 %v1210
    %v1291 = vpop.f32.mrb[0].mxu0
    %v1292 = vadd.f32 0.0, %v1291
    %v1293 = vpop.f32.mrb[0].mxu0
    %1294 = vmatprep.mubr.f32.mxu0 0.0
    %1295 = vmatmul.mubr.f32.gmra.mrb[0].mxu0 %v1213
    %v1296 = vpop.f32.mrb[0].mxu0
    %v1297 = vadd.f32 0.0, %v1296
    %v1298 = vpop.f32.mrb[0].mxu0
    %1299 = vdwg.mxu0
    %v1300 = vlaneseq
    %v1301 = vshrl.u32 %v1300, 7
    %v1302 = vsub.s32 0, %v1301
    %v1303 = vrot.slane %v942, %v1302
    %v1304 = vmul.f32 %v1282, %v1303
    %v1305 = vmul.f32 %v1287, %v1303
    %v1306 = vmul.f32 %v1292, %v1303
    %v1307 = vmul.f32 %v1297, %v1303
    %v1308 = vlaneseq
    %v1309 = vshrl.u32 %v1308, 7
    %v1310 = vsub.s32 0, %v1309
    %v1311 = vrot.slane %v943, %v1310
    %v1312 = vadd.f32 %v1304, %v1311
    %v1313 = vadd.f32 %v1305, %v1311
    %v1314 = vadd.f32 %v1306, %v1311
    %v1315 = vadd.f32 %v1307, %v1311
    %v1316 = vmax.f32 %v1312, 0.0
    %v1317 = vmax.f32 %v1313, 0.0
    %v1318 = vmax.f32 %v1314, 0.0
    %v1319 = vmax.f32 %v1315, 0.0
    %v1320 = vld [vmem:[#allocation2 + $0xad] sm:$0xff]
    %v1321 = vld [vmem:[#allocation2 + $0xb5] sm:$0x1]
    %v1322 = vsel %vm109, %v927, 0
    %v1324 = vsel %vm109, %v928, 0
    %v1326 = vsel %vm109, %v929, 0
    %v1328 = vsel %vm109, %v930, 0
    %1330 = vmatprep.subr.mxu0 0.0
    %1331 = vmatpush1.msra.mxu0 %v1320
    %1332 = vmatprep.subr.mxu0 0.0
    %1333 = vmatpush1.msra.mxu0 0.0
    %1334 = vmatprep.subr.mxu0 0.0
    %1335 = vmatpush1.msra.mxu0 0.0
    %1336 = vmatprep.subr.mxu0 0.0
    %1337 = vmatpush1.msra.mxu0 0.0
    %1338 = vmatprep.subr.mxu0 0.0
    %1339 = vmatpush1.msra.mxu0 0.0
    %1340 = vmatprep.subr.mxu0 0.0
    %1341 = vmatpush1.msra.mxu0 0.0
    %1342 = vmatprep.subr.mxu0 0.0
    %1343 = vmatpush1.msra.mxu0 0.0
    %1344 = vmatprep.subr.mxu0 0.0
    %1345 = vmatpush1.msra.mxu0 0.0
    %1346 = vmatprep.subr.mxu0 0.0
    %1347 = vmatpush1.msra.mxu0 0.0
    %1348 = vmatprep.subr.mxu0 0.0
    %1349 = vmatpush1.msra.mxu0 0.0
    %1350 = vmatprep.subr.mxu0 0.0
    %1351 = vmatpush1.msra.mxu0 0.0
    %1352 = vmatprep.subr.mxu0 0.0
    %1353 = vmatpush1.msra.mxu0 0.0
    %1354 = vmatprep.subr.mxu0 0.0
    %1355 = vmatpush1.msra.mxu0 0.0
    %1356 = vmatprep.subr.mxu0 0.0
    %1357 = vmatpush1.msra.mxu0 0.0
    %1358 = vmatprep.subr.mxu0 0.0
    %1359 = vmatpush1.msra.mxu0 0.0
    %1360 = vmatprep.subr.mxu0 0.0
    %1361 = vmatpush1.msra.mxu0 0.0
    %1362 = vmatprep.subr.mxu0 0.0
    %1363 = vmatpush1.msra.mxu0 0.0
    %1364 = vmatprep.subr.mxu0 0.0
    %1365 = vmatpush1.msra.mxu0 0.0
    %1366 = vmatprep.subr.mxu0 0.0
    %1367 = vmatpush1.msra.mxu0 0.0
    %1368 = vmatprep.subr.mxu0 0.0
    %1369 = vmatpush1.msra.mxu0 0.0
    %1370 = vmatprep.subr.mxu0 0.0
    %1371 = vmatpush1.msra.mxu0 0.0
    %1372 = vmatprep.subr.mxu0 0.0
    %1373 = vmatpush1.msra.mxu0 0.0
    %1374 = vmatprep.subr.mxu0 0.0
    %1375 = vmatpush1.msra.mxu0 0.0
    %1376 = vmatprep.subr.mxu0 0.0
    %1377 = vmatpush1.msra.mxu0 0.0
    %1378 = vmatprep.subr.mxu0 0.0
    %1379 = vmatpush1.msra.mxu0 0.0
    %1380 = vmatprep.subr.mxu0 0.0
    %1381 = vmatpush1.msra.mxu0 0.0
    %1382 = vmatprep.subr.mxu0 0.0
    %1383 = vmatpush1.msra.mxu0 0.0
    %1384 = vmatprep.subr.mxu0 0.0
    %1385 = vmatpush1.msra.mxu0 0.0
    %1386 = vmatprep.subr.mxu0 0.0
    %1387 = vmatpush1.msra.mxu0 0.0
    %1388 = vmatprep.subr.mxu0 0.0
    %1389 = vmatpush1.msra.mxu0 0.0
    %1390 = vmatprep.subr.mxu0 0.0
    %1391 = vmatpush1.msra.mxu0 0.0
    %1392 = vmatprep.subr.mxu0 0.0
    %1393 = vmatpush1.msra.mxu0 0.0
    %1394 = vmatprep.mubr.f32.mxu0 0.0
    %1395 = vmatmul.mubr.f32.gmra.mrb[0].mxu0 %v1322
    %v1396 = vpop.f32.mrb[0].mxu0
    %v1397 = vadd.f32 0.0, %v1396
    %v1398 = vpop.f32.mrb[0].mxu0
    %1399 = vmatprep.mubr.f32.mxu0 0.0
    %1400 = vmatmul.mubr.f32.gmra.mrb[0].mxu0 %v1324
    %v1401 = vpop.f32.mrb[0].mxu0
    %v1402 = vadd.f32 0.0, %v1401
    %v1403 = vpop.f32.mrb[0].mxu0
    %1404 = vmatprep.mubr.f32.mxu0 0.0
    %1405 = vmatmul.mubr.f32.gmra.mrb[0].mxu0 %v1326
    %v1406 = vpop.f32.mrb[0].mxu0
    %v1407 = vadd.f32 0.0, %v1406
    %v1408 = vpop.f32.mrb[0].mxu0
    %1409 = vmatprep.mubr.f32.mxu0 0.0
    %1410 = vmatmul.mubr.f32.gmra.mrb[0].mxu0 %v1328
    %v1411 = vpop.f32.mrb[0].mxu0
    %v1412 = vadd.f32 0.0, %v1411
    %v1413 = vpop.f32.mrb[0].mxu0
    %1414 = vdwg.mxu0
    %v1415 = vlaneseq
    %v1416 = vshrl.u32 %v1415, 7
    %v1417 = vsub.s32 0, %v1416
    %v1418 = vrot.slane %v1321, %v1417
    %v1419 = vadd.f32 %v1397, %v1418
    %v1420 = vadd.f32 %v1402, %v1418
    %v1421 = vadd.f32 %v1407, %v1418
    %v1422 = vadd.f32 %v1412, %v1418
    %v1423 = vadd.f32 %v1316, %v1419
    %v1424 = vadd.f32 %v1317, %v1420
    %v1425 = vadd.f32 %v1318, %v1421
    %v1426 = vadd.f32 %v1319, %v1422
    %v1427 = vmax.f32 %v1423, 0.0
    %v1428 = vmax.f32 %v1424, 0.0
    %v1429 = vmax.f32 %v1425, 0.0
    %v1430 = vmax.f32 %v1426, 0.0
    %v1431 = vld [vmem:[#allocation2 + $0xb6] sm:$0xff]
    %v1432 = vld [vmem:[#allocation2 + $0xbe] sm:$0xff]
    %v1433 = vld [vmem:[#allocation2 + $0xc6] sm:$0xff]
    %v1434 = vld [vmem:[#allocation2 + $0xce] sm:$0xff]
    %v1435 = vld [vmem:[#allocation2 + $0xd6] sm:$0xff]
    %v1436 = vld [vmem:[#allocation2 + $0xde] sm:$0xff]
    %v1437 = vld [vmem:[#allocation2 + $0xe6] sm:$0x1]
    %v1438 = vld [vmem:[#allocation2 + $0xe7] sm:$0xff]
    %v1439 = vld [vmem:[#allocation2 + $0xef] sm:$0xff]
    %v1440 = vld [vmem:[#allocation2 + $0xf7] sm:$0xff]
    %v1441 = vld [vmem:[#allocation2 + $0xff] sm:$0xff]
    %v1442 = vld [vmem:[#allocation2 + $0x107] sm:$0x1]
    %v1444 = vsel %vm302, %v1427, 0
    %v1447 = vsel %vm302, %v1428, 0
    %v1450 = vsel %vm302, %v1429, 0
    %v1453 = vsel %vm302, %v1430, 0
    %1455 = vmatprep.subr.mxu0 0.0
    %1456 = vmatpush1.msra.mxu0 %v1431
    %1457 = vmatprep.subr.mxu0 0.0
    %1458 = vmatpush1.msra.mxu0 %v1432
    %1459 = vmatprep.subr.mxu0 0.0
    %1460 = vmatpush1.msra.mxu0 0.0
    %1461 = vmatprep.subr.mxu0 0.0
    %1462 = vmatpush1.msra.mxu0 0.0
    %1463 = vmatprep.subr.mxu0 0.0
    %1464 = vmatpush1.msra.mxu0 0.0
    %1465 = vmatprep.subr.mxu0 0.0
    %1466 = vmatpush1.msra.mxu0 0.0
    %1467 = vmatprep.subr.mxu0 0.0
    %1468 = vmatpush1.msra.mxu0 0.0
    %1469 = vmatprep.subr.mxu0 0.0
    %1470 = vmatpush1.msra.mxu0 0.0
    %1471 = vmatprep.subr.mxu0 0.0
    %1472 = vmatpush1.msra.mxu0 0.0
    %1473 = vmatprep.subr.mxu0 0.0
    %1474 = vmatpush1.msra.mxu0 0.0
    %1475 = vmatprep.subr.mxu0 0.0
    %1476 = vmatpush1.msra.mxu0 0.0
    %1477 = vmatprep.subr.mxu0 0.0
    %1478 = vmatpush1.msra.mxu0 0.0
    %1479 = vmatprep.subr.mxu0 0.0
    %1480 = vmatpush1.msra.mxu0 0.0
    %1481 = vmatprep.subr.mxu0 0.0
    %1482 = vmatpush1.msra.mxu0 0.0
    %1483 = vmatprep.subr.mxu0 0.0
    %1484 = vmatpush1.msra.mxu0 0.0
    %1485 = vmatprep.subr.mxu0 0.0
    %1486 = vmatpush1.msra.mxu0 0.0
    %1487 = vmatprep.subr.mxu0 0.0
    %1488 = vmatpush1.msra.mxu0 0.0
    %1489 = vmatprep.subr.mxu0 0.0
    %1490 = vmatpush1.msra.mxu0 0.0
    %1491 = vmatprep.subr.mxu0 0.0
    %1492 = vmatpush1.msra.mxu0 0.0
    %1493 = vmatprep.subr.mxu0 0.0
    %1494 = vmatpush1.msra.mxu0 0.0
    %1495 = vmatprep.subr.mxu0 0.0
    %1496 = vmatpush1.msra.mxu0 0.0
    %1497 = vmatprep.subr.mxu0 0.0
    %1498 = vmatpush1.msra.mxu0 0.0
    %1499 = vmatprep.subr.mxu0 0.0
    %1500 = vmatpush1.msra.mxu0 0.0
    %1501 = vmatprep.subr.mxu0 0.0
    %1502 = vmatpush1.msra.mxu0 0.0
    %1503 = vmatprep.subr.mxu0 0.0
    %1504 = vmatpush1.msra.mxu0 0.0
    %1505 = vmatprep.subr.mxu0 0.0
    %1506 = vmatpush1.msra.mxu0 0.0
    %1507 = vmatprep.subr.mxu0 0.0
    %1508 = vmatpush1.msra.mxu0 0.0
    %1509 = vmatprep.subr.mxu0 0.0
    %1510 = vmatpush1.msra.mxu0 0.0
    %1511 = vmatprep.subr.mxu0 0.0
    %1512 = vmatpush1.msra.mxu0 0.0
    %1513 = vmatprep.subr.mxu0 0.0
    %1514 = vmatpush1.msra.mxu0 0.0
    %1515 = vmatprep.subr.mxu0 0.0
    %1516 = vmatpush1.msra.mxu0 0.0
    %1517 = vmatprep.subr.mxu0 0.0
    %1518 = vmatpush1.msra.mxu0 0.0
    %1519 = vmatprep.mubr.f32.mxu0 0.0
    %1520 = vmatmul.mubr.f32.gmra.mrb[0].mxu0 %v1444
    %v1521 = vpop.f32.mrb[0].mxu0
    %v1522 = vadd.f32 0.0, %v1521
    %v1523 = vpop.f32.mrb[0].mxu0
    %1524 = vmatprep.mubr.f32.mxu0 0.0
    %1525 = vmatmul.mubr.f32.gmra.mrb[0].mxu0 %v1447
    %v1526 = vpop.f32.mrb[0].mxu0
    %v1527 = vadd.f32 0.0, %v1526
    %v1528 = vpop.f32.mrb[0].mxu0
    %1529 = vmatprep.mubr.f32.mxu0 0.0
    %1530 = vmatmul.mubr.f32.gmra.mrb[0].mxu0 %v1450
    %v1531 = vpop.f32.mrb[0].mxu0
    %v1532 = vadd.f32 0.0, %v1531
    %v1533 = vpop.f32.mrb[0].mxu0
    %1534 = vmatprep.mubr.f32.mxu0 0.0
    %1535 = vmatmul.mubr.f32.gmra.mrb[0].mxu0 %v1453
    %v1536 = vpop.f32.mrb[0].mxu0
    %v1537 = vadd.f32 0.0, %v1536
    %v1538 = vpop.f32.mrb[0].mxu0
    %1539 = vdwg.mxu0
    %v1540 = vlaneseq
    %v1541 = vshrl.u32 %v1540, 7
    %v1542 = vsub.s32 0, %v1541
    %v1543 = vrot.slane %v1437, %v1542
    %v1544 = vadd.f32 %v1522, %v1543
    %v1545 = vadd.f32 %v1527, %v1543
    %v1546 = vadd.f32 %v1532, %v1543
    %v1547 = vadd.f32 %v1537, %v1543
    %v1549 = vsel %vm1197, 0.0, 0
    %1551 = vmatprep.subr.mxu0 0.0
    %1552 = vmatpush1.msra.mxu0 %v1433
    %1553 = vmatprep.subr.mxu0 0.0
    %1554 = vmatpush1.msra.mxu0 %v1434
    %1555 = vmatprep.subr.mxu0 0.0
    %1556 = vmatpush1.msra.mxu0 %v1435
    %1557 = vmatprep.subr.mxu0 0.0
    %1558 = vmatpush1.msra.mxu0 %v1436
    %1559 = vmatprep.subr.mxu0 0.0
    %1560 = vmatpush1.msra.mxu0 0.0
    %1561 = vmatprep.subr.mxu0 0.0
    %1562 = vmatpush1.msra.mxu0 0.0
    %1563 = vmatprep.subr.mxu0 0.0
    %1564 = vmatpush1.msra.mxu0 0.0
    %1565 = vmatprep.subr.mxu0 0.0
    %1566 = vmatpush1.msra.mxu0 0.0
    %1567 = vmatprep.subr.mxu0 0.0
    %1568 = vmatpush1.msra.mxu0 0.0
    %1569 = vmatprep.subr.mxu0 0.0
    %1570 = vmatpush1.msra.mxu0 0.0
    %1571 = vmatprep.subr.mxu0 0.0
    %1572 = vmatpush1.msra.mxu0 0.0
    %1573 = vmatprep.subr.mxu0 0.0
    %1574 = vmatpush1.msra.mxu0 0.0
    %1575 = vmatprep.subr.mxu0 0.0
    %1576 = vmatpush1.msra.mxu0 0.0
    %1577 = vmatprep.subr.mxu0 0.0
    %1578 = vmatpush1.msra.mxu0 0.0
    %1579 = vmatprep.subr.mxu0 0.0
    %1580 = vmatpush1.msra.mxu0 0.0
    %1581 = vmatprep.subr.mxu0 0.0
    %1582 = vmatpush1.msra.mxu0 0.0
    %1583 = vmatprep.subr.mxu0 0.0
    %1584 = vmatpush1.msra.mxu0 0.0
    %1585 = vmatprep.subr.mxu0 0.0
    %1586 = vmatpush1.msra.mxu0 0.0
    %1587 = vmatprep.subr.mxu0 0.0
    %1588 = vmatpush1.msra.mxu0 0.0
    %1589 = vmatprep.subr.mxu0 0.0
    %1590 = vmatpush1.msra.mxu0 0.0
    %1591 = vmatprep.subr.mxu0 0.0
    %1592 = vmatpush1.msra.mxu0 0.0
    %1593 = vmatprep.subr.mxu0 0.0
    %1594 = vmatpush1.msra.mxu0 0.0
    %1595 = vmatprep.subr.mxu0 0.0
    %1596 = vmatpush1.msra.mxu0 0.0
    %1597 = vmatprep.subr.mxu0 0.0
    %1598 = vmatpush1.msra.mxu0 0.0
    %1599 = vmatprep.subr.mxu0 0.0
    %1600 = vmatpush1.msra.mxu0 0.0
    %1601 = vmatprep.subr.mxu0 0.0
    %1602 = vmatpush1.msra.mxu0 0.0
    %1603 = vmatprep.subr.mxu0 0.0
    %1604 = vmatpush1.msra.mxu0 0.0
    %1605 = vmatprep.subr.mxu0 0.0
    %1606 = vmatpush1.msra.mxu0 0.0
    %1607 = vmatprep.subr.mxu0 0.0
    %1608 = vmatpush1.msra.mxu0 0.0
    %1609 = vmatprep.subr.mxu0 0.0
    %1610 = vmatpush1.msra.mxu0 0.0
    %1611 = vmatprep.subr.mxu0 0.0
    %1612 = vmatpush1.msra.mxu0 0.0
    %1613 = vmatprep.subr.mxu0 0.0
    %1614 = vmatpush1.msra.mxu0 0.0
    %1615 = vmatprep.mubr.f32.mxu0 0.0
    %1616 = vmatmul.mubr.f32.gmra.mrb[0].mxu0 %v1549
    %v1617 = vpop.f32.mrb[0].mxu0
    %v1618 = vadd.f32 0.0, %v1617
    %v1619 = vpop.f32.mrb[0].mxu0
    %1620 = vdwg.mxu0
    %v1622 = vrot.slane %v1618, 1
    %v1625 = vadd.f32 %v1544, %v1618
    %v1626 = vadd.f32 %v1546, %v1622
    %v1627 = vxor.u32 %v1625, 2147483648
    %v1628 = vxor.u32 %v1626, 2147483648
    %v1629 = vmul.f32 %v1627, 1.442695
    %v1630 = vpow.pop %v1629
    %v1631 = vmul.f32 %v1628, 1.442695
    %v1632 = vpow.pop %v1631
    %v1633 = vadd.f32 %v1630, 1.0
    %v1634 = vadd.f32 %v1632, 1.0
    %v1635 = vrcp.pop %v1633
    %v1636 = vmul.f32 1.0, %v1635
    %v1637 = vrcp.pop %v1634
    %v1638 = vmul.f32 1.0, %v1637
    %v1639 = vtanh.pop %v1625
    %v1640 = vtanh.pop %v1626
    %v1641 = vmul.f32 %v1636, 0.0
    %v1642 = vmul.f32 %v1638, 0.0
    %1645 = vrot.lane.b32.xlu0 %v1639, 64
    %v1646 = vpop.permute.xlu0 %1645
    %1647 = vrot.lane.b32.xlu0 %v1640, 64
    %v1648 = vpop.permute.xlu0 %1647
    %v1651 = vmul.f32 %v1636, %v1646
    %v1652 = vmul.f32 %v1638, %v1648
    %1655 = vrot.lane.b32.xlu0 %v1651, 32
    %v1656 = vpop.permute.xlu0 %1655
    %1657 = vrot.lane.b32.xlu0 %v1652, 32
    %v1658 = vpop.permute.xlu0 %1657
    %v1661 = vadd.f32 %v1641, %v1656
    %v1662 = vadd.f32 %v1642, %v1658
    %v1663 = vtanh.pop %v1661
    %v1664 = vtanh.pop %v1662
    %1667 = vrot.lane.b32.xlu0 %v1663, 64
    %v1668 = vpop.permute.xlu0 %1667
    %1669 = vrot.lane.b32.xlu0 %v1664, 64
    %v1670 = vpop.permute.xlu0 %1669
    %v1673 = vmul.f32 %v1636, %v1668
    %v1674 = vmul.f32 %v1638, %v1670
    %v1677 = vrot.slane %v1674, 7
    %vm1678 = vcmask 1041409
    %v1679 = vsel %vm1678, %v1677, %v1673
    %1680 = vrot.lane.b32.xlu0 %v1679, 32
    %v1681 = vpop.permute.xlu0 %1680
    %v1682 = vsel %vm1197, %v1681, 0
    %1684 = vmatprep.subr.mxu0 0.0
    %1685 = vmatpush1.msra.mxu0 %v1433
    %1686 = vmatprep.subr.mxu0 0.0
    %1687 = vmatpush1.msra.mxu0 %v1434
    %1688 = vmatprep.subr.mxu0 0.0
    %1689 = vmatpush1.msra.mxu0 %v1435
    %1690 = vmatprep.subr.mxu0 0.0
    %1691 = vmatpush1.msra.mxu0 %v1436
    %1692 = vmatprep.subr.mxu0 0.0
    %1693 = vmatpush1.msra.mxu0 0.0
    %1694 = vmatprep.subr.mxu0 0.0
    %1695 = vmatpush1.msra.mxu0 0.0
    %1696 = vmatprep.subr.mxu0 0.0
    %1697 = vmatpush1.msra.mxu0 0.0
    %1698 = vmatprep.subr.mxu0 0.0
    %1699 = vmatpush1.msra.mxu0 0.0
    %1700 = vmatprep.subr.mxu0 0.0
    %1701 = vmatpush1.msra.mxu0 0.0
    %1702 = vmatprep.subr.mxu0 0.0
    %1703 = vmatpush1.msra.mxu0 0.0
    %1704 = vmatprep.subr.mxu0 0.0
    %1705 = vmatpush1.msra.mxu0 0.0
    %1706 = vmatprep.subr.mxu0 0.0
    %1707 = vmatpush1.msra.mxu0 0.0
    %1708 = vmatprep.subr.mxu0 0.0
    %1709 = vmatpush1.msra.mxu0 0.0
    %1710 = vmatprep.subr.mxu0 0.0
    %1711 = vmatpush1.msra.mxu0 0.0
    %1712 = vmatprep.subr.mxu0 0.0
    %1713 = vmatpush1.msra.mxu0 0.0
    %1714 = vmatprep.subr.mxu0 0.0
    %1715 = vmatpush1.msra.mxu0 0.0
    %1716 = vmatprep.subr.mxu0 0.0
    %1717 = vmatpush1.msra.mxu0 0.0
    %1718 = vmatprep.subr.mxu0 0.0
    %1719 = vmatpush1.msra.mxu0 0.0
    %1720 = vmatprep.subr.mxu0 0.0
    %1721 = vmatpush1.msra.mxu0 0.0
    %1722 = vmatprep.subr.mxu0 0.0
    %1723 = vmatpush1.msra.mxu0 0.0
    %1724 = vmatprep.subr.mxu0 0.0
    %1725 = vmatpush1.msra.mxu0 0.0
    %1726 = vmatprep.subr.mxu0 0.0
    %1727 = vmatpush1.msra.mxu0 0.0
    %1728 = vmatprep.subr.mxu0 0.0
    %1729 = vmatpush1.msra.mxu0 0.0
    %1730 = vmatprep.subr.mxu0 0.0
    %1731 = vmatpush1.msra.mxu0 0.0
    %1732 = vmatprep.subr.mxu0 0.0
    %1733 = vmatpush1.msra.mxu0 0.0
    %1734 = vmatprep.subr.mxu0 0.0
    %1735 = vmatpush1.msra.mxu0 0.0
    %1736 = vmatprep.subr.mxu0 0.0
    %1737 = vmatpush1.msra.mxu0 0.0
    %1738 = vmatprep.subr.mxu0 0.0
    %1739 = vmatpush1.msra.mxu0 0.0
    %1740 = vmatprep.subr.mxu0 0.0
    %1741 = vmatpush1.msra.mxu0 0.0
    %1742 = vmatprep.subr.mxu0 0.0
    %1743 = vmatpush1.msra.mxu0 0.0
    %1744 = vmatprep.subr.mxu0 0.0
    %1745 = vmatpush1.msra.mxu0 0.0
    %1746 = vmatprep.subr.mxu0 0.0
    %1747 = vmatpush1.msra.mxu0 0.0
    %1748 = vmatprep.mubr.f32.mxu0 0.0
    %1749 = vmatmul.mubr.f32.gmra.mrb[0].mxu0 %v1682
    %v1750 = vpop.f32.mrb[0].mxu0
    %v1751 = vadd.f32 0.0, %v1750
    %v1752 = vpop.f32.mrb[0].mxu0
    %1753 = vdwg.mxu0
    %v1755 = vrot.slane %v1751, 7
    %v1758 = vadd.f32 %v1544, %v1755
    %v1759 = vadd.f32 %v1546, %v1751
    %v1760 = vxor.u32 %v1758, 2147483648
    %v1761 = vxor.u32 %v1759, 2147483648
    %v1762 = vmul.f32 %v1760, 1.442695
    %v1763 = vpow.pop %v1762
    %v1764 = vmul.f32 %v1761, 1.442695
    %v1765 = vpow.pop %v1764
    %v1766 = vadd.f32 %v1763, 1.0
    %v1767 = vadd.f32 %v1765, 1.0
    %v1768 = vrcp.pop %v1766
    %v1769 = vmul.f32 1.0, %v1768
    %v1770 = vrcp.pop %v1767
    %v1771 = vmul.f32 1.0, %v1770
    %v1772 = vtanh.pop %v1758
    %v1773 = vtanh.pop %v1759
    %v1776 = vrot.slane %v1661, 7
    %v1777 = vrot.slane %v1662, 7
    %v1780 = vmul.f32 %v1769, %v1776
    %v1781 = vmul.f32 %v1771, %v1777
    %1784 = vrot.lane.b32.xlu0 %v1772, 64
    %v1785 = vpop.permute.xlu0 %1784
    %1786 = vrot.lane.b32.xlu0 %v1773, 64
    %v1787 = vpop.permute.xlu0 %1786
    %v1790 = vmul.f32 %v1769, %v1785
    %v1791 = vmul.f32 %v1771, %v1787
    %1794 = vrot.lane.b32.xlu0 %v1790, 32
    %v1795 = vpop.permute.xlu0 %1794
    %1796 = vrot.lane.b32.xlu0 %v1791, 32
    %v1797 = vpop.permute.xlu0 %1796
    %v1800 = vadd.f32 %v1780, %v1795
    %v1801 = vadd.f32 %v1781, %v1797
    %v1802 = vtanh.pop %v1800
    %v1803 = vtanh.pop %v1801
    %1806 = vrot.lane.b32.xlu0 %v1802, 64
    %v1807 = vpop.permute.xlu0 %1806
    %1808 = vrot.lane.b32.xlu0 %v1803, 64
    %v1809 = vpop.permute.xlu0 %1808
    %v1812 = vmul.f32 %v1769, %v1807
    %v1813 = vmul.f32 %v1771, %v1809
    %v1816 = vrot.slane %v1812, 1
    %v1817 = vsel %vm1678, %v1813, %v1816
    %1818 = vrot.lane.b32.xlu0 %v1817, 32
    %v1819 = vpop.permute.xlu0 %1818
    %v1820 = vsel %vm1197, %v1819, 0
    %1822 = vmatprep.subr.mxu0 0.0
    %1823 = vmatpush1.msra.mxu0 %v1433
    %1824 = vmatprep.subr.mxu0 0.0
    %1825 = vmatpush1.msra.mxu0 %v1434
    %1826 = vmatprep.subr.mxu0 0.0
    %1827 = vmatpush1.msra.mxu0 %v1435
    %1828 = vmatprep.subr.mxu0 0.0
    %1829 = vmatpush1.msra.mxu0 %v1436
    %1830 = vmatprep.subr.mxu0 0.0
    %1831 = vmatpush1.msra.mxu0 0.0
    %1832 = vmatprep.subr.mxu0 0.0
    %1833 = vmatpush1.msra.mxu0 0.0
    %1834 = vmatprep.subr.mxu0 0.0
    %1835 = vmatpush1.msra.mxu0 0.0
    %1836 = vmatprep.subr.mxu0 0.0
    %1837 = vmatpush1.msra.mxu0 0.0
    %1838 = vmatprep.subr.mxu0 0.0
    %1839 = vmatpush1.msra.mxu0 0.0
    %1840 = vmatprep.subr.mxu0 0.0
    %1841 = vmatpush1.msra.mxu0 0.0
    %1842 = vmatprep.subr.mxu0 0.0
    %1843 = vmatpush1.msra.mxu0 0.0
    %1844 = vmatprep.subr.mxu0 0.0
    %1845 = vmatpush1.msra.mxu0 0.0
    %1846 = vmatprep.subr.mxu0 0.0
    %1847 = vmatpush1.msra.mxu0 0.0
    %1848 = vmatprep.subr.mxu0 0.0
    %1849 = vmatpush1.msra.mxu0 0.0
    %1850 = vmatprep.subr.mxu0 0.0
    %1851 = vmatpush1.msra.mxu0 0.0
    %1852 = vmatprep.subr.mxu0 0.0
    %1853 = vmatpush1.msra.mxu0 0.0
    %1854 = vmatprep.subr.mxu0 0.0
    %1855 = vmatpush1.msra.mxu0 0.0
    %1856 = vmatprep.subr.mxu0 0.0
    %1857 = vmatpush1.msra.mxu0 0.0
    %1858 = vmatprep.subr.mxu0 0.0
    %1859 = vmatpush1.msra.mxu0 0.0
    %1860 = vmatprep.subr.mxu0 0.0
    %1861 = vmatpush1.msra.mxu0 0.0
    %1862 = vmatprep.subr.mxu0 0.0
    %1863 = vmatpush1.msra.mxu0 0.0
    %1864 = vmatprep.subr.mxu0 0.0
    %1865 = vmatpush1.msra.mxu0 0.0
    %1866 = vmatprep.subr.mxu0 0.0
    %1867 = vmatpush1.msra.mxu0 0.0
    %1868 = vmatprep.subr.mxu0 0.0
    %1869 = vmatpush1.msra.mxu0 0.0
    %1870 = vmatprep.subr.mxu0 0.0
    %1871 = vmatpush1.msra.mxu0 0.0
    %1872 = vmatprep.subr.mxu0 0.0
    %1873 = vmatpush1.msra.mxu0 0.0
    %1874 = vmatprep.subr.mxu0 0.0
    %1875 = vmatpush1.msra.mxu0 0.0
    %1876 = vmatprep.subr.mxu0 0.0
    %1877 = vmatpush1.msra.mxu0 0.0
    %1878 = vmatprep.subr.mxu0 0.0
    %1879 = vmatpush1.msra.mxu0 0.0
    %1880 = vmatprep.subr.mxu0 0.0
    %1881 = vmatpush1.msra.mxu0 0.0
    %1882 = vmatprep.subr.mxu0 0.0
    %1883 = vmatpush1.msra.mxu0 0.0
    %1884 = vmatprep.subr.mxu0 0.0
    %1885 = vmatpush1.msra.mxu0 0.0
    %1886 = vmatprep.mubr.f32.mxu0 0.0
    %1887 = vmatmul.mubr.f32.gmra.mrb[0].mxu0 %v1820
    %v1888 = vpop.f32.mrb[0].mxu0
    %v1889 = vadd.f32 0.0, %v1888
    %v1890 = vpop.f32.mrb[0].mxu0
    %1891 = vdwg.mxu0
    %v1893 = vrot.slane %v1889, 6
    %v1894 = vrot.slane %v1889, 7
    %v1897 = vadd.f32 %v1544, %v1893
    %v1898 = vadd.f32 %v1546, %v1894
    %v1899 = vxor.u32 %v1897, 2147483648
    %v1900 = vxor.u32 %v1898, 2147483648
    %v1901 = vmul.f32 %v1899, 1.442695
    %v1902 = vpow.pop %v1901
    %v1903 = vmul.f32 %v1900, 1.442695
    %v1904 = vpow.pop %v1903
    %v1905 = vadd.f32 %v1902, 1.0
    %v1906 = vadd.f32 %v1904, 1.0
    %v1907 = vrcp.pop %v1905
    %v1908 = vmul.f32 1.0, %v1907
    %v1909 = vrcp.pop %v1906
    %v1910 = vmul.f32 1.0, %v1909
    %v1911 = vtanh.pop %v1897
    %v1912 = vtanh.pop %v1898
    %v1915 = vrot.slane %v1800, 7
    %v1916 = vrot.slane %v1801, 7
    %v1919 = vmul.f32 %v1908, %v1915
    %v1920 = vmul.f32 %v1910, %v1916
    %1923 = vrot.lane.b32.xlu0 %v1911, 64
    %v1924 = vpop.permute.xlu0 %1923
    %1925 = vrot.lane.b32.xlu0 %v1912, 64
    %v1926 = vpop.permute.xlu0 %1925
    %v1929 = vmul.f32 %v1908, %v1924
    %v1930 = vmul.f32 %v1910, %v1926
    %1933 = vrot.lane.b32.xlu0 %v1929, 32
    %v1934 = vpop.permute.xlu0 %1933
    %1935 = vrot.lane.b32.xlu0 %v1930, 32
    %v1936 = vpop.permute.xlu0 %1935
    %v1939 = vadd.f32 %v1919, %v1934
    %v1940 = vadd.f32 %v1920, %v1936
    %v1941 = vtanh.pop %v1939
    %v1942 = vtanh.pop %v1940
    %1945 = vrot.lane.b32.xlu0 %v1941, 64
    %v1946 = vpop.permute.xlu0 %1945
    %1947 = vrot.lane.b32.xlu0 %v1942, 64
    %v1948 = vpop.permute.xlu0 %1947
    %v1951 = vmul.f32 %v1908, %v1946
    %v1952 = vmul.f32 %v1910, %v1948
    %v1955 = vrot.slane %v1951, 2
    %v1956 = vrot.slane %v1952, 1
    %v1957 = vsel %vm1678, %v1956, %v1955
    %1958 = vrot.lane.b32.xlu0 %v1957, 32
    %v1959 = vpop.permute.xlu0 %1958
    %v1960 = vsel %vm1197, %v1959, 0
    %1962 = vmatprep.subr.mxu0 0.0
    %1963 = vmatpush1.msra.mxu0 %v1433
    %1964 = vmatprep.subr.mxu0 0.0
    %1965 = vmatpush1.msra.mxu0 %v1434
    %1966 = vmatprep.subr.mxu0 0.0
    %1967 = vmatpush1.msra.mxu0 %v1435
    %1968 = vmatprep.subr.mxu0 0.0
    %1969 = vmatpush1.msra.mxu0 %v1436
    %1970 = vmatprep.subr.mxu0 0.0
    %1971 = vmatpush1.msra.mxu0 0.0
    %1972 = vmatprep.subr.mxu0 0.0
    %1973 = vmatpush1.msra.mxu0 0.0
    %1974 = vmatprep.subr.mxu0 0.0
    %1975 = vmatpush1.msra.mxu0 0.0
    %1976 = vmatprep.subr.mxu0 0.0
    %1977 = vmatpush1.msra.mxu0 0.0
    %1978 = vmatprep.subr.mxu0 0.0
    %1979 = vmatpush1.msra.mxu0 0.0
    %1980 = vmatprep.subr.mxu0 0.0
    %1981 = vmatpush1.msra.mxu0 0.0
    %1982 = vmatprep.subr.mxu0 0.0
    %1983 = vmatpush1.msra.mxu0 0.0
    %1984 = vmatprep.subr.mxu0 0.0
    %1985 = vmatpush1.msra.mxu0 0.0
    %1986 = vmatprep.subr.mxu0 0.0
    %1987 = vmatpush1.msra.mxu0 0.0
    %1988 = vmatprep.subr.mxu0 0.0
    %1989 = vmatpush1.msra.mxu0 0.0
    %1990 = vmatprep.subr.mxu0 0.0
    %1991 = vmatpush1.msra.mxu0 0.0
    %1992 = vmatprep.subr.mxu0 0.0
    %1993 = vmatpush1.msra.mxu0 0.0
    %1994 = vmatprep.subr.mxu0 0.0
    %1995 = vmatpush1.msra.mxu0 0.0
    %1996 = vmatprep.subr.mxu0 0.0
    %1997 = vmatpush1.msra.mxu0 0.0
    %1998 = vmatprep.subr.mxu0 0.0
    %1999 = vmatpush1.msra.mxu0 0.0
    %2000 = vmatprep.subr.mxu0 0.0
    %2001 = vmatpush1.msra.mxu0 0.0
    %2002 = vmatprep.subr.mxu0 0.0
    %2003 = vmatpush1.msra.mxu0 0.0
    %2004 = vmatprep.subr.mxu0 0.0
    %2005 = vmatpush1.msra.mxu0 0.0
    %2006 = vmatprep.subr.mxu0 0.0
    %2007 = vmatpush1.msra.mxu0 0.0
    %2008 = vmatprep.subr.mxu0 0.0
    %2009 = vmatpush1.msra.mxu0 0.0
    %2010 = vmatprep.subr.mxu0 0.0
    %2011 = vmatpush1.msra.mxu0 0.0
    %2012 = vmatprep.subr.mxu0 0.0
    %2013 = vmatpush1.msra.mxu0 0.0
    %2014 = vmatprep.subr.mxu0 0.0
    %2015 = vmatpush1.msra.mxu0 0.0
    %2016 = vmatprep.subr.mxu0 0.0
    %2017 = vmatpush1.msra.mxu0 0.0
    %2018 = vmatprep.subr.mxu0 0.0
    %2019 = vmatpush1.msra.mxu0 0.0
    %2020 = vmatprep.subr.mxu0 0.0
    %2021 = vmatpush1.msra.mxu0 0.0
    %2022 = vmatprep.subr.mxu0 0.0
    %2023 = vmatpush1.msra.mxu0 0.0
    %2024 = vmatprep.subr.mxu0 0.0
    %2025 = vmatpush1.msra.mxu0 0.0
    %2026 = vmatprep.mubr.f32.mxu0 0.0
    %2027 = vmatmul.mubr.f32.gmra.mrb[0].mxu0 %v1960
    %v2028 = vpop.f32.mrb[0].mxu0
    %v2029 = vadd.f32 0.0, %v2028
    %v2030 = vpop.f32.mrb[0].mxu0
    %2031 = vdwg.mxu0
    %v2033 = vrot.slane %v2029, 5
    %v2034 = vrot.slane %v2029, 6
    %v2037 = vadd.f32 %v1544, %v2033
    %v2038 = vadd.f32 %v1546, %v2034
    %v2039 = vxor.u32 %v2037, 2147483648
    %v2040 = vxor.u32 %v2038, 2147483648
    %v2041 = vmul.f32 %v2039, 1.442695
    %v2042 = vpow.pop %v2041
    %v2043 = vmul.f32 %v2040, 1.442695
    %v2044 = vpow.pop %v2043
    %v2045 = vadd.f32 %v2042, 1.0
    %v2046 = vadd.f32 %v2044, 1.0
    %v2047 = vrcp.pop %v2045
    %v2048 = vmul.f32 1.0, %v2047
    %v2049 = vrcp.pop %v2046
    %v2050 = vmul.f32 1.0, %v2049
    %v2051 = vtanh.pop %v2037
    %v2052 = vtanh.pop %v2038
    %v2055 = vrot.slane %v1939, 7
    %v2056 = vrot.slane %v1940, 7
    %v2059 = vmul.f32 %v2048, %v2055
    %v2060 = vmul.f32 %v2050, %v2056
    %2063 = vrot.lane.b32.xlu0 %v2051, 64
    %v2064 = vpop.permute.xlu0 %2063
    %2065 = vrot.lane.b32.xlu0 %v2052, 64
    %v2066 = vpop.permute.xlu0 %2065
    %v2069 = vmul.f32 %v2048, %v2064
    %v2070 = vmul.f32 %v2050, %v2066
    %2073 = vrot.lane.b32.xlu0 %v2069, 32
    %v2074 = vpop.permute.xlu0 %2073
    %2075 = vrot.lane.b32.xlu0 %v2070, 32
    %v2076 = vpop.permute.xlu0 %2075
    %v2079 = vadd.f32 %v2059, %v2074
    %v2080 = vadd.f32 %v2060, %v2076
    %v2081 = vtanh.pop %v2079
    %v2082 = vtanh.pop %v2080
    %2085 = vrot.lane.b32.xlu0 %v2081, 64
    %v2086 = vpop.permute.xlu0 %2085
    %2087 = vrot.lane.b32.xlu0 %v2082, 64
    %v2088 = vpop.permute.xlu0 %2087
    %v2091 = vmul.f32 %v2048, %v2086
    %v2092 = vmul.f32 %v2050, %v2088
    %v2095 = vrot.slane %v2091, 3
    %v2096 = vrot.slane %v2092, 2
    %v2097 = vsel %vm1678, %v2096, %v2095
    %2098 = vrot.lane.b32.xlu0 %v2097, 32
    %v2099 = vpop.permute.xlu0 %2098
    %v2100 = vsel %vm1197, %v2099, 0
    %2102 = vmatprep.subr.mxu0 0.0
    %2103 = vmatpush1.msra.mxu0 %v1433
    %2104 = vmatprep.subr.mxu0 0.0
    %2105 = vmatpush1.msra.mxu0 %v1434
    %2106 = vmatprep.subr.mxu0 0.0
    %2107 = vmatpush1.msra.mxu0 %v1435
    %2108 = vmatprep.subr.mxu0 0.0
    %2109 = vmatpush1.msra.mxu0 %v1436
    %2110 = vmatprep.subr.mxu0 0.0
    %2111 = vmatpush1.msra.mxu0 0.0
    %2112 = vmatprep.subr.mxu0 0.0
    %2113 = vmatpush1.msra.mxu0 0.0
    %2114 = vmatprep.subr.mxu0 0.0
    %2115 = vmatpush1.msra.mxu0 0.0
    %2116 = vmatprep.subr.mxu0 0.0
    %2117 = vmatpush1.msra.mxu0 0.0
    %2118 = vmatprep.subr.mxu0 0.0
    %2119 = vmatpush1.msra.mxu0 0.0
    %2120 = vmatprep.subr.mxu0 0.0
    %2121 = vmatpush1.msra.mxu0 0.0
    %2122 = vmatprep.subr.mxu0 0.0
    %2123 = vmatpush1.msra.mxu0 0.0
    %2124 = vmatprep.subr.mxu0 0.0
    %2125 = vmatpush1.msra.mxu0 0.0
    %2126 = vmatprep.subr.mxu0 0.0
    %2127 = vmatpush1.msra.mxu0 0.0
    %2128 = vmatprep.subr.mxu0 0.0
    %2129 = vmatpush1.msra.mxu0 0.0
    %2130 = vmatprep.subr.mxu0 0.0
    %2131 = vmatpush1.msra.mxu0 0.0
    %2132 = vmatprep.subr.mxu0 0.0
    %2133 = vmatpush1.msra.mxu0 0.0
    %2134 = vmatprep.subr.mxu0 0.0
    %2135 = vmatpush1.msra.mxu0 0.0
    %2136 = vmatprep.subr.mxu0 0.0
    %2137 = vmatpush1.msra.mxu0 0.0
    %2138 = vmatprep.subr.mxu0 0.0
    %2139 = vmatpush1.msra.mxu0 0.0
    %2140 = vmatprep.subr.mxu0 0.0
    %2141 = vmatpush1.msra.mxu0 0.0
    %2142 = vmatprep.subr.mxu0 0.0
    %2143 = vmatpush1.msra.mxu0 0.0
    %2144 = vmatprep.subr.mxu0 0.0
    %2145 = vmatpush1.msra.mxu0 0.0
    %2146 = vmatprep.subr.mxu0 0.0
    %2147 = vmatpush1.msra.mxu0 0.0
    %2148 = vmatprep.subr.mxu0 0.0
    %2149 = vmatpush1.msra.mxu0 0.0
    %2150 = vmatprep.subr.mxu0 0.0
    %2151 = vmatpush1.msra.mxu0 0.0
    %2152 = vmatprep.subr.mxu0 0.0
    %2153 = vmatpush1.msra.mxu0 0.0
    %2154 = vmatprep.subr.mxu0 0.0
    %2155 = vmatpush1.msra.mxu0 0.0
    %2156 = vmatprep.subr.mxu0 0.0
    %2157 = vmatpush1.msra.mxu0 0.0
    %2158 = vmatprep.subr.mxu0 0.0
    %2159 = vmatpush1.msra.mxu0 0.0
    %2160 = vmatprep.subr.mxu0 0.0
    %2161 = vmatpush1.msra.mxu0 0.0
    %2162 = vmatprep.subr.mxu0 0.0
    %2163 = vmatpush1.msra.mxu0 0.0
    %2164 = vmatprep.subr.mxu0 0.0
    %2165 = vmatpush1.msra.mxu0 0.0
    %2166 = vmatprep.mubr.f32.mxu0 0.0
    %2167 = vmatmul.mubr.f32.gmra.mrb[0].mxu0 %v2100
    %v2168 = vpop.f32.mrb[0].mxu0
    %v2169 = vadd.f32 0.0, %v2168
    %v2170 = vpop.f32.mrb[0].mxu0
    %2171 = vdwg.mxu0
    %v2173 = vrot.slane %v2169, 4
    %v2174 = vrot.slane %v2169, 5
    %v2177 = vadd.f32 %v1544, %v2173
    %v2178 = vadd.f32 %v1546, %v2174
    %v2179 = vxor.u32 %v2177, 2147483648
    %v2180 = vxor.u32 %v2178, 2147483648
    %v2181 = vmul.f32 %v2179, 1.442695
    %v2182 = vpow.pop %v2181
    %v2183 = vmul.f32 %v2180, 1.442695
    %v2184 = vpow.pop %v2183
    %v2185 = vadd.f32 %v2182, 1.0
    %v2186 = vadd.f32 %v2184, 1.0
    %v2187 = vrcp.pop %v2185
    %v2188 = vmul.f32 1.0, %v2187
    %v2189 = vrcp.pop %v2186
    %v2190 = vmul.f32 1.0, %v2189
    %v2191 = vtanh.pop %v2177
    %v2192 = vtanh.pop %v2178
    %v2195 = vrot.slane %v2079, 7
    %v2196 = vrot.slane %v2080, 7
    %v2199 = vmul.f32 %v2188, %v2195
    %v2200 = vmul.f32 %v2190, %v2196
    %2203 = vrot.lane.b32.xlu0 %v2191, 64
    %v2204 = vpop.permute.xlu0 %2203
    %2205 = vrot.lane.b32.xlu0 %v2192, 64
    %v2206 = vpop.permute.xlu0 %2205
    %v2209 = vmul.f32 %v2188, %v2204
    %v2210 = vmul.f32 %v2190, %v2206
    %2213 = vrot.lane.b32.xlu0 %v2209, 32
    %v2214 = vpop.permute.xlu0 %2213
    %2215 = vrot.lane.b32.xlu0 %v2210, 32
    %v2216 = vpop.permute.xlu0 %2215
    %v2219 = vadd.f32 %v2199, %v2214
    %v2220 = vadd.f32 %v2200, %v2216
    %v2221 = vtanh.pop %v2219
    %v2222 = vtanh.pop %v2220
    %2225 = vrot.lane.b32.xlu0 %v2221, 64
    %v2226 = vpop.permute.xlu0 %2225
    %2227 = vrot.lane.b32.xlu0 %v2222, 64
    %v2228 = vpop.permute.xlu0 %2227
    %v2231 = vmul.f32 %v2188, %v2226
    %v2232 = vmul.f32 %v2190, %v2228
    %v2235 = vrot.slane %v2231, 4
    %v2236 = vrot.slane %v2232, 3
    %v2237 = vsel %vm1678, %v2236, %v2235
    %2238 = vrot.lane.b32.xlu0 %v2237, 32
    %v2239 = vpop.permute.xlu0 %2238
    %v2240 = vsel %vm1197, %v2239, 0
    %2242 = vmatprep.subr.mxu0 0.0
    %2243 = vmatpush1.msra.mxu0 %v1433
    %2244 = vmatprep.subr.mxu0 0.0
    %2245 = vmatpush1.msra.mxu0 %v1434
    %2246 = vmatprep.subr.mxu0 0.0
    %2247 = vmatpush1.msra.mxu0 %v1435
    %2248 = vmatprep.subr.mxu0 0.0
    %2249 = vmatpush1.msra.mxu0 %v1436
    %2250 = vmatprep.subr.mxu0 0.0
    %2251 = vmatpush1.msra.mxu0 0.0
    %2252 = vmatprep.subr.mxu0 0.0
    %2253 = vmatpush1.msra.mxu0 0.0
    %2254 = vmatprep.subr.mxu0 0.0
    %2255 = vmatpush1.msra.mxu0 0.0
    %2256 = vmatprep.subr.mxu0 0.0
    %2257 = vmatpush1.msra.mxu0 0.0
    %2258 = vmatprep.subr.mxu0 0.0
    %2259 = vmatpush1.msra.mxu0 0.0
    %2260 = vmatprep.subr.mxu0 0.0
    %2261 = vmatpush1.msra.mxu0 0.0
    %2262 = vmatprep.subr.mxu0 0.0
    %2263 = vmatpush1.msra.mxu0 0.0
    %2264 = vmatprep.subr.mxu0 0.0
    %2265 = vmatpush1.msra.mxu0 0.0
    %2266 = vmatprep.subr.mxu0 0.0
    %2267 = vmatpush1.msra.mxu0 0.0
    %2268 = vmatprep.subr.mxu0 0.0
    %2269 = vmatpush1.msra.mxu0 0.0
    %2270 = vmatprep.subr.mxu0 0.0
    %2271 = vmatpush1.msra.mxu0 0.0
    %2272 = vmatprep.subr.mxu0 0.0
    %2273 = vmatpush1.msra.mxu0 0.0
    %2274 = vmatprep.subr.mxu0 0.0
    %2275 = vmatpush1.msra.mxu0 0.0
    %2276 = vmatprep.subr.mxu0 0.0
    %2277 = vmatpush1.msra.mxu0 0.0
    %2278 = vmatprep.subr.mxu0 0.0
    %2279 = vmatpush1.msra.mxu0 0.0
    %2280 = vmatprep.subr.mxu0 0.0
    %2281 = vmatpush1.msra.mxu0 0.0
    %2282 = vmatprep.subr.mxu0 0.0
    %2283 = vmatpush1.msra.mxu0 0.0
    %2284 = vmatprep.subr.mxu0 0.0
    %2285 = vmatpush1.msra.mxu0 0.0
    %2286 = vmatprep.subr.mxu0 0.0
    %2287 = vmatpush1.msra.mxu0 0.0
    %2288 = vmatprep.subr.mxu0 0.0
    %2289 = vmatpush1.msra.mxu0 0.0
    %2290 = vmatprep.subr.mxu0 0.0
    %2291 = vmatpush1.msra.mxu0 0.0
    %2292 = vmatprep.subr.mxu0 0.0
    %2293 = vmatpush1.msra.mxu0 0.0
    %2294 = vmatprep.subr.mxu0 0.0
    %2295 = vmatpush1.msra.mxu0 0.0
    %2296 = vmatprep.subr.mxu0 0.0
    %2297 = vmatpush1.msra.mxu0 0.0
    %2298 = vmatprep.subr.mxu0 0.0
    %2299 = vmatpush1.msra.mxu0 0.0
    %2300 = vmatprep.subr.mxu0 0.0
    %2301 = vmatpush1.msra.mxu0 0.0
    %2302 = vmatprep.subr.mxu0 0.0
    %2303 = vmatpush1.msra.mxu0 0.0
    %2304 = vmatprep.subr.mxu0 0.0
    %2305 = vmatpush1.msra.mxu0 0.0
    %2306 = vmatprep.mubr.f32.mxu0 0.0
    %2307 = vmatmul.mubr.f32.gmra.mrb[0].mxu0 %v2240
    %v2308 = vpop.f32.mrb[0].mxu0
    %v2309 = vadd.f32 0.0, %v2308
    %v2310 = vpop.f32.mrb[0].mxu0
    %2311 = vdwg.mxu0
    %v2313 = vrot.slane %v2309, 3
    %v2314 = vrot.slane %v2309, 4
    %v2317 = vadd.f32 %v1544, %v2313
    %v2318 = vadd.f32 %v1546, %v2314
    %v2319 = vxor.u32 %v2317, 2147483648
    %v2320 = vxor.u32 %v2318, 2147483648
    %v2321 = vmul.f32 %v2319, 1.442695
    %v2322 = vpow.pop %v2321
    %v2323 = vmul.f32 %v2320, 1.442695
    %v2324 = vpow.pop %v2323
    %v2325 = vadd.f32 %v2322, 1.0
    %v2326 = vadd.f32 %v2324, 1.0
    %v2327 = vrcp.pop %v2325
    %v2328 = vmul.f32 1.0, %v2327
    %v2329 = vrcp.pop %v2326
    %v2330 = vmul.f32 1.0, %v2329
    %v2331 = vtanh.pop %v2317
    %v2332 = vtanh.pop %v2318
    %v2335 = vrot.slane %v2219, 7
    %v2336 = vrot.slane %v2220, 7
    %v2339 = vmul.f32 %v2328, %v2335
    %v2340 = vmul.f32 %v2330, %v2336
    %2343 = vrot.lane.b32.xlu0 %v2331, 64
    %v2344 = vpop.permute.xlu0 %2343
    %2345 = vrot.lane.b32.xlu0 %v2332, 64
    %v2346 = vpop.permute.xlu0 %2345
    %v2349 = vmul.f32 %v2328, %v2344
    %v2350 = vmul.f32 %v2330, %v2346
    %2353 = vrot.lane.b32.xlu0 %v2349, 32
    %v2354 = vpop.permute.xlu0 %2353
    %2355 = vrot.lane.b32.xlu0 %v2350, 32
    %v2356 = vpop.permute.xlu0 %2355
    %v2359 = vadd.f32 %v2339, %v2354
    %v2360 = vadd.f32 %v2340, %v2356
    %v2361 = vtanh.pop %v2359
    %v2362 = vtanh.pop %v2360
    %2365 = vrot.lane.b32.xlu0 %v2361, 64
    %v2366 = vpop.permute.xlu0 %2365
    %2367 = vrot.lane.b32.xlu0 %v2362, 64
    %v2368 = vpop.permute.xlu0 %2367
    %v2371 = vmul.f32 %v2328, %v2366
    %v2372 = vmul.f32 %v2330, %v2368
    %v2375 = vrot.slane %v2371, 5
    %v2376 = vrot.slane %v2372, 4
    %v2377 = vsel %vm1678, %v2376, %v2375
    %2378 = vrot.lane.b32.xlu0 %v2377, 32
    %v2379 = vpop.permute.xlu0 %2378
    %v2380 = vsel %vm1197, %v2379, 0
    %2382 = vmatprep.subr.mxu0 0.0
    %2383 = vmatpush1.msra.mxu0 %v1433
    %2384 = vmatprep.subr.mxu0 0.0
    %2385 = vmatpush1.msra.mxu0 %v1434
    %2386 = vmatprep.subr.mxu0 0.0
    %2387 = vmatpush1.msra.mxu0 %v1435
    %2388 = vmatprep.subr.mxu0 0.0
    %2389 = vmatpush1.msra.mxu0 %v1436
    %2390 = vmatprep.subr.mxu0 0.0
    %2391 = vmatpush1.msra.mxu0 0.0
    %2392 = vmatprep.subr.mxu0 0.0
    %2393 = vmatpush1.msra.mxu0 0.0
    %2394 = vmatprep.subr.mxu0 0.0
    %2395 = vmatpush1.msra.mxu0 0.0
    %2396 = vmatprep.subr.mxu0 0.0
    %2397 = vmatpush1.msra.mxu0 0.0
    %2398 = vmatprep.subr.mxu0 0.0
    %2399 = vmatpush1.msra.mxu0 0.0
    %2400 = vmatprep.subr.mxu0 0.0
    %2401 = vmatpush1.msra.mxu0 0.0
    %2402 = vmatprep.subr.mxu0 0.0
    %2403 = vmatpush1.msra.mxu0 0.0
    %2404 = vmatprep.subr.mxu0 0.0
    %2405 = vmatpush1.msra.mxu0 0.0
    %2406 = vmatprep.subr.mxu0 0.0
    %2407 = vmatpush1.msra.mxu0 0.0
    %2408 = vmatprep.subr.mxu0 0.0
    %2409 = vmatpush1.msra.mxu0 0.0
    %2410 = vmatprep.subr.mxu0 0.0
    %2411 = vmatpush1.msra.mxu0 0.0
    %2412 = vmatprep.subr.mxu0 0.0
    %2413 = vmatpush1.msra.mxu0 0.0
    %2414 = vmatprep.subr.mxu0 0.0
    %2415 = vmatpush1.msra.mxu0 0.0
    %2416 = vmatprep.subr.mxu0 0.0
    %2417 = vmatpush1.msra.mxu0 0.0
    %2418 = vmatprep.subr.mxu0 0.0
    %2419 = vmatpush1.msra.mxu0 0.0
    %2420 = vmatprep.subr.mxu0 0.0
    %2421 = vmatpush1.msra.mxu0 0.0
    %2422 = vmatprep.subr.mxu0 0.0
    %2423 = vmatpush1.msra.mxu0 0.0
    %2424 = vmatprep.subr.mxu0 0.0
    %2425 = vmatpush1.msra.mxu0 0.0
    %2426 = vmatprep.subr.mxu0 0.0
    %2427 = vmatpush1.msra.mxu0 0.0
    %2428 = vmatprep.subr.mxu0 0.0
    %2429 = vmatpush1.msra.mxu0 0.0
    %2430 = vmatprep.subr.mxu0 0.0
    %2431 = vmatpush1.msra.mxu0 0.0
    %2432 = vmatprep.subr.mxu0 0.0
    %2433 = vmatpush1.msra.mxu0 0.0
    %2434 = vmatprep.subr.mxu0 0.0
    %2435 = vmatpush1.msra.mxu0 0.0
    %2436 = vmatprep.subr.mxu0 0.0
    %2437 = vmatpush1.msra.mxu0 0.0
    %2438 = vmatprep.subr.mxu0 0.0
    %2439 = vmatpush1.msra.mxu0 0.0
    %2440 = vmatprep.subr.mxu0 0.0
    %2441 = vmatpush1.msra.mxu0 0.0
    %2442 = vmatprep.subr.mxu0 0.0
    %2443 = vmatpush1.msra.mxu0 0.0
    %2444 = vmatprep.subr.mxu0 0.0
    %2445 = vmatpush1.msra.mxu0 0.0
    %2446 = vmatprep.mubr.f32.mxu0 0.0
    %2447 = vmatmul.mubr.f32.gmra.mrb[0].mxu0 %v2380
    %v2448 = vpop.f32.mrb[0].mxu0
    %v2449 = vadd.f32 0.0, %v2448
    %v2450 = vpop.f32.mrb[0].mxu0
    %2451 = vdwg.mxu0
    %v2453 = vrot.slane %v2449, 2
    %v2454 = vrot.slane %v2449, 3
    %v2457 = vadd.f32 %v1544, %v2453
    %v2458 = vadd.f32 %v1546, %v2454
    %v2459 = vxor.u32 %v2457, 2147483648
    %v2460 = vxor.u32 %v2458, 2147483648
    %v2461 = vmul.f32 %v2459, 1.442695
    %v2462 = vpow.pop %v2461
    %v2463 = vmul.f32 %v2460, 1.442695
    %v2464 = vpow.pop %v2463
    %v2465 = vadd.f32 %v2462, 1.0
    %v2466 = vadd.f32 %v2464, 1.0
    %v2467 = vrcp.pop %v2465
    %v2468 = vmul.f32 1.0, %v2467
    %v2469 = vrcp.pop %v2466
    %v2470 = vmul.f32 1.0, %v2469
    %v2471 = vtanh.pop %v2457
    %v2472 = vtanh.pop %v2458
    %v2475 = vrot.slane %v2359, 7
    %v2476 = vrot.slane %v2360, 7
    %v2479 = vmul.f32 %v2468, %v2475
    %v2480 = vmul.f32 %v2470, %v2476
    %2483 = vrot.lane.b32.xlu0 %v2471, 64
    %v2484 = vpop.permute.xlu0 %2483
    %2485 = vrot.lane.b32.xlu0 %v2472, 64
    %v2486 = vpop.permute.xlu0 %2485
    %v2489 = vmul.f32 %v2468, %v2484
    %v2490 = vmul.f32 %v2470, %v2486
    %2493 = vrot.lane.b32.xlu0 %v2489, 32
    %v2494 = vpop.permute.xlu0 %2493
    %2495 = vrot.lane.b32.xlu0 %v2490, 32
    %v2496 = vpop.permute.xlu0 %2495
    %v2499 = vadd.f32 %v2479, %v2494
    %v2500 = vadd.f32 %v2480, %v2496
    %v2501 = vtanh.pop %v2499
    %v2502 = vtanh.pop %v2500
    %2505 = vrot.lane.b32.xlu0 %v2501, 64
    %v2506 = vpop.permute.xlu0 %2505
    %2507 = vrot.lane.b32.xlu0 %v2502, 64
    %v2508 = vpop.permute.xlu0 %2507
    %v2511 = vmul.f32 %v2468, %v2506
    %v2512 = vmul.f32 %v2470, %v2508
    %v2515 = vrot.slane %v2511, 6
    %v2516 = vrot.slane %v2512, 5
    %v2517 = vsel %vm1678, %v2516, %v2515
    %2518 = vrot.lane.b32.xlu0 %v2517, 32
    %v2519 = vpop.permute.xlu0 %2518
    %v2520 = vsel %vm1197, %v2519, 0
    %2522 = vmatprep.subr.mxu0 0.0
    %2523 = vmatpush1.msra.mxu0 %v1433
    %2524 = vmatprep.subr.mxu0 0.0
    %2525 = vmatpush1.msra.mxu0 %v1434
    %2526 = vmatprep.subr.mxu0 0.0
    %2527 = vmatpush1.msra.mxu0 %v1435
    %2528 = vmatprep.subr.mxu0 0.0
    %2529 = vmatpush1.msra.mxu0 %v1436
    %2530 = vmatprep.subr.mxu0 0.0
    %2531 = vmatpush1.msra.mxu0 0.0
    %2532 = vmatprep.subr.mxu0 0.0
    %2533 = vmatpush1.msra.mxu0 0.0
    %2534 = vmatprep.subr.mxu0 0.0
    %2535 = vmatpush1.msra.mxu0 0.0
    %2536 = vmatprep.subr.mxu0 0.0
    %2537 = vmatpush1.msra.mxu0 0.0
    %2538 = vmatprep.subr.mxu0 0.0
    %2539 = vmatpush1.msra.mxu0 0.0
    %2540 = vmatprep.subr.mxu0 0.0
    %2541 = vmatpush1.msra.mxu0 0.0
    %2542 = vmatprep.subr.mxu0 0.0
    %2543 = vmatpush1.msra.mxu0 0.0
    %2544 = vmatprep.subr.mxu0 0.0
    %2545 = vmatpush1.msra.mxu0 0.0
    %2546 = vmatprep.subr.mxu0 0.0
    %2547 = vmatpush1.msra.mxu0 0.0
    %2548 = vmatprep.subr.mxu0 0.0
    %2549 = vmatpush1.msra.mxu0 0.0
    %2550 = vmatprep.subr.mxu0 0.0
    %2551 = vmatpush1.msra.mxu0 0.0
    %2552 = vmatprep.subr.mxu0 0.0
    %2553 = vmatpush1.msra.mxu0 0.0
    %2554 = vmatprep.subr.mxu0 0.0
    %2555 = vmatpush1.msra.mxu0 0.0
    %2556 = vmatprep.subr.mxu0 0.0
    %2557 = vmatpush1.msra.mxu0 0.0
    %2558 = vmatprep.subr.mxu0 0.0
    %2559 = vmatpush1.msra.mxu0 0.0
    %2560 = vmatprep.subr.mxu0 0.0
    %2561 = vmatpush1.msra.mxu0 0.0
    %2562 = vmatprep.subr.mxu0 0.0
    %2563 = vmatpush1.msra.mxu0 0.0
    %2564 = vmatprep.subr.mxu0 0.0
    %2565 = vmatpush1.msra.mxu0 0.0
    %2566 = vmatprep.subr.mxu0 0.0
    %2567 = vmatpush1.msra.mxu0 0.0
    %2568 = vmatprep.subr.mxu0 0.0
    %2569 = vmatpush1.msra.mxu0 0.0
    %2570 = vmatprep.subr.mxu0 0.0
    %2571 = vmatpush1.msra.mxu0 0.0
    %2572 = vmatprep.subr.mxu0 0.0
    %2573 = vmatpush1.msra.mxu0 0.0
    %2574 = vmatprep.subr.mxu0 0.0
    %2575 = vmatpush1.msra.mxu0 0.0
    %2576 = vmatprep.subr.mxu0 0.0
    %2577 = vmatpush1.msra.mxu0 0.0
    %2578 = vmatprep.subr.mxu0 0.0
    %2579 = vmatpush1.msra.mxu0 0.0
    %2580 = vmatprep.subr.mxu0 0.0
    %2581 = vmatpush1.msra.mxu0 0.0
    %2582 = vmatprep.subr.mxu0 0.0
    %2583 = vmatpush1.msra.mxu0 0.0
    %2584 = vmatprep.subr.mxu0 0.0
    %2585 = vmatpush1.msra.mxu0 0.0
    %2586 = vmatprep.mubr.f32.mxu0 0.0
    %2587 = vmatmul.mubr.f32.gmra.mrb[0].mxu0 %v2520
    %v2588 = vpop.f32.mrb[0].mxu0
    %v2589 = vadd.f32 0.0, %v2588
    %v2590 = vpop.f32.mrb[0].mxu0
    %2591 = vdwg.mxu0
    %v2593 = vrot.slane %v2589, 1
    %v2594 = vrot.slane %v2589, 2
    %v2597 = vadd.f32 %v1544, %v2593
    %v2598 = vadd.f32 %v1546, %v2594
    %v2599 = vxor.u32 %v2597, 2147483648
    %v2600 = vxor.u32 %v2598, 2147483648
    %v2601 = vmul.f32 %v2599, 1.442695
    %v2602 = vpow.pop %v2601
    %v2603 = vmul.f32 %v2600, 1.442695
    %v2604 = vpow.pop %v2603
    %v2605 = vadd.f32 %v2602, 1.0
    %v2606 = vadd.f32 %v2604, 1.0
    %v2607 = vrcp.pop %v2605
    %v2608 = vmul.f32 1.0, %v2607
    %v2609 = vrcp.pop %v2606
    %v2610 = vmul.f32 1.0, %v2609
    %v2611 = vtanh.pop %v2597
    %v2612 = vtanh.pop %v2598
    %v2615 = vrot.slane %v2499, 7
    %v2616 = vrot.slane %v2500, 7
    %v2619 = vmul.f32 %v2608, %v2615
    %v2620 = vmul.f32 %v2610, %v2616
    %2623 = vrot.lane.b32.xlu0 %v2611, 64
    %v2624 = vpop.permute.xlu0 %2623
    %2625 = vrot.lane.b32.xlu0 %v2612, 64
    %v2626 = vpop.permute.xlu0 %2625
    %v2629 = vmul.f32 %v2608, %v2624
    %v2630 = vmul.f32 %v2610, %v2626
    %2633 = vrot.lane.b32.xlu0 %v2629, 32
    %v2634 = vpop.permute.xlu0 %2633
    %2635 = vrot.lane.b32.xlu0 %v2630, 32
    %v2636 = vpop.permute.xlu0 %2635
    %v2639 = vadd.f32 %v2619, %v2634
    %v2640 = vadd.f32 %v2620, %v2636
    %v2641 = vtanh.pop %v2639
    %v2642 = vtanh.pop %v2640
    %2645 = vrot.lane.b32.xlu0 %v2641, 64
    %v2646 = vpop.permute.xlu0 %2645
    %2647 = vrot.lane.b32.xlu0 %v2642, 64
    %v2648 = vpop.permute.xlu0 %2647
    %v2651 = vmul.f32 %v2608, %v2646
    %v2652 = vmul.f32 %v2610, %v2648
    %v2655 = vrot.slane %v2651, 7
    %v2656 = vrot.slane %v2652, 6
    %v2657 = vsel %vm1678, %v2656, %v2655
    %2658 = vrot.lane.b32.xlu0 %v2657, 32
    %v2659 = vpop.permute.xlu0 %2658
    %v2660 = vsel %vm1197, %v2659, 0
    %2662 = vmatprep.subr.mxu0 0.0
    %2663 = vmatpush1.msra.mxu0 %v1433
    %2664 = vmatprep.subr.mxu0 0.0
    %2665 = vmatpush1.msra.mxu0 %v1434
    %2666 = vmatprep.subr.mxu0 0.0
    %2667 = vmatpush1.msra.mxu0 %v1435
    %2668 = vmatprep.subr.mxu0 0.0
    %2669 = vmatpush1.msra.mxu0 %v1436
    %2670 = vmatprep.subr.mxu0 0.0
    %2671 = vmatpush1.msra.mxu0 0.0
    %2672 = vmatprep.subr.mxu0 0.0
    %2673 = vmatpush1.msra.mxu0 0.0
    %2674 = vmatprep.subr.mxu0 0.0
    %2675 = vmatpush1.msra.mxu0 0.0
    %2676 = vmatprep.subr.mxu0 0.0
    %2677 = vmatpush1.msra.mxu0 0.0
    %2678 = vmatprep.subr.mxu0 0.0
    %2679 = vmatpush1.msra.mxu0 0.0
    %2680 = vmatprep.subr.mxu0 0.0
    %2681 = vmatpush1.msra.mxu0 0.0
    %2682 = vmatprep.subr.mxu0 0.0
    %2683 = vmatpush1.msra.mxu0 0.0
    %2684 = vmatprep.subr.mxu0 0.0
    %2685 = vmatpush1.msra.mxu0 0.0
    %2686 = vmatprep.subr.mxu0 0.0
    %2687 = vmatpush1.msra.mxu0 0.0
    %2688 = vmatprep.subr.mxu0 0.0
    %2689 = vmatpush1.msra.mxu0 0.0
    %2690 = vmatprep.subr.mxu0 0.0
    %2691 = vmatpush1.msra.mxu0 0.0
    %2692 = vmatprep.subr.mxu0 0.0
    %2693 = vmatpush1.msra.mxu0 0.0
    %2694 = vmatprep.subr.mxu0 0.0
    %2695 = vmatpush1.msra.mxu0 0.0
    %2696 = vmatprep.subr.mxu0 0.0
    %2697 = vmatpush1.msra.mxu0 0.0
    %2698 = vmatprep.subr.mxu0 0.0
    %2699 = vmatpush1.msra.mxu0 0.0
    %2700 = vmatprep.subr.mxu0 0.0
    %2701 = vmatpush1.msra.mxu0 0.0
    %2702 = vmatprep.subr.mxu0 0.0
    %2703 = vmatpush1.msra.mxu0 0.0
    %2704 = vmatprep.subr.mxu0 0.0
    %2705 = vmatpush1.msra.mxu0 0.0
    %2706 = vmatprep.subr.mxu0 0.0
    %2707 = vmatpush1.msra.mxu0 0.0
    %2708 = vmatprep.subr.mxu0 0.0
    %2709 = vmatpush1.msra.mxu0 0.0
    %2710 = vmatprep.subr.mxu0 0.0
    %2711 = vmatpush1.msra.mxu0 0.0
    %2712 = vmatprep.subr.mxu0 0.0
    %2713 = vmatpush1.msra.mxu0 0.0
    %2714 = vmatprep.subr.mxu0 0.0
    %2715 = vmatpush1.msra.mxu0 0.0
    %2716 = vmatprep.subr.mxu0 0.0
    %2717 = vmatpush1.msra.mxu0 0.0
    %2718 = vmatprep.subr.mxu0 0.0
    %2719 = vmatpush1.msra.mxu0 0.0
    %2720 = vmatprep.subr.mxu0 0.0
    %2721 = vmatpush1.msra.mxu0 0.0
    %2722 = vmatprep.subr.mxu0 0.0
    %2723 = vmatpush1.msra.mxu0 0.0
    %2724 = vmatprep.subr.mxu0 0.0
    %2725 = vmatpush1.msra.mxu0 0.0
    %2726 = vmatprep.mubr.f32.mxu0 0.0
    %2727 = vmatmul.mubr.f32.gmra.mrb[0].mxu0 %v2660
    %v2728 = vpop.f32.mrb[0].mxu0
    %v2729 = vadd.f32 0.0, %v2728
    %v2730 = vpop.f32.mrb[0].mxu0
    %2731 = vdwg.mxu0
    %v2733 = vrot.slane %v2729, 1
    %v2736 = vadd.f32 %v1545, %v2729
    %v2737 = vadd.f32 %v1547, %v2733
    %v2738 = vxor.u32 %v2736, 2147483648
    %v2739 = vxor.u32 %v2737, 2147483648
    %v2740 = vmul.f32 %v2738, 1.442695
    %v2741 = vpow.pop %v2740
    %v2742 = vmul.f32 %v2739, 1.442695
    %v2743 = vpow.pop %v2742
    %v2744 = vadd.f32 %v2741, 1.0
    %v2745 = vadd.f32 %v2743, 1.0
    %v2746 = vrcp.pop %v2744
    %v2747 = vmul.f32 1.0, %v2746
    %v2748 = vrcp.pop %v2745
    %v2749 = vmul.f32 1.0, %v2748
    %v2750 = vtanh.pop %v2736
    %v2751 = vtanh.pop %v2737
    %v2754 = vrot.slane %v2639, 7
    %v2755 = vrot.slane %v2640, 7
    %v2758 = vmul.f32 %v2747, %v2754
    %v2759 = vmul.f32 %v2749, %v2755
    %2762 = vrot.lane.b32.xlu0 %v2750, 64
    %v2763 = vpop.permute.xlu0 %2762
    %2764 = vrot.lane.b32.xlu0 %v2751, 64
    %v2765 = vpop.permute.xlu0 %2764
    %v2768 = vmul.f32 %v2747, %v2763
    %v2769 = vmul.f32 %v2749, %v2765
    %2772 = vrot.lane.b32.xlu0 %v2768, 32
    %v2773 = vpop.permute.xlu0 %2772
    %2774 = vrot.lane.b32.xlu0 %v2769, 32
    %v2775 = vpop.permute.xlu0 %2774
    %v2778 = vadd.f32 %v2758, %v2773
    %v2779 = vadd.f32 %v2759, %v2775
    %v2780 = vtanh.pop %v2778
    %v2781 = vtanh.pop %v2779
    %2784 = vrot.lane.b32.xlu0 %v2780, 64
    %v2785 = vpop.permute.xlu0 %2784
    %2786 = vrot.lane.b32.xlu0 %v2781, 64
    %v2787 = vpop.permute.xlu0 %2786
    %v2790 = vmul.f32 %v2747, %v2785
    %v2791 = vmul.f32 %v2749, %v2787
    %v2794 = vrot.slane %v2791, 7
    %v2795 = vsel %vm1678, %v2794, %v2790
    %2796 = vrot.lane.b32.xlu0 %v2795, 32
    %v2797 = vpop.permute.xlu0 %2796
    %v2798 = vsel %vm1197, %v2797, 0
    %2800 = vmatprep.subr.mxu0 0.0
    %2801 = vmatpush1.msra.mxu0 %v1433
    %2802 = vmatprep.subr.mxu0 0.0
    %2803 = vmatpush1.msra.mxu0 %v1434
    %2804 = vmatprep.subr.mxu0 0.0
    %2805 = vmatpush1.msra.mxu0 %v1435
    %2806 = vmatprep.subr.mxu0 0.0
    %2807 = vmatpush1.msra.mxu0 %v1436
    %2808 = vmatprep.subr.mxu0 0.0
    %2809 = vmatpush1.msra.mxu0 0.0
    %2810 = vmatprep.subr.mxu0 0.0
    %2811 = vmatpush1.msra.mxu0 0.0
    %2812 = vmatprep.subr.mxu0 0.0
    %2813 = vmatpush1.msra.mxu0 0.0
    %2814 = vmatprep.subr.mxu0 0.0
    %2815 = vmatpush1.msra.mxu0 0.0
    %2816 = vmatprep.subr.mxu0 0.0
    %2817 = vmatpush1.msra.mxu0 0.0
    %2818 = vmatprep.subr.mxu0 0.0
    %2819 = vmatpush1.msra.mxu0 0.0
    %2820 = vmatprep.subr.mxu0 0.0
    %2821 = vmatpush1.msra.mxu0 0.0
    %2822 = vmatprep.subr.mxu0 0.0
    %2823 = vmatpush1.msra.mxu0 0.0
    %2824 = vmatprep.subr.mxu0 0.0
    %2825 = vmatpush1.msra.mxu0 0.0
    %2826 = vmatprep.subr.mxu0 0.0
    %2827 = vmatpush1.msra.mxu0 0.0
    %2828 = vmatprep.subr.mxu0 0.0
    %2829 = vmatpush1.msra.mxu0 0.0
    %2830 = vmatprep.subr.mxu0 0.0
    %2831 = vmatpush1.msra.mxu0 0.0
    %2832 = vmatprep.subr.mxu0 0.0
    %2833 = vmatpush1.msra.mxu0 0.0
    %2834 = vmatprep.subr.mxu0 0.0
    %2835 = vmatpush1.msra.mxu0 0.0
    %2836 = vmatprep.subr.mxu0 0.0
    %2837 = vmatpush1.msra.mxu0 0.0
    %2838 = vmatprep.subr.mxu0 0.0
    %2839 = vmatpush1.msra.mxu0 0.0
    %2840 = vmatprep.subr.mxu0 0.0
    %2841 = vmatpush1.msra.mxu0 0.0
    %2842 = vmatprep.subr.mxu0 0.0
    %2843 = vmatpush1.msra.mxu0 0.0
    %2844 = vmatprep.subr.mxu0 0.0
    %2845 = vmatpush1.msra.mxu0 0.0
    %2846 = vmatprep.subr.mxu0 0.0
    %2847 = vmatpush1.msra.mxu0 0.0
    %2848 = vmatprep.subr.mxu0 0.0
    %2849 = vmatpush1.msra.mxu0 0.0
    %2850 = vmatprep.subr.mxu0 0.0
    %2851 = vmatpush1.msra.mxu0 0.0
    %2852 = vmatprep.subr.mxu0 0.0
    %2853 = vmatpush1.msra.mxu0 0.0
    %2854 = vmatprep.subr.mxu0 0.0
    %2855 = vmatpush1.msra.mxu0 0.0
    %2856 = vmatprep.subr.mxu0 0.0
    %2857 = vmatpush1.msra.mxu0 0.0
    %2858 = vmatprep.subr.mxu0 0.0
    %2859 = vmatpush1.msra.mxu0 0.0
    %2860 = vmatprep.subr.mxu0 0.0
    %2861 = vmatpush1.msra.mxu0 0.0
    %2862 = vmatprep.subr.mxu0 0.0
    %2863 = vmatpush1.msra.mxu0 0.0
    %2864 = vmatprep.mubr.f32.mxu0 0.0
    %2865 = vmatmul.mubr.f32.gmra.mrb[0].mxu0 %v2798
    %v2866 = vpop.f32.mrb[0].mxu0
    %v2867 = vadd.f32 0.0, %v2866
    %v2868 = vpop.f32.mrb[0].mxu0
    %2869 = vdwg.mxu0
    %v2871 = vrot.slane %v2867, 7
    %v2874 = vadd.f32 %v1545, %v2871
    %v2875 = vadd.f32 %v1547, %v2867
    %v2876 = vxor.u32 %v2874, 2147483648
    %v2877 = vxor.u32 %v2875, 2147483648
    %v2878 = vmul.f32 %v2876, 1.442695
    %v2879 = vpow.pop %v2878
    %v2880 = vmul.f32 %v2877, 1.442695
    %v2881 = vpow.pop %v2880
    %v2882 = vadd.f32 %v2879, 1.0
    %v2883 = vadd.f32 %v2881, 1.0
    %v2884 = vrcp.pop %v2882
    %v2885 = vmul.f32 1.0, %v2884
    %v2886 = vrcp.pop %v2883
    %v2887 = vmul.f32 1.0, %v2886
    %v2888 = vtanh.pop %v2874
    %v2889 = vtanh.pop %v2875
    %v2892 = vrot.slane %v2778, 7
    %v2893 = vrot.slane %v2779, 7
    %v2896 = vmul.f32 %v2885, %v2892
    %v2897 = vmul.f32 %v2887, %v2893
    %2900 = vrot.lane.b32.xlu0 %v2888, 64
    %v2901 = vpop.permute.xlu0 %2900
    %2902 = vrot.lane.b32.xlu0 %v2889, 64
    %v2903 = vpop.permute.xlu0 %2902
    %v2906 = vmul.f32 %v2885, %v2901
    %v2907 = vmul.f32 %v2887, %v2903
    %2910 = vrot.lane.b32.xlu0 %v2906, 32
    %v2911 = vpop.permute.xlu0 %2910
    %2912 = vrot.lane.b32.xlu0 %v2907, 32
    %v2913 = vpop.permute.xlu0 %2912
    %v2916 = vadd.f32 %v2896, %v2911
    %v2917 = vadd.f32 %v2897, %v2913
    %v2918 = vtanh.pop %v2916
    %v2919 = vtanh.pop %v2917
    %2922 = vrot.lane.b32.xlu0 %v2918, 64
    %v2923 = vpop.permute.xlu0 %2922
    %2924 = vrot.lane.b32.xlu0 %v2919, 64
    %v2925 = vpop.permute.xlu0 %2924
    %v2928 = vmul.f32 %v2885, %v2923
    %v2929 = vmul.f32 %v2887, %v2925
    %v2932 = vrot.slane %v2928, 1
    %v2933 = vsel %vm1678, %v2929, %v2932
    %2934 = vrot.lane.b32.xlu0 %v2933, 32
    %v2935 = vpop.permute.xlu0 %2934
    %v2936 = vsel %vm1197, %v2935, 0
    %2938 = vmatprep.subr.mxu0 0.0
    %2939 = vmatpush1.msra.mxu0 %v1433
    %2940 = vmatprep.subr.mxu0 0.0
    %2941 = vmatpush1.msra.mxu0 %v1434
    %2942 = vmatprep.subr.mxu0 0.0
    %2943 = vmatpush1.msra.mxu0 %v1435
    %2944 = vmatprep.subr.mxu0 0.0
    %2945 = vmatpush1.msra.mxu0 %v1436
    %2946 = vmatprep.subr.mxu0 0.0
    %2947 = vmatpush1.msra.mxu0 0.0
    %2948 = vmatprep.subr.mxu0 0.0
    %2949 = vmatpush1.msra.mxu0 0.0
    %2950 = vmatprep.subr.mxu0 0.0
    %2951 = vmatpush1.msra.mxu0 0.0
    %2952 = vmatprep.subr.mxu0 0.0
    %2953 = vmatpush1.msra.mxu0 0.0
    %2954 = vmatprep.subr.mxu0 0.0
    %2955 = vmatpush1.msra.mxu0 0.0
    %2956 = vmatprep.subr.mxu0 0.0
    %2957 = vmatpush1.msra.mxu0 0.0
    %2958 = vmatprep.subr.mxu0 0.0
    %2959 = vmatpush1.msra.mxu0 0.0
    %2960 = vmatprep.subr.mxu0 0.0
    %2961 = vmatpush1.msra.mxu0 0.0
    %2962 = vmatprep.subr.mxu0 0.0
    %2963 = vmatpush1.msra.mxu0 0.0
    %2964 = vmatprep.subr.mxu0 0.0
    %2965 = vmatpush1.msra.mxu0 0.0
    %2966 = vmatprep.subr.mxu0 0.0
    %2967 = vmatpush1.msra.mxu0 0.0
    %2968 = vmatprep.subr.mxu0 0.0
    %2969 = vmatpush1.msra.mxu0 0.0
    %2970 = vmatprep.subr.mxu0 0.0
    %2971 = vmatpush1.msra.mxu0 0.0
    %2972 = vmatprep.subr.mxu0 0.0
    %2973 = vmatpush1.msra.mxu0 0.0
    %2974 = vmatprep.subr.mxu0 0.0
    %2975 = vmatpush1.msra.mxu0 0.0
    %2976 = vmatprep.subr.mxu0 0.0
    %2977 = vmatpush1.msra.mxu0 0.0
    %2978 = vmatprep.subr.mxu0 0.0
    %2979 = vmatpush1.msra.mxu0 0.0
    %2980 = vmatprep.subr.mxu0 0.0
    %2981 = vmatpush1.msra.mxu0 0.0
    %2982 = vmatprep.subr.mxu0 0.0
    %2983 = vmatpush1.msra.mxu0 0.0
    %2984 = vmatprep.subr.mxu0 0.0
    %2985 = vmatpush1.msra.mxu0 0.0
    %2986 = vmatprep.subr.mxu0 0.0
    %2987 = vmatpush1.msra.mxu0 0.0
    %2988 = vmatprep.subr.mxu0 0.0
    %2989 = vmatpush1.msra.mxu0 0.0
    %2990 = vmatprep.subr.mxu0 0.0
    %2991 = vmatpush1.msra.mxu0 0.0
    %2992 = vmatprep.subr.mxu0 0.0
    %2993 = vmatpush1.msra.mxu0 0.0
    %2994 = vmatprep.subr.mxu0 0.0
    %2995 = vmatpush1.msra.mxu0 0.0
    %2996 = vmatprep.subr.mxu0 0.0
    %2997 = vmatpush1.msra.mxu0 0.0
    %2998 = vmatprep.subr.mxu0 0.0
    %2999 = vmatpush1.msra.mxu0 0.0
    %3000 = vmatprep.subr.mxu0 0.0
    %3001 = vmatpush1.msra.mxu0 0.0
    %3002 = vmatprep.mubr.f32.mxu0 0.0
    %3003 = vmatmul.mubr.f32.gmra.mrb[0].mxu0 %v2936
    %v3004 = vpop.f32.mrb[0].mxu0
    %v3005 = vadd.f32 0.0, %v3004
    %v3006 = vpop.f32.mrb[0].mxu0
    %3007 = vdwg.mxu0
    %v3009 = vrot.slane %v3005, 6
    %v3010 = vrot.slane %v3005, 7
    %v3013 = vadd.f32 %v1545, %v3009
    %v3014 = vadd.f32 %v1547, %v3010
    %v3015 = vxor.u32 %v3013, 2147483648
    %v3016 = vxor.u32 %v3014, 2147483648
    %v3017 = vmul.f32 %v3015, 1.442695
    %v3018 = vpow.pop %v3017
    %v3019 = vmul.f32 %v3016, 1.442695
    %v3020 = vpow.pop %v3019
    %v3021 = vadd.f32 %v3018, 1.0
    %v3022 = vadd.f32 %v3020, 1.0
    %v3023 = vrcp.pop %v3021
    %v3024 = vmul.f32 1.0, %v3023
    %v3025 = vrcp.pop %v3022
    %v3026 = vmul.f32 1.0, %v3025
    %v3027 = vtanh.pop %v3013
    %v3028 = vtanh.pop %v3014
    %v3031 = vrot.slane %v2916, 7
    %v3032 = vrot.slane %v2917, 7
    %v3035 = vmul.f32 %v3024, %v3031
    %v3036 = vmul.f32 %v3026, %v3032
    %3039 = vrot.lane.b32.xlu0 %v3027, 64
    %v3040 = vpop.permute.xlu0 %3039
    %3041 = vrot.lane.b32.xlu0 %v3028, 64
    %v3042 = vpop.permute.xlu0 %3041
    %v3045 = vmul.f32 %v3024, %v3040
    %v3046 = vmul.f32 %v3026, %v3042
    %3049 = vrot.lane.b32.xlu0 %v3045, 32
    %v3050 = vpop.permute.xlu0 %3049
    %3051 = vrot.lane.b32.xlu0 %v3046, 32
    %v3052 = vpop.permute.xlu0 %3051
    %v3055 = vadd.f32 %v3035, %v3050
    %v3056 = vadd.f32 %v3036, %v3052
    %v3057 = vtanh.pop %v3055
    %v3058 = vtanh.pop %v3056
    %3061 = vrot.lane.b32.xlu0 %v3057, 64
    %v3062 = vpop.permute.xlu0 %3061
    %3063 = vrot.lane.b32.xlu0 %v3058, 64
    %v3064 = vpop.permute.xlu0 %3063
    %v3067 = vmul.f32 %v3024, %v3062
    %v3068 = vmul.f32 %v3026, %v3064
    %v3071 = vrot.slane %v3067, 2
    %v3072 = vrot.slane %v3068, 1
    %v3073 = vsel %vm1678, %v3072, %v3071
    %3074 = vrot.lane.b32.xlu0 %v3073, 32
    %v3075 = vpop.permute.xlu0 %3074
    %v3076 = vsel %vm1197, %v3075, 0
    %3078 = vmatprep.subr.mxu0 0.0
    %3079 = vmatpush1.msra.mxu0 %v1433
    %3080 = vmatprep.subr.mxu0 0.0
    %3081 = vmatpush1.msra.mxu0 %v1434
    %3082 = vmatprep.subr.mxu0 0.0
    %3083 = vmatpush1.msra.mxu0 %v1435
    %3084 = vmatprep.subr.mxu0 0.0
    %3085 = vmatpush1.msra.mxu0 %v1436
    %3086 = vmatprep.subr.mxu0 0.0
    %3087 = vmatpush1.msra.mxu0 0.0
    %3088 = vmatprep.subr.mxu0 0.0
    %3089 = vmatpush1.msra.mxu0 0.0
    %3090 = vmatprep.subr.mxu0 0.0
    %3091 = vmatpush1.msra.mxu0 0.0
    %3092 = vmatprep.subr.mxu0 0.0
    %3093 = vmatpush1.msra.mxu0 0.0
    %3094 = vmatprep.subr.mxu0 0.0
    %3095 = vmatpush1.msra.mxu0 0.0
    %3096 = vmatprep.subr.mxu0 0.0
    %3097 = vmatpush1.msra.mxu0 0.0
    %3098 = vmatprep.subr.mxu0 0.0
    %3099 = vmatpush1.msra.mxu0 0.0
    %3100 = vmatprep.subr.mxu0 0.0
    %3101 = vmatpush1.msra.mxu0 0.0
    %3102 = vmatprep.subr.mxu0 0.0
    %3103 = vmatpush1.msra.mxu0 0.0
    %3104 = vmatprep.subr.mxu0 0.0
    %3105 = vmatpush1.msra.mxu0 0.0
    %3106 = vmatprep.subr.mxu0 0.0
    %3107 = vmatpush1.msra.mxu0 0.0
    %3108 = vmatprep.subr.mxu0 0.0
    %3109 = vmatpush1.msra.mxu0 0.0
    %3110 = vmatprep.subr.mxu0 0.0
    %3111 = vmatpush1.msra.mxu0 0.0
    %3112 = vmatprep.subr.mxu0 0.0
    %3113 = vmatpush1.msra.mxu0 0.0
    %3114 = vmatprep.subr.mxu0 0.0
    %3115 = vmatpush1.msra.mxu0 0.0
    %3116 = vmatprep.subr.mxu0 0.0
    %3117 = vmatpush1.msra.mxu0 0.0
    %3118 = vmatprep.subr.mxu0 0.0
    %3119 = vmatpush1.msra.mxu0 0.0
    %3120 = vmatprep.subr.mxu0 0.0
    %3121 = vmatpush1.msra.mxu0 0.0
    %3122 = vmatprep.subr.mxu0 0.0
    %3123 = vmatpush1.msra.mxu0 0.0
    %3124 = vmatprep.subr.mxu0 0.0
    %3125 = vmatpush1.msra.mxu0 0.0
    %3126 = vmatprep.subr.mxu0 0.0
    %3127 = vmatpush1.msra.mxu0 0.0
    %3128 = vmatprep.subr.mxu0 0.0
    %3129 = vmatpush1.msra.mxu0 0.0
    %3130 = vmatprep.subr.mxu0 0.0
    %3131 = vmatpush1.msra.mxu0 0.0
    %3132 = vmatprep.subr.mxu0 0.0
    %3133 = vmatpush1.msra.mxu0 0.0
    %3134 = vmatprep.subr.mxu0 0.0
    %3135 = vmatpush1.msra.mxu0 0.0
    %3136 = vmatprep.subr.mxu0 0.0
    %3137 = vmatpush1.msra.mxu0 0.0
    %3138 = vmatprep.subr.mxu0 0.0
    %3139 = vmatpush1.msra.mxu0 0.0
    %3140 = vmatprep.subr.mxu0 0.0
    %3141 = vmatpush1.msra.mxu0 0.0
    %3142 = vmatprep.mubr.f32.mxu0 0.0
    %3143 = vmatmul.mubr.f32.gmra.mrb[0].mxu0 %v3076
    %v3144 = vpop.f32.mrb[0].mxu0
    %v3145 = vadd.f32 0.0, %v3144
    %v3146 = vpop.f32.mrb[0].mxu0
    %3147 = vdwg.mxu0
    %v3149 = vrot.slane %v3145, 5
    %v3150 = vrot.slane %v3145, 6
    %v3153 = vadd.f32 %v1545, %v3149
    %v3154 = vadd.f32 %v1547, %v3150
    %v3155 = vxor.u32 %v3153, 2147483648
    %v3156 = vxor.u32 %v3154, 2147483648
    %v3157 = vmul.f32 %v3155, 1.442695
    %v3158 = vpow.pop %v3157
    %v3159 = vmul.f32 %v3156, 1.442695
    %v3160 = vpow.pop %v3159
    %v3161 = vadd.f32 %v3158, 1.0
    %v3162 = vadd.f32 %v3160, 1.0
    %v3163 = vrcp.pop %v3161
    %v3164 = vmul.f32 1.0, %v3163
    %v3165 = vrcp.pop %v3162
    %v3166 = vmul.f32 1.0, %v3165
    %v3167 = vtanh.pop %v3153
    %v3168 = vtanh.pop %v3154
    %v3171 = vrot.slane %v3055, 7
    %v3172 = vrot.slane %v3056, 7
    %v3175 = vmul.f32 %v3164, %v3171
    %v3176 = vmul.f32 %v3166, %v3172
    %3179 = vrot.lane.b32.xlu0 %v3167, 64
    %v3180 = vpop.permute.xlu0 %3179
    %3181 = vrot.lane.b32.xlu0 %v3168, 64
    %v3182 = vpop.permute.xlu0 %3181
    %v3185 = vmul.f32 %v3164, %v3180
    %v3186 = vmul.f32 %v3166, %v3182
    %3189 = vrot.lane.b32.xlu0 %v3185, 32
    %v3190 = vpop.permute.xlu0 %3189
    %3191 = vrot.lane.b32.xlu0 %v3186, 32
    %v3192 = vpop.permute.xlu0 %3191
    %v3195 = vadd.f32 %v3175, %v3190
    %v3196 = vadd.f32 %v3176, %v3192
    %v3197 = vtanh.pop %v3195
    %v3198 = vtanh.pop %v3196
    %3201 = vrot.lane.b32.xlu0 %v3197, 64
    %v3202 = vpop.permute.xlu0 %3201
    %3203 = vrot.lane.b32.xlu0 %v3198, 64
    %v3204 = vpop.permute.xlu0 %3203
    %v3207 = vmul.f32 %v3164, %v3202
    %v3208 = vmul.f32 %v3166, %v3204
    %v3211 = vrot.slane %v3207, 3
    %v3212 = vrot.slane %v3208, 2
    %v3213 = vsel %vm1678, %v3212, %v3211
    %3214 = vrot.lane.b32.xlu0 %v3213, 32
    %v3215 = vpop.permute.xlu0 %3214
    %v3216 = vsel %vm1197, %v3215, 0
    %3218 = vmatprep.subr.mxu0 0.0
    %3219 = vmatpush1.msra.mxu0 %v1433
    %3220 = vmatprep.subr.mxu0 0.0
    %3221 = vmatpush1.msra.mxu0 %v1434
    %3222 = vmatprep.subr.mxu0 0.0
    %3223 = vmatpush1.msra.mxu0 %v1435
    %3224 = vmatprep.subr.mxu0 0.0
    %3225 = vmatpush1.msra.mxu0 %v1436
    %3226 = vmatprep.subr.mxu0 0.0
    %3227 = vmatpush1.msra.mxu0 0.0
    %3228 = vmatprep.subr.mxu0 0.0
    %3229 = vmatpush1.msra.mxu0 0.0
    %3230 = vmatprep.subr.mxu0 0.0
    %3231 = vmatpush1.msra.mxu0 0.0
    %3232 = vmatprep.subr.mxu0 0.0
    %3233 = vmatpush1.msra.mxu0 0.0
    %3234 = vmatprep.subr.mxu0 0.0
    %3235 = vmatpush1.msra.mxu0 0.0
    %3236 = vmatprep.subr.mxu0 0.0
    %3237 = vmatpush1.msra.mxu0 0.0
    %3238 = vmatprep.subr.mxu0 0.0
    %3239 = vmatpush1.msra.mxu0 0.0
    %3240 = vmatprep.subr.mxu0 0.0
    %3241 = vmatpush1.msra.mxu0 0.0
    %3242 = vmatprep.subr.mxu0 0.0
    %3243 = vmatpush1.msra.mxu0 0.0
    %3244 = vmatprep.subr.mxu0 0.0
    %3245 = vmatpush1.msra.mxu0 0.0
    %3246 = vmatprep.subr.mxu0 0.0
    %3247 = vmatpush1.msra.mxu0 0.0
    %3248 = vmatprep.subr.mxu0 0.0
    %3249 = vmatpush1.msra.mxu0 0.0
    %3250 = vmatprep.subr.mxu0 0.0
    %3251 = vmatpush1.msra.mxu0 0.0
    %3252 = vmatprep.subr.mxu0 0.0
    %3253 = vmatpush1.msra.mxu0 0.0
    %3254 = vmatprep.subr.mxu0 0.0
    %3255 = vmatpush1.msra.mxu0 0.0
    %3256 = vmatprep.subr.mxu0 0.0
    %3257 = vmatpush1.msra.mxu0 0.0
    %3258 = vmatprep.subr.mxu0 0.0
    %3259 = vmatpush1.msra.mxu0 0.0
    %3260 = vmatprep.subr.mxu0 0.0
    %3261 = vmatpush1.msra.mxu0 0.0
    %3262 = vmatprep.subr.mxu0 0.0
    %3263 = vmatpush1.msra.mxu0 0.0
    %3264 = vmatprep.subr.mxu0 0.0
    %3265 = vmatpush1.msra.mxu0 0.0
    %3266 = vmatprep.subr.mxu0 0.0
    %3267 = vmatpush1.msra.mxu0 0.0
    %3268 = vmatprep.subr.mxu0 0.0
    %3269 = vmatpush1.msra.mxu0 0.0
    %3270 = vmatprep.subr.mxu0 0.0
    %3271 = vmatpush1.msra.mxu0 0.0
    %3272 = vmatprep.subr.mxu0 0.0
    %3273 = vmatpush1.msra.mxu0 0.0
    %3274 = vmatprep.subr.mxu0 0.0
    %3275 = vmatpush1.msra.mxu0 0.0
    %3276 = vmatprep.subr.mxu0 0.0
    %3277 = vmatpush1.msra.mxu0 0.0
    %3278 = vmatprep.subr.mxu0 0.0
    %3279 = vmatpush1.msra.mxu0 0.0
    %3280 = vmatprep.subr.mxu0 0.0
    %3281 = vmatpush1.msra.mxu0 0.0
    %3282 = vmatprep.mubr.f32.mxu0 0.0
    %3283 = vmatmul.mubr.f32.gmra.mrb[0].mxu0 %v3216
    %v3284 = vpop.f32.mrb[0].mxu0
    %v3285 = vadd.f32 0.0, %v3284
    %v3286 = vpop.f32.mrb[0].mxu0
    %3287 = vdwg.mxu0
    %v3289 = vrot.slane %v3285, 4
    %v3290 = vrot.slane %v3285, 5
    %v3293 = vadd.f32 %v1545, %v3289
    %v3294 = vadd.f32 %v1547, %v3290
    %v3295 = vxor.u32 %v3293, 2147483648
    %v3296 = vxor.u32 %v3294, 2147483648
    %v3297 = vmul.f32 %v3295, 1.442695
    %v3298 = vpow.pop %v3297
    %v3299 = vmul.f32 %v3296, 1.442695
    %v3300 = vpow.pop %v3299
    %v3301 = vadd.f32 %v3298, 1.0
    %v3302 = vadd.f32 %v3300, 1.0
    %v3303 = vrcp.pop %v3301
    %v3304 = vmul.f32 1.0, %v3303
    %v3305 = vrcp.pop %v3302
    %v3306 = vmul.f32 1.0, %v3305
    %v3307 = vtanh.pop %v3293
    %v3308 = vtanh.pop %v3294
    %v3311 = vrot.slane %v3195, 7
    %v3312 = vrot.slane %v3196, 7
    %v3315 = vmul.f32 %v3304, %v3311
    %v3316 = vmul.f32 %v3306, %v3312
    %3319 = vrot.lane.b32.xlu0 %v3307, 64
    %v3320 = vpop.permute.xlu0 %3319
    %3321 = vrot.lane.b32.xlu0 %v3308, 64
    %v3322 = vpop.permute.xlu0 %3321
    %v3325 = vmul.f32 %v3304, %v3320
    %v3326 = vmul.f32 %v3306, %v3322
    %3329 = vrot.lane.b32.xlu0 %v3325, 32
    %v3330 = vpop.permute.xlu0 %3329
    %3331 = vrot.lane.b32.xlu0 %v3326, 32
    %v3332 = vpop.permute.xlu0 %3331
    %v3335 = vadd.f32 %v3315, %v3330
    %v3336 = vadd.f32 %v3316, %v3332
    %v3337 = vtanh.pop %v3335
    %v3338 = vtanh.pop %v3336
    %3341 = vrot.lane.b32.xlu0 %v3337, 64
    %v3342 = vpop.permute.xlu0 %3341
    %3343 = vrot.lane.b32.xlu0 %v3338, 64
    %v3344 = vpop.permute.xlu0 %3343
    %v3347 = vmul.f32 %v3304, %v3342
    %v3348 = vmul.f32 %v3306, %v3344
    %v3351 = vrot.slane %v3347, 4
    %v3352 = vrot.slane %v3348, 3
    %v3353 = vsel %vm1678, %v3352, %v3351
    %3354 = vrot.lane.b32.xlu0 %v3353, 32
    %v3355 = vpop.permute.xlu0 %3354
    %v3356 = vsel %vm1197, %v3355, 0
    %3358 = vmatprep.subr.mxu0 0.0
    %3359 = vmatpush1.msra.mxu0 %v1433
    %3360 = vmatprep.subr.mxu0 0.0
    %3361 = vmatpush1.msra.mxu0 %v1434
    %3362 = vmatprep.subr.mxu0 0.0
    %3363 = vmatpush1.msra.mxu0 %v1435
    %3364 = vmatprep.subr.mxu0 0.0
    %3365 = vmatpush1.msra.mxu0 %v1436
    %3366 = vmatprep.subr.mxu0 0.0
    %3367 = vmatpush1.msra.mxu0 0.0
    %3368 = vmatprep.subr.mxu0 0.0
    %3369 = vmatpush1.msra.mxu0 0.0
    %3370 = vmatprep.subr.mxu0 0.0
    %3371 = vmatpush1.msra.mxu0 0.0
    %3372 = vmatprep.subr.mxu0 0.0
    %3373 = vmatpush1.msra.mxu0 0.0
    %3374 = vmatprep.subr.mxu0 0.0
    %3375 = vmatpush1.msra.mxu0 0.0
    %3376 = vmatprep.subr.mxu0 0.0
    %3377 = vmatpush1.msra.mxu0 0.0
    %3378 = vmatprep.subr.mxu0 0.0
    %3379 = vmatpush1.msra.mxu0 0.0
    %3380 = vmatprep.subr.mxu0 0.0
    %3381 = vmatpush1.msra.mxu0 0.0
    %3382 = vmatprep.subr.mxu0 0.0
    %3383 = vmatpush1.msra.mxu0 0.0
    %3384 = vmatprep.subr.mxu0 0.0
    %3385 = vmatpush1.msra.mxu0 0.0
    %3386 = vmatprep.subr.mxu0 0.0
    %3387 = vmatpush1.msra.mxu0 0.0
    %3388 = vmatprep.subr.mxu0 0.0
    %3389 = vmatpush1.msra.mxu0 0.0
    %3390 = vmatprep.subr.mxu0 0.0
    %3391 = vmatpush1.msra.mxu0 0.0
    %3392 = vmatprep.subr.mxu0 0.0
    %3393 = vmatpush1.msra.mxu0 0.0
    %3394 = vmatprep.subr.mxu0 0.0
    %3395 = vmatpush1.msra.mxu0 0.0
    %3396 = vmatprep.subr.mxu0 0.0
    %3397 = vmatpush1.msra.mxu0 0.0
    %3398 = vmatprep.subr.mxu0 0.0
    %3399 = vmatpush1.msra.mxu0 0.0
    %3400 = vmatprep.subr.mxu0 0.0
    %3401 = vmatpush1.msra.mxu0 0.0
    %3402 = vmatprep.subr.mxu0 0.0
    %3403 = vmatpush1.msra.mxu0 0.0
    %3404 = vmatprep.subr.mxu0 0.0
    %3405 = vmatpush1.msra.mxu0 0.0
    %3406 = vmatprep.subr.mxu0 0.0
    %3407 = vmatpush1.msra.mxu0 0.0
    %3408 = vmatprep.subr.mxu0 0.0
    %3409 = vmatpush1.msra.mxu0 0.0
    %3410 = vmatprep.subr.mxu0 0.0
    %3411 = vmatpush1.msra.mxu0 0.0
    %3412 = vmatprep.subr.mxu0 0.0
    %3413 = vmatpush1.msra.mxu0 0.0
    %3414 = vmatprep.subr.mxu0 0.0
    %3415 = vmatpush1.msra.mxu0 0.0
    %3416 = vmatprep.subr.mxu0 0.0
    %3417 = vmatpush1.msra.mxu0 0.0
    %3418 = vmatprep.subr.mxu0 0.0
    %3419 = vmatpush1.msra.mxu0 0.0
    %3420 = vmatprep.subr.mxu0 0.0
    %3421 = vmatpush1.msra.mxu0 0.0
    %3422 = vmatprep.mubr.f32.mxu0 0.0
    %3423 = vmatmul.mubr.f32.gmra.mrb[0].mxu0 %v3356
    %v3424 = vpop.f32.mrb[0].mxu0
    %v3425 = vadd.f32 0.0, %v3424
    %v3426 = vpop.f32.mrb[0].mxu0
    %3427 = vdwg.mxu0
    %v3429 = vrot.slane %v3425, 3
    %v3430 = vrot.slane %v3425, 4
    %v3433 = vadd.f32 %v1545, %v3429
    %v3434 = vadd.f32 %v1547, %v3430
    %v3435 = vxor.u32 %v3433, 2147483648
    %v3436 = vxor.u32 %v3434, 2147483648
    %v3437 = vmul.f32 %v3435, 1.442695
    %v3438 = vpow.pop %v3437
    %v3439 = vmul.f32 %v3436, 1.442695
    %v3440 = vpow.pop %v3439
    %v3441 = vadd.f32 %v3438, 1.0
    %v3442 = vadd.f32 %v3440, 1.0
    %v3443 = vrcp.pop %v3441
    %v3444 = vmul.f32 1.0, %v3443
    %v3445 = vrcp.pop %v3442
    %v3446 = vmul.f32 1.0, %v3445
    %v3447 = vtanh.pop %v3433
    %v3448 = vtanh.pop %v3434
    %v3451 = vrot.slane %v3335, 7
    %v3452 = vrot.slane %v3336, 7
    %v3455 = vmul.f32 %v3444, %v3451
    %v3456 = vmul.f32 %v3446, %v3452
    %3459 = vrot.lane.b32.xlu0 %v3447, 64
    %v3460 = vpop.permute.xlu0 %3459
    %3461 = vrot.lane.b32.xlu0 %v3448, 64
    %v3462 = vpop.permute.xlu0 %3461
    %v3465 = vmul.f32 %v3444, %v3460
    %v3466 = vmul.f32 %v3446, %v3462
    %3469 = vrot.lane.b32.xlu0 %v3465, 32
    %v3470 = vpop.permute.xlu0 %3469
    %3471 = vrot.lane.b32.xlu0 %v3466, 32
    %v3472 = vpop.permute.xlu0 %3471
    %v3475 = vadd.f32 %v3455, %v3470
    %v3476 = vadd.f32 %v3456, %v3472
    %v3477 = vtanh.pop %v3475
    %v3478 = vtanh.pop %v3476
    %3481 = vrot.lane.b32.xlu0 %v3477, 64
    %v3482 = vpop.permute.xlu0 %3481
    %3483 = vrot.lane.b32.xlu0 %v3478, 64
    %v3484 = vpop.permute.xlu0 %3483
    %v3487 = vmul.f32 %v3444, %v3482
    %v3488 = vmul.f32 %v3446, %v3484
    %v3491 = vrot.slane %v3487, 5
    %v3492 = vrot.slane %v3488, 4
    %v3493 = vsel %vm1678, %v3492, %v3491
    %3494 = vrot.lane.b32.xlu0 %v3493, 32
    %v3495 = vpop.permute.xlu0 %3494
    %v3496 = vsel %vm1197, %v3495, 0
    %3498 = vmatprep.subr.mxu0 0.0
    %3499 = vmatpush1.msra.mxu0 %v1433
    %3500 = vmatprep.subr.mxu0 0.0
    %3501 = vmatpush1.msra.mxu0 %v1434
    %3502 = vmatprep.subr.mxu0 0.0
    %3503 = vmatpush1.msra.mxu0 %v1435
    %3504 = vmatprep.subr.mxu0 0.0
    %3505 = vmatpush1.msra.mxu0 %v1436
    %3506 = vmatprep.subr.mxu0 0.0
    %3507 = vmatpush1.msra.mxu0 0.0
    %3508 = vmatprep.subr.mxu0 0.0
    %3509 = vmatpush1.msra.mxu0 0.0
    %3510 = vmatprep.subr.mxu0 0.0
    %3511 = vmatpush1.msra.mxu0 0.0
    %3512 = vmatprep.subr.mxu0 0.0
    %3513 = vmatpush1.msra.mxu0 0.0
    %3514 = vmatprep.subr.mxu0 0.0
    %3515 = vmatpush1.msra.mxu0 0.0
    %3516 = vmatprep.subr.mxu0 0.0
    %3517 = vmatpush1.msra.mxu0 0.0
    %3518 = vmatprep.subr.mxu0 0.0
    %3519 = vmatpush1.msra.mxu0 0.0
    %3520 = vmatprep.subr.mxu0 0.0
    %3521 = vmatpush1.msra.mxu0 0.0
    %3522 = vmatprep.subr.mxu0 0.0
    %3523 = vmatpush1.msra.mxu0 0.0
    %3524 = vmatprep.subr.mxu0 0.0
    %3525 = vmatpush1.msra.mxu0 0.0
    %3526 = vmatprep.subr.mxu0 0.0
    %3527 = vmatpush1.msra.mxu0 0.0
    %3528 = vmatprep.subr.mxu0 0.0
    %3529 = vmatpush1.msra.mxu0 0.0
    %3530 = vmatprep.subr.mxu0 0.0
    %3531 = vmatpush1.msra.mxu0 0.0
    %3532 = vmatprep.subr.mxu0 0.0
    %3533 = vmatpush1.msra.mxu0 0.0
    %3534 = vmatprep.subr.mxu0 0.0
    %3535 = vmatpush1.msra.mxu0 0.0
    %3536 = vmatprep.subr.mxu0 0.0
    %3537 = vmatpush1.msra.mxu0 0.0
    %3538 = vmatprep.subr.mxu0 0.0
    %3539 = vmatpush1.msra.mxu0 0.0
    %3540 = vmatprep.subr.mxu0 0.0
    %3541 = vmatpush1.msra.mxu0 0.0
    %3542 = vmatprep.subr.mxu0 0.0
    %3543 = vmatpush1.msra.mxu0 0.0
    %3544 = vmatprep.subr.mxu0 0.0
    %3545 = vmatpush1.msra.mxu0 0.0
    %3546 = vmatprep.subr.mxu0 0.0
    %3547 = vmatpush1.msra.mxu0 0.0
    %3548 = vmatprep.subr.mxu0 0.0
    %3549 = vmatpush1.msra.mxu0 0.0
    %3550 = vmatprep.subr.mxu0 0.0
    %3551 = vmatpush1.msra.mxu0 0.0
    %3552 = vmatprep.subr.mxu0 0.0
    %3553 = vmatpush1.msra.mxu0 0.0
    %3554 = vmatprep.subr.mxu0 0.0
    %3555 = vmatpush1.msra.mxu0 0.0
    %3556 = vmatprep.subr.mxu0 0.0
    %3557 = vmatpush1.msra.mxu0 0.0
    %3558 = vmatprep.subr.mxu0 0.0
    %3559 = vmatpush1.msra.mxu0 0.0
    %3560 = vmatprep.subr.mxu0 0.0
    %3561 = vmatpush1.msra.mxu0 0.0
    %3562 = vmatprep.mubr.f32.mxu0 0.0
    %3563 = vmatmul.mubr.f32.gmra.mrb[0].mxu0 %v3496
    %v3564 = vpop.f32.mrb[0].mxu0
    %v3565 = vadd.f32 0.0, %v3564
    %v3566 = vpop.f32.mrb[0].mxu0
    %3567 = vdwg.mxu0
    %v3569 = vrot.slane %v3565, 2
    %v3570 = vrot.slane %v3565, 3
    %v3573 = vadd.f32 %v1545, %v3569
    %v3574 = vadd.f32 %v1547, %v3570
    %v3575 = vxor.u32 %v3573, 2147483648
    %v3576 = vxor.u32 %v3574, 2147483648
    %v3577 = vmul.f32 %v3575, 1.442695
    %v3578 = vpow.pop %v3577
    %v3579 = vmul.f32 %v3576, 1.442695
    %v3580 = vpow.pop %v3579
    %v3581 = vadd.f32 %v3578, 1.0
    %v3582 = vadd.f32 %v3580, 1.0
    %v3583 = vrcp.pop %v3581
    %v3584 = vmul.f32 1.0, %v3583
    %v3585 = vrcp.pop %v3582
    %v3586 = vmul.f32 1.0, %v3585
    %v3587 = vtanh.pop %v3573
    %v3588 = vtanh.pop %v3574
    %v3591 = vrot.slane %v3475, 7
    %v3592 = vrot.slane %v3476, 7
    %v3595 = vmul.f32 %v3584, %v3591
    %v3596 = vmul.f32 %v3586, %v3592
    %3599 = vrot.lane.b32.xlu0 %v3587, 64
    %v3600 = vpop.permute.xlu0 %3599
    %3601 = vrot.lane.b32.xlu0 %v3588, 64
    %v3602 = vpop.permute.xlu0 %3601
    %v3605 = vmul.f32 %v3584, %v3600
    %v3606 = vmul.f32 %v3586, %v3602
    %3609 = vrot.lane.b32.xlu0 %v3605, 32
    %v3610 = vpop.permute.xlu0 %3609
    %3611 = vrot.lane.b32.xlu0 %v3606, 32
    %v3612 = vpop.permute.xlu0 %3611
    %v3615 = vadd.f32 %v3595, %v3610
    %v3616 = vadd.f32 %v3596, %v3612
    %v3617 = vtanh.pop %v3615
    %v3618 = vtanh.pop %v3616
    %3621 = vrot.lane.b32.xlu0 %v3617, 64
    %v3622 = vpop.permute.xlu0 %3621
    %3623 = vrot.lane.b32.xlu0 %v3618, 64
    %v3624 = vpop.permute.xlu0 %3623
    %v3627 = vmul.f32 %v3584, %v3622
    %v3628 = vmul.f32 %v3586, %v3624
    %v3631 = vrot.slane %v3627, 6
    %v3632 = vrot.slane %v3628, 5
    %v3633 = vsel %vm1678, %v3632, %v3631
    %3634 = vrot.lane.b32.xlu0 %v3633, 32
    %v3635 = vpop.permute.xlu0 %3634
    %v3636 = vsel %vm1197, %v3635, 0
    %3638 = vmatprep.subr.mxu0 0.0
    %3639 = vmatpush1.msra.mxu0 %v1433
    %3640 = vmatprep.subr.mxu0 0.0
    %3641 = vmatpush1.msra.mxu0 %v1434
    %3642 = vmatprep.subr.mxu0 0.0
    %3643 = vmatpush1.msra.mxu0 %v1435
    %3644 = vmatprep.subr.mxu0 0.0
    %3645 = vmatpush1.msra.mxu0 %v1436
    %3646 = vmatprep.subr.mxu0 0.0
    %3647 = vmatpush1.msra.mxu0 0.0
    %3648 = vmatprep.subr.mxu0 0.0
    %3649 = vmatpush1.msra.mxu0 0.0
    %3650 = vmatprep.subr.mxu0 0.0
    %3651 = vmatpush1.msra.mxu0 0.0
    %3652 = vmatprep.subr.mxu0 0.0
    %3653 = vmatpush1.msra.mxu0 0.0
    %3654 = vmatprep.subr.mxu0 0.0
    %3655 = vmatpush1.msra.mxu0 0.0
    %3656 = vmatprep.subr.mxu0 0.0
    %3657 = vmatpush1.msra.mxu0 0.0
    %3658 = vmatprep.subr.mxu0 0.0
    %3659 = vmatpush1.msra.mxu0 0.0
    %3660 = vmatprep.subr.mxu0 0.0
    %3661 = vmatpush1.msra.mxu0 0.0
    %3662 = vmatprep.subr.mxu0 0.0
    %3663 = vmatpush1.msra.mxu0 0.0
    %3664 = vmatprep.subr.mxu0 0.0
    %3665 = vmatpush1.msra.mxu0 0.0
    %3666 = vmatprep.subr.mxu0 0.0
    %3667 = vmatpush1.msra.mxu0 0.0
    %3668 = vmatprep.subr.mxu0 0.0
    %3669 = vmatpush1.msra.mxu0 0.0
    %3670 = vmatprep.subr.mxu0 0.0
    %3671 = vmatpush1.msra.mxu0 0.0
    %3672 = vmatprep.subr.mxu0 0.0
    %3673 = vmatpush1.msra.mxu0 0.0
    %3674 = vmatprep.subr.mxu0 0.0
    %3675 = vmatpush1.msra.mxu0 0.0
    %3676 = vmatprep.subr.mxu0 0.0
    %3677 = vmatpush1.msra.mxu0 0.0
    %3678 = vmatprep.subr.mxu0 0.0
    %3679 = vmatpush1.msra.mxu0 0.0
    %3680 = vmatprep.subr.mxu0 0.0
    %3681 = vmatpush1.msra.mxu0 0.0
    %3682 = vmatprep.subr.mxu0 0.0
    %3683 = vmatpush1.msra.mxu0 0.0
    %3684 = vmatprep.subr.mxu0 0.0
    %3685 = vmatpush1.msra.mxu0 0.0
    %3686 = vmatprep.subr.mxu0 0.0
    %3687 = vmatpush1.msra.mxu0 0.0
    %3688 = vmatprep.subr.mxu0 0.0
    %3689 = vmatpush1.msra.mxu0 0.0
    %3690 = vmatprep.subr.mxu0 0.0
    %3691 = vmatpush1.msra.mxu0 0.0
    %3692 = vmatprep.subr.mxu0 0.0
    %3693 = vmatpush1.msra.mxu0 0.0
    %3694 = vmatprep.subr.mxu0 0.0
    %3695 = vmatpush1.msra.mxu0 0.0
    %3696 = vmatprep.subr.mxu0 0.0
    %3697 = vmatpush1.msra.mxu0 0.0
    %3698 = vmatprep.subr.mxu0 0.0
    %3699 = vmatpush1.msra.mxu0 0.0
    %3700 = vmatprep.subr.mxu0 0.0
    %3701 = vmatpush1.msra.mxu0 0.0
    %3702 = vmatprep.mubr.f32.mxu0 0.0
    %3703 = vmatmul.mubr.f32.gmra.mrb[0].mxu0 %v3636
    %v3704 = vpop.f32.mrb[0].mxu0
    %v3705 = vadd.f32 0.0, %v3704
    %v3706 = vpop.f32.mrb[0].mxu0
    %3707 = vdwg.mxu0
    %v3709 = vrot.slane %v3705, 1
    %v3710 = vrot.slane %v3705, 2
    %v3713 = vadd.f32 %v1545, %v3709
    %v3714 = vadd.f32 %v1547, %v3710
    %v3715 = vxor.u32 %v3713, 2147483648
    %v3716 = vxor.u32 %v3714, 2147483648
    %v3717 = vmul.f32 %v3715, 1.442695
    %v3718 = vpow.pop %v3717
    %v3719 = vmul.f32 %v3716, 1.442695
    %v3720 = vpow.pop %v3719
    %v3721 = vadd.f32 %v3718, 1.0
    %v3722 = vadd.f32 %v3720, 1.0
    %v3723 = vrcp.pop %v3721
    %v3724 = vmul.f32 1.0, %v3723
    %v3725 = vrcp.pop %v3722
    %v3726 = vmul.f32 1.0, %v3725
    %v3727 = vtanh.pop %v3713
    %v3728 = vtanh.pop %v3714
    %v3731 = vrot.slane %v3615, 7
    %v3732 = vrot.slane %v3616, 7
    %v3735 = vmul.f32 %v3724, %v3731
    %v3736 = vmul.f32 %v3726, %v3732
    %3739 = vrot.lane.b32.xlu0 %v3727, 64
    %v3740 = vpop.permute.xlu0 %3739
    %3741 = vrot.lane.b32.xlu0 %v3728, 64
    %v3742 = vpop.permute.xlu0 %3741
    %v3745 = vmul.f32 %v3724, %v3740
    %v3746 = vmul.f32 %v3726, %v3742
    %3749 = vrot.lane.b32.xlu0 %v3745, 32
    %v3750 = vpop.permute.xlu0 %3749
    %3751 = vrot.lane.b32.xlu0 %v3746, 32
    %v3752 = vpop.permute.xlu0 %3751
    %v3755 = vadd.f32 %v3735, %v3750
    %v3756 = vadd.f32 %v3736, %v3752
    %v3757 = vtanh.pop %v3755
    %v3758 = vtanh.pop %v3756
    %3761 = vrot.lane.b32.xlu0 %v3757, 64
    %v3762 = vpop.permute.xlu0 %3761
    %3763 = vrot.lane.b32.xlu0 %v3758, 64
    %v3764 = vpop.permute.xlu0 %3763
    %v3767 = vmul.f32 %v3724, %v3762
    %v3768 = vmul.f32 %v3726, %v3764
    %v3769 = vlaneseq
    %v3770 = vshrl.u32 %v3769, 7
    %v3771 = vsub.s32 0, %v3770
    %v3772 = vrot.slane %v1442, %v3771
    %v3775 = vrot.slane %v3767, 7
    %v3776 = vrot.slane %v3768, 6
    %v3777 = vsel %vm1678, %v3776, %v3775
    %3778 = vrot.lane.b32.xlu0 %v3777, 32
    %v3779 = vpop.permute.xlu0 %3778
    %v3780 = vsel %vm1197, %v3779, 0
    %3782 = vmatprep.subr.mxu0 0.0
    %3783 = vmatpush1.msra.mxu0 %v1438
    %3784 = vmatprep.subr.mxu0 0.0
    %3785 = vmatpush1.msra.mxu0 %v1439
    %3786 = vmatprep.subr.mxu0 0.0
    %3787 = vmatpush1.msra.mxu0 %v1440
    %3788 = vmatprep.subr.mxu0 0.0
    %3789 = vmatpush1.msra.mxu0 %v1441
    %3790 = vmatprep.subr.mxu0 0.0
    %3791 = vmatpush1.msra.mxu0 0.0
    %3792 = vmatprep.subr.mxu0 0.0
    %3793 = vmatpush1.msra.mxu0 0.0
    %3794 = vmatprep.subr.mxu0 0.0
    %3795 = vmatpush1.msra.mxu0 0.0
    %3796 = vmatprep.subr.mxu0 0.0
    %3797 = vmatpush1.msra.mxu0 0.0
    %3798 = vmatprep.subr.mxu0 0.0
    %3799 = vmatpush1.msra.mxu0 0.0
    %3800 = vmatprep.subr.mxu0 0.0
    %3801 = vmatpush1.msra.mxu0 0.0
    %3802 = vmatprep.subr.mxu0 0.0
    %3803 = vmatpush1.msra.mxu0 0.0
    %3804 = vmatprep.subr.mxu0 0.0
    %3805 = vmatpush1.msra.mxu0 0.0
    %3806 = vmatprep.subr.mxu0 0.0
    %3807 = vmatpush1.msra.mxu0 0.0
    %3808 = vmatprep.subr.mxu0 0.0
    %3809 = vmatpush1.msra.mxu0 0.0
    %3810 = vmatprep.subr.mxu0 0.0
    %3811 = vmatpush1.msra.mxu0 0.0
    %3812 = vmatprep.subr.mxu0 0.0
    %3813 = vmatpush1.msra.mxu0 0.0
    %3814 = vmatprep.subr.mxu0 0.0
    %3815 = vmatpush1.msra.mxu0 0.0
    %3816 = vmatprep.subr.mxu0 0.0
    %3817 = vmatpush1.msra.mxu0 0.0
    %3818 = vmatprep.subr.mxu0 0.0
    %3819 = vmatpush1.msra.mxu0 0.0
    %3820 = vmatprep.subr.mxu0 0.0
    %3821 = vmatpush1.msra.mxu0 0.0
    %3822 = vmatprep.subr.mxu0 0.0
    %3823 = vmatpush1.msra.mxu0 0.0
    %3824 = vmatprep.subr.mxu0 0.0
    %3825 = vmatpush1.msra.mxu0 0.0
    %3826 = vmatprep.subr.mxu0 0.0
    %3827 = vmatpush1.msra.mxu0 0.0
    %3828 = vmatprep.subr.mxu0 0.0
    %3829 = vmatpush1.msra.mxu0 0.0
    %3830 = vmatprep.subr.mxu0 0.0
    %3831 = vmatpush1.msra.mxu0 0.0
    %3832 = vmatprep.subr.mxu0 0.0
    %3833 = vmatpush1.msra.mxu0 0.0
    %3834 = vmatprep.subr.mxu0 0.0
    %3835 = vmatpush1.msra.mxu0 0.0
    %3836 = vmatprep.subr.mxu0 0.0
    %3837 = vmatpush1.msra.mxu0 0.0
    %3838 = vmatprep.subr.mxu0 0.0
    %3839 = vmatpush1.msra.mxu0 0.0
    %3840 = vmatprep.subr.mxu0 0.0
    %3841 = vmatpush1.msra.mxu0 0.0
    %3842 = vmatprep.subr.mxu0 0.0
    %3843 = vmatpush1.msra.mxu0 0.0
    %3844 = vmatprep.subr.mxu0 0.0
    %3845 = vmatpush1.msra.mxu0 0.0
    %3846 = vmatprep.mubr.f32.mxu0 0.0
    %3847 = vmatmul.mubr.f32.gmra.mrb[0].mxu0 %v3780
    %v3848 = vpop.f32.mrb[0].mxu0
    %v3849 = vadd.f32 %v3772, %v3848
    %v3850 = vpop.f32.mrb[0].mxu0
    %3851 = vdwg.mxu0
    %3852 = vst [vmem:[#allocation5] sm:$0x3] %v3849
    // Predicated region
    $region14: #{tpu_custom_call.1} parent=1 // pred_check
      _
    $region15: #{tpu_custom_call.1} parent=1 // pred_check_branch
      %3854 = sbr.rel (0) target = $region17
    $region16: #{tpu_custom_call.1} parent=1 // pred_region
      %s3856 = ssub.s32 32, 32
      %3857 = vsyncadd [#allocation4], %s3856
      %s3859 = sshll.u32 [#allocation5], 4
      %s3860 = int_to_ptr.vmem [resolvable:$true] %s3859
      %3862 = dma.vmem_to_hbm [thread:$0]  %s3860, 32, %s2, [#allocation4]
    $region17: #{tpu_custom_call.1} parent=1 // pred_fallthru
      _
    // Predicated region
    $region18: #{tpu_custom_call.1} parent=1 // pred_check
      _
    $region19: #{tpu_custom_call.1} parent=1 // pred_check_branch
      %3864 = sbr.rel (0) target = $region21
    $region20: #{tpu_custom_call.1} parent=1 // pred_region
      %3865 = dma.done [#allocation4], 32
    $region21: #{tpu_custom_call.1} parent=1 // pred_fallthru
      _
    %3866 = vsyncpa [#allocation3], 1
    %3867 = vsyncpa [#allocation4], 1

</llo_original>
